<compile_context>
chip_gen: v6e
topology: v6e:2x2x1
jax: 0.10.0
libtpu: 0.0.40
codegen_flags: <defaults>
</compile_context>

<pallas_src>
import jax
import jax.numpy as jnp
from jax.experimental import pallas as pl
from jax.experimental.pallas import tpu as pltpu

EPS = 1e-5


def encoding_block_kernel(x_ref, w1_ref, b1_ref, w2_ref, b2_ref, ws_ref, bs_ref, out_ref):
    # x_ref:  (1, H, W, Cin)  f32
    # w1_ref: (3, 3*Cin,  Cout) bf16   (dy, dx*Cin + c, o)
    # w2_ref: (3, 3*Cout, Cout) bf16
    # ws_ref: (Cin, Cout)       bf16
    # b*_ref: (1, Cout)         f32
    # out_ref:(1, H, W, Cout)   f32
    _, H, W, Cout = out_ref.shape
    Cin = x_ref.shape[-1]
    HW = H * W
    inv_hw = 1.0 / HW

    x = x_ref[...].reshape(HW, Cin)  # flatten spatial dims (row-major y*W + x)

    # (HW, 1) column-index border masks, built once and shared by both convs.
    col = jax.lax.broadcasted_iota(jnp.int32, (H, W, 1), 1).reshape(HW, 1)
    mask_l = col > 0            # x-1 in range
    mask_r = col < (W - 1)      # x+1 in range

    zrow = jnp.zeros((W, Cout), jnp.float32)

    def conv3x3(inp, wcat_ref, b_ref):
        # inp: (HW, C) f32.  Group the 3 dx taps into K: xcat[:, dx*C + c] = inp[y, x+dx-1, c].
        lft = jnp.where(mask_l, pltpu.roll(inp, shift=1, axis=0), 0.0).astype(jnp.bfloat16)
        ctr = inp.astype(jnp.bfloat16)
        rgt = jnp.where(mask_r, pltpu.roll(inp, shift=HW - 1, axis=0), 0.0).astype(jnp.bfloat16)
        xcat = jnp.concatenate([lft, ctr, rgt], axis=1)           # (HW, 3*C) bf16

        # dy taps via static row ranges; MXU accumulates in f32.
        gc = jnp.dot(xcat, wcat_ref[1], preferred_element_type=jnp.float32)          # dy = 0
        gm = jnp.dot(xcat[: HW - W], wcat_ref[0], preferred_element_type=jnp.float32)  # dy = -1
        gp = jnp.dot(xcat[W:], wcat_ref[2], preferred_element_type=jnp.float32)        # dy = +1

        return (gc
                + jnp.concatenate([zrow, gm], axis=0)
                + jnp.concatenate([gp, zrow], axis=0)
                + b_ref[...])

    def inorm_relu(a):
        # single-pass instance norm: biased var = E[a^2] - mean^2, eps = 1e-5 (PyTorch default)
        s = jnp.sum(a, axis=0, keepdims=True)
        ss = jnp.sum(a * a, axis=0, keepdims=True)
        mean = s * inv_hw
        var = ss * inv_hw - mean * mean
        return jnp.maximum((a - mean) * jax.lax.rsqrt(var + EPS), 0.0)

    h1 = inorm_relu(conv3x3(x, w1_ref, b1_ref))
    a2 = conv3x3(h1, w2_ref, b2_ref)

    skip = jnp.dot(x.astype(jnp.bfloat16), ws_ref[...],
                   preferred_element_type=jnp.float32) + bs_ref[...]

    # second instance-norm + ReLU fused with the skip add and the final store
    s2 = jnp.sum(a2, axis=0, keepdims=True)
    ss2 = jnp.sum(a2 * a2, axis=0, keepdims=True)
    mean2 = s2 * inv_hw
    var2 = ss2 * inv_hw - mean2 * mean2
    out = jnp.maximum((a2 - mean2) * jax.lax.rsqrt(var2 + EPS), 0.0) + skip
    out_ref[...] = out.reshape(1, H, W, Cout)


def encoding_block(x, w1, b1, w2, b2, ws, bs):
    """x: (B, H, W, Cin) f32; w1: (3,3,Cin,Cout); w2: (3,3,Cout,Cout); ws: (Cin,Cout)."""
    B, H, W, Cin = x.shape
    Cout = w1.shape[-1]

    # Host-side weight prep: fold the dx taps into the K dim and cast to bf16 (MXU-native).
    w1c = w1.reshape(3, 3 * Cin, Cout).astype(jnp.bfloat16)
    w2c = w2.reshape(3, 3 * Cout, Cout).astype(jnp.bfloat16)
    wsc = ws.astype(jnp.bfloat16)
    b1r = b1.reshape(1, Cout).astype(jnp.float32)
    b2r = b2.reshape(1, Cout).astype(jnp.float32)
    bsr = bs.reshape(1, Cout).astype(jnp.float32)

    return pl.pallas_call(
        encoding_block_kernel,
        out_shape=jax.ShapeDtypeStruct((B, H, W, Cout), jnp.float32),
        grid_spec=pltpu.PrefetchScalarGridSpec(
            num_scalar_prefetch=0,
            grid=(B,),
            in_specs=[
                pl.BlockSpec((1, H, W, Cin), lambda b: (b, 0, 0, 0)),
                pl.BlockSpec((3, 3 * Cin, Cout), lambda b: (0, 0, 0)),
                pl.BlockSpec((1, Cout), lambda b: (0, 0)),
                pl.BlockSpec((3, 3 * Cout, Cout), lambda b: (0, 0, 0)),
                pl.BlockSpec((1, Cout), lambda b: (0, 0)),
                pl.BlockSpec((Cin, Cout), lambda b: (0, 0)),
                pl.BlockSpec((1, Cout), lambda b: (0, 0)),
            ],
            out_specs=pl.BlockSpec((1, H, W, Cout), lambda b: (b, 0, 0, 0)),
        ),
        compiler_params=pltpu.CompilerParams(
            dimension_semantics=("parallel",),
            vmem_limit_bytes=64 * 1024 * 1024,
        ),
    )(x, w1c, b1r, w2c, b2r, wsc, bsr)


def ref_forward(x, w1, b1, w2, b2, ws, bs):
    """Pure-JAX f32 reference (same NHWC / HWIO conventions as the PyTorch module)."""
    dn = ("NHWC", "HWIO", "NHWC")

    def conv(inp, w, b):
        o = jax.lax.conv_general_dilated(inp, w, (1, 1), "SAME", dimension_numbers=dn)
        return o + b.reshape(1, 1, 1, -1)

    def inorm_relu(a):
        mean = jnp.mean(a, axis=(1, 2), keepdims=True)
        var = jnp.mean((a - mean) ** 2, axis=(1, 2), keepdims=True)
        return jnp.maximum((a - mean) * jax.lax.rsqrt(var + EPS), 0.0)

    h = inorm_relu(conv(x, w1, b1))
    h = inorm_relu(conv(h, w2, b2))
    skip = conv(x, ws.reshape(1, 1, ws.shape[0], ws.shape[1]), bs)
    return h + skip


if __name__ == "__main__":
    # Small shapes consistent with the module (module default is in=256, out=512; scaled down here).
    B, H, W, Cin, Cout = 2, 16, 16, 4, 8
    keys = jax.random.split(jax.random.PRNGKey(0), 7)
    x = jax.random.normal(keys[0], (B, H, W, Cin), jnp.float32)
    w1 = jax.random.normal(keys[1], (3, 3, Cin, Cout), jnp.float32) * 0.1
    b1 = jax.random.normal(keys[2], (Cout,), jnp.float32) * 0.1
    w2 = jax.random.normal(keys[3], (3, 3, Cout, Cout), jnp.float32) * 0.1
    b2 = jax.random.normal(keys[4], (Cout,), jnp.float32) * 0.1
    ws = jax.random.normal(keys[5], (Cin, Cout), jnp.float32) * 0.1
    bs = jax.random.normal(keys[6], (Cout,), jnp.float32) * 0.1

    out = encoding_block(x, w1, b1, w2, b2, ws, bs)
    out = jax.block_until_ready(out)

    ref = ref_forward(x, w1, b1, w2, b2, ws, bs)
    assert out.shape == (B, H, W, Cout)
    # bf16 MXU operands -> loosened tolerance vs the f32 reference (per perf review).
    assert jnp.allclose(out, ref, atol=1e-1, rtol=5e-2), float(jnp.max(jnp.abs(out - ref)))
    print("KERNEL_OK")
</pallas_src>

<mosaic_0001>
module attributes {stable_mosaic.version = 11 : i64} {
  func.func @encoding_block_kernel(%arg0: i32, %arg1: memref<1x16x16x4xf32, #tpu.memory_space<vmem>>, %arg2: memref<3x12x8xbf16, #tpu.memory_space<vmem>>, %arg3: memref<1x8xf32, #tpu.memory_space<vmem>>, %arg4: memref<3x24x8xbf16, #tpu.memory_space<vmem>>, %arg5: memref<1x8xf32, #tpu.memory_space<vmem>>, %arg6: memref<4x8xbf16, #tpu.memory_space<vmem>>, %arg7: memref<1x8xf32, #tpu.memory_space<vmem>>, %arg8: memref<1x16x16x8xf32, #tpu.memory_space<vmem>>) attributes {dimension_semantics = [#tpu.dimension_semantics<parallel>], iteration_bounds = array<i64: 2>, scalar_prefetch = 0 : i64, scratch_operands = 0 : i64, tpu.core_type = #tpu.core_type<tc>, window_params = [{transform_indices = @transform_0, window_bounds = array<i64: 1, 16, 16, 4>}, {pipeline_mode = #tpu.pipeline_mode<synchronous>, transform_indices = @transform_1, window_bounds = array<i64: 3, 12, 8>}, {pipeline_mode = #tpu.pipeline_mode<synchronous>, transform_indices = @transform_2, window_bounds = array<i64: 1, 8>}, {pipeline_mode = #tpu.pipeline_mode<synchronous>, transform_indices = @transform_3, window_bounds = array<i64: 3, 24, 8>}, {pipeline_mode = #tpu.pipeline_mode<synchronous>, transform_indices = @transform_4, window_bounds = array<i64: 1, 8>}, {pipeline_mode = #tpu.pipeline_mode<synchronous>, transform_indices = @transform_5, window_bounds = array<i64: 4, 8>}, {pipeline_mode = #tpu.pipeline_mode<synchronous>, transform_indices = @transform_6, window_bounds = array<i64: 1, 8>}, {transform_indices = @transform_7, window_bounds = array<i64: 1, 16, 16, 8>}]} {
    %c0 = arith.constant 0 : index
    %c0_0 = arith.constant 0 : index
    %c0_1 = arith.constant 0 : index
    %c0_2 = arith.constant 0 : index
    %0 = vector.load %arg1[%c0, %c0_0, %c0_1, %c0_2] : memref<1x16x16x4xf32, #tpu.memory_space<vmem>>, vector<1x16x16x4xf32>
    %1 = vector.shape_cast %0 : vector<1x16x16x4xf32> to vector<256x4xf32>
    %2 = tpu.iota {dimensions = array<i32: 1>} : vector<16x16x1xi32>
    %3 = vector.shape_cast %2 : vector<16x16x1xi32> to vector<256x1xi32>
    %c0_i32 = arith.constant 0 : i32
    %4 = vector.broadcast %c0_i32 : i32 to vector<256x1xi32>
    %5 = arith.cmpi sgt, %3, %4 : vector<256x1xi32>
    %c15_i32 = arith.constant 15 : i32
    %6 = vector.broadcast %c15_i32 : i32 to vector<256x1xi32>
    %7 = arith.cmpi slt, %3, %6 : vector<256x1xi32>
    %cst = arith.constant 0.000000e+00 : f32
    %8 = vector.broadcast %cst : f32 to vector<16x8xf32>
    %c1_i32 = arith.constant 1 : i32
    %9 = tpu.dynamic_rotate %1 by %c1_i32 dim 0 : vector<256x4xf32>, i32 -> vector<256x4xf32>
    %cst_3 = arith.constant 0.000000e+00 : f32
    %10 = vector.shape_cast %5 : vector<256x1xi1> to vector<256x1xi1>
    %11 = vector.broadcast %10 : vector<256x1xi1> to vector<256x4xi1>
    %12 = vector.broadcast %cst_3 : f32 to vector<256x4xf32>
    %13 = arith.select %11, %9, %12 : vector<256x4xi1>, vector<256x4xf32>
    %14 = arith.truncf %13 : vector<256x4xf32> to vector<256x4xbf16>
    %15 = arith.truncf %1 : vector<256x4xf32> to vector<256x4xbf16>
    %c255_i32 = arith.constant 255 : i32
    %16 = tpu.dynamic_rotate %1 by %c255_i32 dim 0 : vector<256x4xf32>, i32 -> vector<256x4xf32>
    %cst_4 = arith.constant 0.000000e+00 : f32
    %17 = vector.shape_cast %7 : vector<256x1xi1> to vector<256x1xi1>
    %18 = vector.broadcast %17 : vector<256x1xi1> to vector<256x4xi1>
    %19 = vector.broadcast %cst_4 : f32 to vector<256x4xf32>
    %20 = arith.select %18, %16, %19 : vector<256x4xi1>, vector<256x4xf32>
    %21 = arith.truncf %20 : vector<256x4xf32> to vector<256x4xbf16>
    %22 = tpu.concatenate %14, %15, %21 in 1 : vector<256x4xbf16>, vector<256x4xbf16>, vector<256x4xbf16> -> vector<256x12xbf16>
    %c1 = arith.constant 1 : index
    %c0_5 = arith.constant 0 : index
    %c0_6 = arith.constant 0 : index
    %23 = vector.load %arg2[%c1, %c0_5, %c0_6] : memref<3x12x8xbf16, #tpu.memory_space<vmem>>, vector<1x12x8xbf16>
    %24 = vector.shape_cast %23 : vector<1x12x8xbf16> to vector<12x8xbf16>
    %cst_7 = arith.constant dense<0.000000e+00> : vector<256x8xf32>
    %25 = tpu.matmul %22, %24, %cst_7 {dimension_numbers = #tpu.dot_dimension_numbers<[1], [0], [0], [1], [0, 0, 1, 1], [], []>} : vector<256x12xbf16>, vector<12x8xbf16>, vector<256x8xf32> -> vector<256x8xf32>
    %26 = vector.extract_strided_slice %22 {offsets = [0, 0], sizes = [240, 12], strides = [1, 1]} : vector<256x12xbf16> to vector<240x12xbf16>
    %c0_8 = arith.constant 0 : index
    %c0_9 = arith.constant 0 : index
    %c0_10 = arith.constant 0 : index
    %27 = vector.load %arg2[%c0_8, %c0_9, %c0_10] : memref<3x12x8xbf16, #tpu.memory_space<vmem>>, vector<1x12x8xbf16>
    %28 = vector.shape_cast %27 : vector<1x12x8xbf16> to vector<12x8xbf16>
    %cst_11 = arith.constant dense<0.000000e+00> : vector<240x8xf32>
    %29 = tpu.matmul %26, %28, %cst_11 {dimension_numbers = #tpu.dot_dimension_numbers<[1], [0], [0], [1], [0, 0, 1, 1], [], []>} : vector<240x12xbf16>, vector<12x8xbf16>, vector<240x8xf32> -> vector<240x8xf32>
    %30 = vector.extract_strided_slice %22 {offsets = [16, 0], sizes = [240, 12], strides = [1, 1]} : vector<256x12xbf16> to vector<240x12xbf16>
    %c2 = arith.constant 2 : index
    %c0_12 = arith.constant 0 : index
    %c0_13 = arith.constant 0 : index
    %31 = vector.load %arg2[%c2, %c0_12, %c0_13] : memref<3x12x8xbf16, #tpu.memory_space<vmem>>, vector<1x12x8xbf16>
    %32 = vector.shape_cast %31 : vector<1x12x8xbf16> to vector<12x8xbf16>
    %cst_14 = arith.constant dense<0.000000e+00> : vector<240x8xf32>
    %33 = tpu.matmul %30, %32, %cst_14 {dimension_numbers = #tpu.dot_dimension_numbers<[1], [0], [0], [1], [0, 0, 1, 1], [], []>} : vector<240x12xbf16>, vector<12x8xbf16>, vector<240x8xf32> -> vector<240x8xf32>
    %34 = tpu.concatenate %8, %29 in 0 : vector<16x8xf32>, vector<240x8xf32> -> vector<256x8xf32>
    %35 = arith.addf %25, %34 : vector<256x8xf32>
    %36 = tpu.concatenate %33, %8 in 0 : vector<240x8xf32>, vector<16x8xf32> -> vector<256x8xf32>
    %37 = arith.addf %35, %36 : vector<256x8xf32>
    %c0_15 = arith.constant 0 : index
    %c0_16 = arith.constant 0 : index
    %38 = vector.load %arg3[%c0_15, %c0_16] : memref<1x8xf32, #tpu.memory_space<vmem>>, vector<1x8xf32>
    %39 = vector.broadcast %38 : vector<1x8xf32> to vector<256x8xf32>
    %40 = arith.addf %37, %39 : vector<256x8xf32>
    %cst_17 = arith.constant dense<0.000000e+00> : vector<8xf32>
    %41 = vector.multi_reduction <add>, %40, %cst_17 [0] : vector<256x8xf32> to vector<8xf32>
    %42 = vector.shape_cast %41 : vector<8xf32> to vector<1x8xf32>
    %43 = arith.mulf %40, %40 : vector<256x8xf32>
    %cst_18 = arith.constant dense<0.000000e+00> : vector<8xf32>
    %44 = vector.multi_reduction <add>, %43, %cst_18 [0] : vector<256x8xf32> to vector<8xf32>
    %45 = vector.shape_cast %44 : vector<8xf32> to vector<1x8xf32>
    %cst_19 = arith.constant 3.906250e-03 : f32
    %46 = vector.broadcast %cst_19 : f32 to vector<1x8xf32>
    %47 = arith.mulf %42, %46 : vector<1x8xf32>
    %cst_20 = arith.constant 3.906250e-03 : f32
    %48 = vector.broadcast %cst_20 : f32 to vector<1x8xf32>
    %49 = arith.mulf %45, %48 : vector<1x8xf32>
    %50 = arith.mulf %47, %47 : vector<1x8xf32>
    %51 = arith.subf %49, %50 : vector<1x8xf32>
    %52 = vector.broadcast %47 : vector<1x8xf32> to vector<256x8xf32>
    %53 = arith.subf %40, %52 : vector<256x8xf32>
    %cst_21 = arith.constant 9.99999974E-6 : f32
    %54 = vector.broadcast %cst_21 : f32 to vector<1x8xf32>
    %55 = arith.addf %51, %54 : vector<1x8xf32>
    %56 = math.rsqrt %55 : vector<1x8xf32>
    %57 = vector.broadcast %56 : vector<1x8xf32> to vector<256x8xf32>
    %58 = arith.mulf %53, %57 : vector<256x8xf32>
    %cst_22 = arith.constant 0.000000e+00 : f32
    %59 = vector.broadcast %cst_22 : f32 to vector<256x8xf32>
    %60 = arith.maximumf %58, %59 : vector<256x8xf32>
    %c1_i32_23 = arith.constant 1 : i32
    %61 = tpu.dynamic_rotate %60 by %c1_i32_23 dim 0 : vector<256x8xf32>, i32 -> vector<256x8xf32>
    %cst_24 = arith.constant 0.000000e+00 : f32
    %62 = vector.shape_cast %5 : vector<256x1xi1> to vector<256x1xi1>
    %63 = vector.broadcast %62 : vector<256x1xi1> to vector<256x8xi1>
    %64 = vector.broadcast %cst_24 : f32 to vector<256x8xf32>
    %65 = arith.select %63, %61, %64 : vector<256x8xi1>, vector<256x8xf32>
    %66 = arith.truncf %65 : vector<256x8xf32> to vector<256x8xbf16>
    %67 = arith.truncf %60 : vector<256x8xf32> to vector<256x8xbf16>
    %c255_i32_25 = arith.constant 255 : i32
    %68 = tpu.dynamic_rotate %60 by %c255_i32_25 dim 0 : vector<256x8xf32>, i32 -> vector<256x8xf32>
    %cst_26 = arith.constant 0.000000e+00 : f32
    %69 = vector.shape_cast %7 : vector<256x1xi1> to vector<256x1xi1>
    %70 = vector.broadcast %69 : vector<256x1xi1> to vector<256x8xi1>
    %71 = vector.broadcast %cst_26 : f32 to vector<256x8xf32>
    %72 = arith.select %70, %68, %71 : vector<256x8xi1>, vector<256x8xf32>
    %73 = arith.truncf %72 : vector<256x8xf32> to vector<256x8xbf16>
    %74 = tpu.concatenate %66, %67, %73 in 1 : vector<256x8xbf16>, vector<256x8xbf16>, vector<256x8xbf16> -> vector<256x24xbf16>
    %c1_27 = arith.constant 1 : index
    %c0_28 = arith.constant 0 : index
    %c0_29 = arith.constant 0 : index
    %75 = vector.load %arg4[%c1_27, %c0_28, %c0_29] : memref<3x24x8xbf16, #tpu.memory_space<vmem>>, vector<1x24x8xbf16>
    %76 = vector.shape_cast %75 : vector<1x24x8xbf16> to vector<24x8xbf16>
    %cst_30 = arith.constant dense<0.000000e+00> : vector<256x8xf32>
    %77 = tpu.matmul %74, %76, %cst_30 {dimension_numbers = #tpu.dot_dimension_numbers<[1], [0], [0], [1], [0, 0, 1, 1], [], []>} : vector<256x24xbf16>, vector<24x8xbf16>, vector<256x8xf32> -> vector<256x8xf32>
    %78 = vector.extract_strided_slice %74 {offsets = [0, 0], sizes = [240, 24], strides = [1, 1]} : vector<256x24xbf16> to vector<240x24xbf16>
    %c0_31 = arith.constant 0 : index
    %c0_32 = arith.constant 0 : index
    %c0_33 = arith.constant 0 : index
    %79 = vector.load %arg4[%c0_31, %c0_32, %c0_33] : memref<3x24x8xbf16, #tpu.memory_space<vmem>>, vector<1x24x8xbf16>
    %80 = vector.shape_cast %79 : vector<1x24x8xbf16> to vector<24x8xbf16>
    %cst_34 = arith.constant dense<0.000000e+00> : vector<240x8xf32>
    %81 = tpu.matmul %78, %80, %cst_34 {dimension_numbers = #tpu.dot_dimension_numbers<[1], [0], [0], [1], [0, 0, 1, 1], [], []>} : vector<240x24xbf16>, vector<24x8xbf16>, vector<240x8xf32> -> vector<240x8xf32>
    %82 = vector.extract_strided_slice %74 {offsets = [16, 0], sizes = [240, 24], strides = [1, 1]} : vector<256x24xbf16> to vector<240x24xbf16>
    %c2_35 = arith.constant 2 : index
    %c0_36 = arith.constant 0 : index
    %c0_37 = arith.constant 0 : index
    %83 = vector.load %arg4[%c2_35, %c0_36, %c0_37] : memref<3x24x8xbf16, #tpu.memory_space<vmem>>, vector<1x24x8xbf16>
    %84 = vector.shape_cast %83 : vector<1x24x8xbf16> to vector<24x8xbf16>
    %cst_38 = arith.constant dense<0.000000e+00> : vector<240x8xf32>
    %85 = tpu.matmul %82, %84, %cst_38 {dimension_numbers = #tpu.dot_dimension_numbers<[1], [0], [0], [1], [0, 0, 1, 1], [], []>} : vector<240x24xbf16>, vector<24x8xbf16>, vector<240x8xf32> -> vector<240x8xf32>
    %86 = tpu.concatenate %8, %81 in 0 : vector<16x8xf32>, vector<240x8xf32> -> vector<256x8xf32>
    %87 = arith.addf %77, %86 : vector<256x8xf32>
    %88 = tpu.concatenate %85, %8 in 0 : vector<240x8xf32>, vector<16x8xf32> -> vector<256x8xf32>
    %89 = arith.addf %87, %88 : vector<256x8xf32>
    %c0_39 = arith.constant 0 : index
    %c0_40 = arith.constant 0 : index
    %90 = vector.load %arg5[%c0_39, %c0_40] : memref<1x8xf32, #tpu.memory_space<vmem>>, vector<1x8xf32>
    %91 = vector.broadcast %90 : vector<1x8xf32> to vector<256x8xf32>
    %92 = arith.addf %89, %91 : vector<256x8xf32>
    %93 = arith.truncf %1 : vector<256x4xf32> to vector<256x4xbf16>
    %c0_41 = arith.constant 0 : index
    %c0_42 = arith.constant 0 : index
    %94 = vector.load %arg6[%c0_41, %c0_42] : memref<4x8xbf16, #tpu.memory_space<vmem>>, vector<4x8xbf16>
    %cst_43 = arith.constant dense<0.000000e+00> : vector<256x8xf32>
    %95 = tpu.matmul %93, %94, %cst_43 {dimension_numbers = #tpu.dot_dimension_numbers<[1], [0], [0], [1], [0, 0, 1, 1], [], []>} : vector<256x4xbf16>, vector<4x8xbf16>, vector<256x8xf32> -> vector<256x8xf32>
    %c0_44 = arith.constant 0 : index
    %c0_45 = arith.constant 0 : index
    %96 = vector.load %arg7[%c0_44, %c0_45] : memref<1x8xf32, #tpu.memory_space<vmem>>, vector<1x8xf32>
    %97 = vector.broadcast %96 : vector<1x8xf32> to vector<256x8xf32>
    %98 = arith.addf %95, %97 : vector<256x8xf32>
    %cst_46 = arith.constant dense<0.000000e+00> : vector<8xf32>
    %99 = vector.multi_reduction <add>, %92, %cst_46 [0] : vector<256x8xf32> to vector<8xf32>
    %100 = vector.shape_cast %99 : vector<8xf32> to vector<1x8xf32>
    %101 = arith.mulf %92, %92 : vector<256x8xf32>
    %cst_47 = arith.constant dense<0.000000e+00> : vector<8xf32>
    %102 = vector.multi_reduction <add>, %101, %cst_47 [0] : vector<256x8xf32> to vector<8xf32>
    %103 = vector.shape_cast %102 : vector<8xf32> to vector<1x8xf32>
    %cst_48 = arith.constant 3.906250e-03 : f32
    %104 = vector.broadcast %cst_48 : f32 to vector<1x8xf32>
    %105 = arith.mulf %100, %104 : vector<1x8xf32>
    %cst_49 = arith.constant 3.906250e-03 : f32
    %106 = vector.broadcast %cst_49 : f32 to vector<1x8xf32>
    %107 = arith.mulf %103, %106 : vector<1x8xf32>
    %108 = arith.mulf %105, %105 : vector<1x8xf32>
    %109 = arith.subf %107, %108 : vector<1x8xf32>
    %110 = vector.broadcast %105 : vector<1x8xf32> to vector<256x8xf32>
    %111 = arith.subf %92, %110 : vector<256x8xf32>
    %cst_50 = arith.constant 9.99999974E-6 : f32
    %112 = vector.broadcast %cst_50 : f32 to vector<1x8xf32>
    %113 = arith.addf %109, %112 : vector<1x8xf32>
    %114 = math.rsqrt %113 : vector<1x8xf32>
    %115 = vector.broadcast %114 : vector<1x8xf32> to vector<256x8xf32>
    %116 = arith.mulf %111, %115 : vector<256x8xf32>
    %cst_51 = arith.constant 0.000000e+00 : f32
    %117 = vector.broadcast %cst_51 : f32 to vector<256x8xf32>
    %118 = arith.maximumf %116, %117 : vector<256x8xf32>
    %119 = arith.addf %118, %98 : vector<256x8xf32>
    %120 = vector.shape_cast %119 : vector<256x8xf32> to vector<1x16x16x8xf32>
    %c0_52 = arith.constant 0 : index
    %c0_53 = arith.constant 0 : index
    %c0_54 = arith.constant 0 : index
    %c0_55 = arith.constant 0 : index
    %121 = vector.load %arg8[%c0_52, %c0_53, %c0_54, %c0_55] : memref<1x16x16x8xf32, #tpu.memory_space<vmem>>, vector<1x16x16x8xf32>
    tpu.vector_store %arg8[%c0_52, %c0_53, %c0_54, %c0_55], %120 {strides = array<i32>} : memref<1x16x16x8xf32, #tpu.memory_space<vmem>>, vector<1x16x16x8xf32>,
    return
  }
  func.func @transform_0(%arg0: i32) -> (i32, i32, i32, i32) {
    %c0_i32 = arith.constant 0 : i32
    %c0_i32_0 = arith.constant 0 : i32
    %c0_i32_1 = arith.constant 0 : i32
    %c0_i32_2 = arith.constant 0 : i32
    return %arg0, %c0_i32, %c0_i32_0, %c0_i32_1 : i32, i32, i32, i32
  }
  func.func @transform_1(%arg0: i32) -> (i32, i32, i32) {
    %c0_i32 = arith.constant 0 : i32
    %c0_i32_0 = arith.constant 0 : i32
    %c0_i32_1 = arith.constant 0 : i32
    %c0_i32_2 = arith.constant 0 : i32
    return %c0_i32, %c0_i32_0, %c0_i32_1 : i32, i32, i32
  }
  func.func @transform_2(%arg0: i32) -> (i32, i32) {
    %c0_i32 = arith.constant 0 : i32
    %c0_i32_0 = arith.constant 0 : i32
    %c0_i32_1 = arith.constant 0 : i32
    return %c0_i32, %c0_i32_0 : i32, i32
  }
  func.func @transform_3(%arg0: i32) -> (i32, i32, i32) {
    %c0_i32 = arith.constant 0 : i32
    %c0_i32_0 = arith.constant 0 : i32
    %c0_i32_1 = arith.constant 0 : i32
    %c0_i32_2 = arith.constant 0 : i32
    return %c0_i32, %c0_i32_0, %c0_i32_1 : i32, i32, i32
  }
  func.func @transform_4(%arg0: i32) -> (i32, i32) {
    %c0_i32 = arith.constant 0 : i32
    %c0_i32_0 = arith.constant 0 : i32
    %c0_i32_1 = arith.constant 0 : i32
    return %c0_i32, %c0_i32_0 : i32, i32
  }
  func.func @transform_5(%arg0: i32) -> (i32, i32) {
    %c0_i32 = arith.constant 0 : i32
    %c0_i32_0 = arith.constant 0 : i32
    %c0_i32_1 = arith.constant 0 : i32
    return %c0_i32, %c0_i32_0 : i32, i32
  }
  func.func @transform_6(%arg0: i32) -> (i32, i32) {
    %c0_i32 = arith.constant 0 : i32
    %c0_i32_0 = arith.constant 0 : i32
    %c0_i32_1 = arith.constant 0 : i32
    return %c0_i32, %c0_i32_0 : i32, i32
  }
  func.func @transform_7(%arg0: i32) -> (i32, i32, i32, i32) {
    %c0_i32 = arith.constant 0 : i32
    %c0_i32_0 = arith.constant 0 : i32
    %c0_i32_1 = arith.constant 0 : i32
    %c0_i32_2 = arith.constant 0 : i32
    return %arg0, %c0_i32, %c0_i32_0, %c0_i32_1 : i32, i32, i32, i32
  }
}

</mosaic_0001>

<llo_original>
// kernel: tpu_custom_call.1
$region0: #{tpu_custom_call.1}
  #allocation0 [shape = 'u32[]', space=smem, size = 0x4, offset = 0x4, fixed_abs, tag = 'smem constant byte address 0x4 - core index']
  #allocation1 [shape = 'u32[144,128]{1,0:T(1,128)}', space=vmem, size = 0x12000, scoped, tag = 'internal scratch']
  %s0 = inlined_call_operand.vmem [shape: f32[2,16,16,4], index: 0, kind: input, shape index: {}]
  %s1 = inlined_call_operand.vmem [shape: bf16[3,12,8], index: 1, kind: input, shape index: {}]
  %s2 = inlined_call_operand.vmem [shape: f32[1,8], index: 2, kind: input, shape index: {}]
  %s3 = inlined_call_operand.vmem [shape: bf16[3,24,8], index: 3, kind: input, shape index: {}]
  %s4 = inlined_call_operand.vmem [shape: f32[1,8], index: 4, kind: input, shape index: {}]
  %s5 = inlined_call_operand.vmem [shape: bf16[4,8], index: 5, kind: input, shape index: {}]
  %s6 = inlined_call_operand.vmem [shape: f32[1,8], index: 6, kind: input, shape index: {}]
  %s7 = inlined_call_operand.vmem [shape: f32[2,16,16,8], index: 7, kind: output, shape index: {}]
  %s8 = sld [smem:[#allocation0]]
  $region61: #{tpu_custom_call.1} parent=0
    _
  %s10 = ssub.s32 1, %s8
  %s11 = scalar_select 0, %s10, %s8
  loop: start=0, step=1, limit=4
  $region2: #{tpu_custom_call.1} parent=0 // loop_pre_header
    _
  $region3: #{tpu_custom_call.1} parent=0 // loop_header
    %s13 = sphi 0, %s17
    %p14 = scmp.ge.s32.totalorder %s13, 4
    %s23 = sphi 0, %s25
    %s26 = sphi 0, %s23
    %s27 = sphi 0, %s26
    %s43 = sphi 0, %s27
    %s47 = sphi 0, %s47
    %s49 = sphi 0, %s47
    %s50 = sphi 0, %s49
    %s64 = sphi 0, %s50
    %s68 = sphi 0, %s68
    %s70 = sphi 0, %s68
    %s71 = sphi 0, %s70
    %s85 = sphi 0, %s71
    %s89 = sphi 0, %s89
    %s91 = sphi 0, %s89
    %s92 = sphi 0, %s91
    %s106 = sphi 0, %s92
    %s110 = sphi 0, %s110
    %s112 = sphi 0, %s110
    %s113 = sphi 0, %s112
    %s127 = sphi 0, %s113
    %s131 = sphi 0, %s131
    %s133 = sphi 0, %s131
    %s134 = sphi 0, %s133
    %s148 = sphi 0, %s134
    %s152 = sphi 0, %s152
    %s154 = sphi 0, %s152
    %s155 = sphi 0, %s154
    %s169 = sphi 0, %s155
    %s175 = sphi 0, %s177
    %s178 = sphi 0, %s175
    %s179 = sphi 0, %s178
    %s195 = sphi 0, %s179
  $region4: #{tpu_custom_call.1} parent=0 // loop_header_branch
    %16 = sbr.rel (%p14) target = $region8
  $region5: #{tpu_custom_call.1} parent=0 // loop_body
    %s18 = ssub.s32 %s13, 1
    %s19 = ssub.s32 %s13, 2
    %s20 = sadd.s32 %s13, 1
    %s21 = ssub.s32 %s13, %s20
    %p22 = scmp.eq.s32.totalorder %s21, 0
    %s24 = sadd.s32 %s23, 1
    %s25 = scalar_select %p22, %s23, %s24
    %p28 = pneg %p22
    %p29 = scmp.eq.s32.totalorder %s13, 1
    %p30 = por %p28, %p29
    %p31 = scmp.ne.s32.totalorder %s23, %s26
    %p32 = scmp.eq.s32.totalorder %s13, 0
    %p33 = por %p31, %p32
    %p34 = scmp.ne.s32.totalorder %s23, %s26
    %p35 = scmp.eq.s32.totalorder %s18, 1
    %p36 = por %p34, %p35
    %p37 = scmp.ne.s32.totalorder %s26, %s27
    %p38 = scmp.eq.s32.totalorder %s18, 0
    %p39 = por %p37, %p38
    %p40 = scmp.ne.s32.totalorder %s26, %s27
    %p41 = scmp.eq.s32.totalorder %s19, 1
    %p42 = por %p40, %p41
    %p44 = scmp.ne.s32.totalorder %s27, %s43
    %p45 = scmp.eq.s32.totalorder %s19, 0
    %p46 = por %p44, %p45
    %s48 = sadd.s32 %s47, 1
    %p51 = scmp.eq.s32.totalorder %s13, 1
    %p52 = scmp.ne.s32.totalorder %s47, %s49
    %p53 = scmp.eq.s32.totalorder %s13, 0
    %p54 = por %p52, %p53
    %p55 = scmp.ne.s32.totalorder %s47, %s49
    %p56 = scmp.eq.s32.totalorder %s18, 1
    %p57 = por %p55, %p56
    %p58 = scmp.ne.s32.totalorder %s49, %s50
    %p59 = scmp.eq.s32.totalorder %s18, 0
    %p60 = por %p58, %p59
    %p61 = scmp.ne.s32.totalorder %s49, %s50
    %p62 = scmp.eq.s32.totalorder %s19, 1
    %p63 = por %p61, %p62
    %p65 = scmp.ne.s32.totalorder %s50, %s64
    %p66 = scmp.eq.s32.totalorder %s19, 0
    %p67 = por %p65, %p66
    %s69 = sadd.s32 %s68, 1
    %p72 = scmp.eq.s32.totalorder %s13, 1
    %p73 = scmp.ne.s32.totalorder %s68, %s70
    %p74 = scmp.eq.s32.totalorder %s13, 0
    %p75 = por %p73, %p74
    %p76 = scmp.ne.s32.totalorder %s68, %s70
    %p77 = scmp.eq.s32.totalorder %s18, 1
    %p78 = por %p76, %p77
    %p79 = scmp.ne.s32.totalorder %s70, %s71
    %p80 = scmp.eq.s32.totalorder %s18, 0
    %p81 = por %p79, %p80
    %p82 = scmp.ne.s32.totalorder %s70, %s71
    %p83 = scmp.eq.s32.totalorder %s19, 1
    %p84 = por %p82, %p83
    %p86 = scmp.ne.s32.totalorder %s71, %s85
    %p87 = scmp.eq.s32.totalorder %s19, 0
    %p88 = por %p86, %p87
    %s90 = sadd.s32 %s89, 1
    %p93 = scmp.eq.s32.totalorder %s13, 1
    %p94 = scmp.ne.s32.totalorder %s89, %s91
    %p95 = scmp.eq.s32.totalorder %s13, 0
    %p96 = por %p94, %p95
    %p97 = scmp.ne.s32.totalorder %s89, %s91
    %p98 = scmp.eq.s32.totalorder %s18, 1
    %p99 = por %p97, %p98
    %p100 = scmp.ne.s32.totalorder %s91, %s92
    %p101 = scmp.eq.s32.totalorder %s18, 0
    %p102 = por %p100, %p101
    %p103 = scmp.ne.s32.totalorder %s91, %s92
    %p104 = scmp.eq.s32.totalorder %s19, 1
    %p105 = por %p103, %p104
    %p107 = scmp.ne.s32.totalorder %s92, %s106
    %p108 = scmp.eq.s32.totalorder %s19, 0
    %p109 = por %p107, %p108
    %s111 = sadd.s32 %s110, 1
    %p114 = scmp.eq.s32.totalorder %s13, 1
    %p115 = scmp.ne.s32.totalorder %s110, %s112
    %p116 = scmp.eq.s32.totalorder %s13, 0
    %p117 = por %p115, %p116
    %p118 = scmp.ne.s32.totalorder %s110, %s112
    %p119 = scmp.eq.s32.totalorder %s18, 1
    %p120 = por %p118, %p119
    %p121 = scmp.ne.s32.totalorder %s112, %s113
    %p122 = scmp.eq.s32.totalorder %s18, 0
    %p123 = por %p121, %p122
    %p124 = scmp.ne.s32.totalorder %s112, %s113
    %p125 = scmp.eq.s32.totalorder %s19, 1
    %p126 = por %p124, %p125
    %p128 = scmp.ne.s32.totalorder %s113, %s127
    %p129 = scmp.eq.s32.totalorder %s19, 0
    %p130 = por %p128, %p129
    %s132 = sadd.s32 %s131, 1
    %p135 = scmp.eq.s32.totalorder %s13, 1
    %p136 = scmp.ne.s32.totalorder %s131, %s133
    %p137 = scmp.eq.s32.totalorder %s13, 0
    %p138 = por %p136, %p137
    %p139 = scmp.ne.s32.totalorder %s131, %s133
    %p140 = scmp.eq.s32.totalorder %s18, 1
    %p141 = por %p139, %p140
    %p142 = scmp.ne.s32.totalorder %s133, %s134
    %p143 = scmp.eq.s32.totalorder %s18, 0
    %p144 = por %p142, %p143
    %p145 = scmp.ne.s32.totalorder %s133, %s134
    %p146 = scmp.eq.s32.totalorder %s19, 1
    %p147 = por %p145, %p146
    %p149 = scmp.ne.s32.totalorder %s134, %s148
    %p150 = scmp.eq.s32.totalorder %s19, 0
    %p151 = por %p149, %p150
    %s153 = sadd.s32 %s152, 1
    %p156 = scmp.eq.s32.totalorder %s13, 1
    %p157 = scmp.ne.s32.totalorder %s152, %s154
    %p158 = scmp.eq.s32.totalorder %s13, 0
    %p159 = por %p157, %p158
    %p160 = scmp.ne.s32.totalorder %s152, %s154
    %p161 = scmp.eq.s32.totalorder %s18, 1
    %p162 = por %p160, %p161
    %p163 = scmp.ne.s32.totalorder %s154, %s155
    %p164 = scmp.eq.s32.totalorder %s18, 0
    %p165 = por %p163, %p164
    %p166 = scmp.ne.s32.totalorder %s154, %s155
    %p167 = scmp.eq.s32.totalorder %s19, 1
    %p168 = por %p166, %p167
    %p170 = scmp.ne.s32.totalorder %s155, %s169
    %p171 = scmp.eq.s32.totalorder %s19, 0
    %p172 = por %p170, %p171
    %s173 = ssub.s32 %s13, %s20
    %p174 = scmp.eq.s32.totalorder %s173, 0
    %s176 = sadd.s32 %s175, 1
    %s177 = scalar_select %p174, %s175, %s176
    %p180 = pneg %p174
    %p181 = scmp.eq.s32.totalorder %s13, 1
    %p182 = por %p180, %p181
    %p183 = scmp.ne.s32.totalorder %s175, %s178
    %p184 = scmp.eq.s32.totalorder %s13, 0
    %p185 = por %p183, %p184
    %p186 = scmp.ne.s32.totalorder %s175, %s178
    %p187 = scmp.eq.s32.totalorder %s18, 1
    %p188 = por %p186, %p187
    %p189 = scmp.ne.s32.totalorder %s178, %s179
    %p190 = scmp.eq.s32.totalorder %s18, 0
    %p191 = por %p189, %p190
    %p192 = scmp.ne.s32.totalorder %s178, %s179
    %p193 = scmp.eq.s32.totalorder %s19, 1
    %p194 = por %p192, %p193
    %p196 = scmp.ne.s32.totalorder %s179, %s195
    %p197 = scmp.eq.s32.totalorder %s19, 0
    %p198 = por %p196, %p197
    %p199 = scmp.le.s32.totalorder 1, %s13
    %p200 = scmp.lt.s32.totalorder %s13, 3
    %p201 = pnand %p199, %p200
    %p202 = pneg %p201
    // Predicated region
    $region9: #{tpu_custom_call.1} parent=5 // pred_check
      _
    $region10: #{tpu_custom_call.1} parent=5 // pred_check_branch
      %204 = sbr.rel (%p201) target = $region12
    $region11: #{tpu_custom_call.1} parent=5 // pred_region
      %s205 = ssub.s32 %s13, 1
      // Predicated region
      $region13: #{tpu_custom_call.1} parent=11 // pred_check
        %p206 = pneg %p60
      $region14: #{tpu_custom_call.1} parent=11 // pred_check_branch
        %208 = sbr.rel (%p206) target = $region16
      $region15: #{tpu_custom_call.1} parent=11 // pred_region
        _
      $region16: #{tpu_custom_call.1} parent=11 // pred_fallthru
        _
      // Predicated region
      $region17: #{tpu_custom_call.1} parent=11 // pred_check
        %p209 = pneg %p81
      $region18: #{tpu_custom_call.1} parent=11 // pred_check_branch
        %211 = sbr.rel (%p209) target = $region20
      $region19: #{tpu_custom_call.1} parent=11 // pred_region
        _
      $region20: #{tpu_custom_call.1} parent=11 // pred_fallthru
        _
      // Predicated region
      $region21: #{tpu_custom_call.1} parent=11 // pred_check
        %p212 = pneg %p102
      $region22: #{tpu_custom_call.1} parent=11 // pred_check_branch
        %214 = sbr.rel (%p212) target = $region24
      $region23: #{tpu_custom_call.1} parent=11 // pred_region
        _
      $region24: #{tpu_custom_call.1} parent=11 // pred_fallthru
        _
      // Predicated region
      $region25: #{tpu_custom_call.1} parent=11 // pred_check
        %p215 = pneg %p123
      $region26: #{tpu_custom_call.1} parent=11 // pred_check_branch
        %217 = sbr.rel (%p215) target = $region28
      $region27: #{tpu_custom_call.1} parent=11 // pred_region
        _
      $region28: #{tpu_custom_call.1} parent=11 // pred_fallthru
        _
      // Predicated region
      $region29: #{tpu_custom_call.1} parent=11 // pred_check
        %p218 = pneg %p144
      $region30: #{tpu_custom_call.1} parent=11 // pred_check_branch
        %220 = sbr.rel (%p218) target = $region32
      $region31: #{tpu_custom_call.1} parent=11 // pred_region
        _
      $region32: #{tpu_custom_call.1} parent=11 // pred_fallthru
        _
      // Predicated region
      $region33: #{tpu_custom_call.1} parent=11 // pred_check
        %p221 = pneg %p165
      $region34: #{tpu_custom_call.1} parent=11 // pred_check_branch
        %223 = sbr.rel (%p221) target = $region36
      $region35: #{tpu_custom_call.1} parent=11 // pred_region
        _
      $region36: #{tpu_custom_call.1} parent=11 // pred_fallthru
        _
    $region12: #{tpu_custom_call.1} parent=5 // pred_fallthru
      _
    %p224 = scmp.lt.s32.totalorder %s13, 2
    // Predicated region
    $region37: #{tpu_custom_call.1} parent=5 // pred_check
      %p225 = pneg %p224
    $region38: #{tpu_custom_call.1} parent=5 // pred_check_branch
      %227 = sbr.rel (%p225) target = $region40
    $region39: #{tpu_custom_call.1} parent=5 // pred_region
      // Predicated region
      $region41: #{tpu_custom_call.1} parent=39 // pred_check
        %p228 = pneg %p33
      $region42: #{tpu_custom_call.1} parent=39 // pred_check_branch
        %230 = sbr.rel (%p228) target = $region44
      $region43: #{tpu_custom_call.1} parent=39 // pred_region
        %p231 = scmp.lt.s32.totalorder %s13, 1
        %s232 = scalar_select %p231, %s13, 1
        %s233 = smul.addr %s232, 32
        %s234 = smul.addr %s233, 8
        %s235 = scalar_lea.vmem %s0, %s234
      $region44: #{tpu_custom_call.1} parent=39 // pred_fallthru
        _
    $region40: #{tpu_custom_call.1} parent=5 // pred_fallthru
      _
    %p236 = scmp.le.s32.totalorder 1, %s13
    %p237 = scmp.lt.s32.totalorder %s13, 3
    %p238 = pnand %p236, %p237
    %p239 = pneg %p238
    // Predicated region
    $region45: #{tpu_custom_call.1} parent=5 // pred_check
      _
    $region46: #{tpu_custom_call.1} parent=5 // pred_check_branch
      %241 = sbr.rel (%p238) target = $region48
    $region47: #{tpu_custom_call.1} parent=5 // pred_region
      %s242 = ssub.s32 %s13, 1
      %p243 = scmp.lt.s32.totalorder %s18, 1
      %s244 = scalar_select %p243, %s18, 1
      %s245 = smul.addr %s244, 32
      %s246 = smul.addr %s245, 8
      %s247 = scalar_lea.vmem %s0, %s246
      %p248 = pneg %p39
      %p249 = pneg %p36
      %p250 = pneg %p60
      %p251 = pneg %p57
      %p252 = pneg %p81
      %p253 = pneg %p78
      %p254 = pneg %p102
      %p255 = pneg %p99
      %p256 = pneg %p123
      %p257 = pneg %p120
      %p258 = pneg %p144
      %p259 = pneg %p141
      %p260 = pneg %p165
      %p261 = pneg %p162
      %p262 = pneg %p191
      %p263 = pneg %p188
      %p264 = scmp.lt.s32.totalorder %s18, 1
      %s265 = scalar_select %p264, %s18, 1
      %s266 = smul.addr %s265, 32
      %s267 = smul.addr %s266, 8
      %s268 = scalar_lea.vmem %s7, %s267
      %p269 = scmp.lt.s32.totalorder %s18, 1
      %s270 = scalar_select %p269, %s18, 1
      %s271 = smul.addr %s270, 32
      %s272 = smul.addr %s271, 8
      %s273 = scalar_lea.vmem %s0, %s272
      %p274 = scmp.lt.s32.totalorder %s18, 1
      %s275 = scalar_select %p274, %s18, 1
      %s276 = smul.addr %s275, 32
      %s277 = smul.addr %s276, 8
      %s278 = scalar_lea.vmem %s7, %s277
      %v280 = vld [vmem:[%s273] sm:$0xff]
      %v281 = vld [vmem:[%s273 + $0x8] sm:$0xff]
      %v282 = vld [vmem:[%s273 + $0x10] sm:$0xff]
      %v283 = vld [vmem:[%s273 + $0x18] sm:$0xff]
      %v284 = vld [vmem:[%s273 + $0x20] sm:$0xff]
      %v285 = vld [vmem:[%s273 + $0x28] sm:$0xff]
      %v286 = vld [vmem:[%s273 + $0x30] sm:$0xff]
      %v287 = vld [vmem:[%s273 + $0x38] sm:$0xff]
      %v288 = vld [vmem:[%s273 + $0x40] sm:$0xff]
      %v289 = vld [vmem:[%s273 + $0x48] sm:$0xff]
      %v290 = vld [vmem:[%s273 + $0x50] sm:$0xff]
      %v291 = vld [vmem:[%s273 + $0x58] sm:$0xff]
      %v292 = vld [vmem:[%s273 + $0x60] sm:$0xff]
      %v293 = vld [vmem:[%s273 + $0x68] sm:$0xff]
      %v294 = vld [vmem:[%s273 + $0x70] sm:$0xff]
      %v295 = vld [vmem:[%s273 + $0x78] sm:$0xff]
      %v296 = vld [vmem:[%s273 + $0x80] sm:$0xff]
      %v297 = vld [vmem:[%s273 + $0x88] sm:$0xff]
      %v298 = vld [vmem:[%s273 + $0x90] sm:$0xff]
      %v299 = vld [vmem:[%s273 + $0x98] sm:$0xff]
      %v300 = vld [vmem:[%s273 + $0xa0] sm:$0xff]
      %v301 = vld [vmem:[%s273 + $0xa8] sm:$0xff]
      %v302 = vld [vmem:[%s273 + $0xb0] sm:$0xff]
      %v303 = vld [vmem:[%s273 + $0xb8] sm:$0xff]
      %v304 = vld [vmem:[%s273 + $0xc0] sm:$0xff]
      %v305 = vld [vmem:[%s273 + $0xc8] sm:$0xff]
      %v306 = vld [vmem:[%s273 + $0xd0] sm:$0xff]
      %v307 = vld [vmem:[%s273 + $0xd8] sm:$0xff]
      %v308 = vld [vmem:[%s273 + $0xe0] sm:$0xff]
      %v309 = vld [vmem:[%s273 + $0xe8] sm:$0xff]
      %v310 = vld [vmem:[%s273 + $0xf0] sm:$0xff]
      %v311 = vld [vmem:[%s273 + $0xf8] sm:$0xff]
      %v312 = vlaneseq
      %v313 = vshrl.u32 %v312, 7
      %v314 = vadd.s32 %v313, 8
      %vm315 = vcmp.gt.s32.totalorder %v313, 0
      %vm316 = vcmp.gt.s32.totalorder %v314, 0
      %vm317 = vcmp.lt.s32.totalorder %v313, 15
      %vm318 = vcmp.lt.s32.totalorder %v314, 15
      %v319 = vrot.slane %v280, 7
      %v320 = vrot.slane %v281, 7
      %v321 = vrot.slane %v282, 7
      %v322 = vrot.slane %v283, 7
      %v323 = vrot.slane %v284, 7
      %v324 = vrot.slane %v285, 7
      %v325 = vrot.slane %v286, 7
      %v326 = vrot.slane %v287, 7
      %v327 = vrot.slane %v288, 7
      %v328 = vrot.slane %v289, 7
      %v329 = vrot.slane %v290, 7
      %v330 = vrot.slane %v291, 7
      %v331 = vrot.slane %v292, 7
      %v332 = vrot.slane %v293, 7
      %v333 = vrot.slane %v294, 7
      %v334 = vrot.slane %v295, 7
      %v335 = vrot.slane %v296, 7
      %v336 = vrot.slane %v297, 7
      %v337 = vrot.slane %v298, 7
      %v338 = vrot.slane %v299, 7
      %v339 = vrot.slane %v300, 7
      %v340 = vrot.slane %v301, 7
      %v341 = vrot.slane %v302, 7
      %v342 = vrot.slane %v303, 7
      %v343 = vrot.slane %v304, 7
      %v344 = vrot.slane %v305, 7
      %v345 = vrot.slane %v306, 7
      %v346 = vrot.slane %v307, 7
      %v347 = vrot.slane %v308, 7
      %v348 = vrot.slane %v309, 7
      %v349 = vrot.slane %v310, 7
      %v350 = vrot.slane %v311, 7
      %vm351 = vcmp.lt.s32.totalorder %v313, 1
      %v352 = vsel %vm351, %v349, %v350
      %v353 = vsel %vm351, %v348, %v349
      %v354 = vsel %vm351, %v347, %v348
      %v355 = vsel %vm351, %v346, %v347
      %v356 = vsel %vm351, %v345, %v346
      %v357 = vsel %vm351, %v344, %v345
      %v358 = vsel %vm351, %v343, %v344
      %v359 = vsel %vm351, %v342, %v343
      %v360 = vsel %vm351, %v341, %v342
      %v361 = vsel %vm351, %v340, %v341
      %v362 = vsel %vm351, %v339, %v340
      %v363 = vsel %vm351, %v338, %v339
      %v364 = vsel %vm351, %v337, %v338
      %v365 = vsel %vm351, %v336, %v337
      %v366 = vsel %vm351, %v335, %v336
      %v367 = vsel %vm351, %v334, %v335
      %v368 = vsel %vm351, %v333, %v334
      %v369 = vsel %vm351, %v332, %v333
      %v370 = vsel %vm351, %v331, %v332
      %v371 = vsel %vm351, %v330, %v331
      %v372 = vsel %vm351, %v329, %v330
      %v373 = vsel %vm351, %v328, %v329
      %v374 = vsel %vm351, %v327, %v328
      %v375 = vsel %vm351, %v326, %v327
      %v376 = vsel %vm351, %v325, %v326
      %v377 = vsel %vm351, %v324, %v325
      %v378 = vsel %vm351, %v323, %v324
      %v379 = vsel %vm351, %v322, %v323
      %v380 = vsel %vm351, %v321, %v322
      %v381 = vsel %vm351, %v320, %v321
      %v382 = vsel %vm351, %v319, %v320
      %v383 = vsel %vm351, %v350, %v319
      %v384 = vsel %vm315, 1, 0
      %v385 = vsel %vm316, 1, 0
      %vm386 = vcmp.eq.s32.totalorder %v384, 1
      %vm387 = vcmp.eq.s32.totalorder %v385, 1
      %v388 = vsel %vm386, %v383, 0.0
      %v389 = vsel %vm387, %v382, 0.0
      %v390 = vsel %vm386, %v381, 0.0
      %v391 = vsel %vm387, %v380, 0.0
      %v392 = vsel %vm386, %v379, 0.0
      %v393 = vsel %vm387, %v378, 0.0
      %v394 = vsel %vm386, %v377, 0.0
      %v395 = vsel %vm387, %v376, 0.0
      %v396 = vsel %vm386, %v375, 0.0
      %v397 = vsel %vm387, %v374, 0.0
      %v398 = vsel %vm386, %v373, 0.0
      %v399 = vsel %vm387, %v372, 0.0
      %v400 = vsel %vm386, %v371, 0.0
      %v401 = vsel %vm387, %v370, 0.0
      %v402 = vsel %vm386, %v369, 0.0
      %v403 = vsel %vm387, %v368, 0.0
      %v404 = vsel %vm386, %v367, 0.0
      %v405 = vsel %vm387, %v366, 0.0
      %v406 = vsel %vm386, %v365, 0.0
      %v407 = vsel %vm387, %v364, 0.0
      %v408 = vsel %vm386, %v363, 0.0
      %v409 = vsel %vm387, %v362, 0.0
      %v410 = vsel %vm386, %v361, 0.0
      %v411 = vsel %vm387, %v360, 0.0
      %v412 = vsel %vm386, %v359, 0.0
      %v413 = vsel %vm387, %v358, 0.0
      %v414 = vsel %vm386, %v357, 0.0
      %v415 = vsel %vm387, %v356, 0.0
      %v416 = vsel %vm386, %v355, 0.0
      %v417 = vsel %vm387, %v354, 0.0
      %v418 = vsel %vm386, %v353, 0.0
      %v419 = vsel %vm387, %v352, 0.0
      %v420 = vpack.c.bf16 %v389, %v388
      %v421 = vpack.c.bf16 %v391, %v390
      %v422 = vpack.c.bf16 %v393, %v392
      %v423 = vpack.c.bf16 %v395, %v394
      %v424 = vpack.c.bf16 %v397, %v396
      %v425 = vpack.c.bf16 %v399, %v398
      %v426 = vpack.c.bf16 %v401, %v400
      %v427 = vpack.c.bf16 %v403, %v402
      %v428 = vpack.c.bf16 %v405, %v404
      %v429 = vpack.c.bf16 %v407, %v406
      %v430 = vpack.c.bf16 %v409, %v408
      %v431 = vpack.c.bf16 %v411, %v410
      %v432 = vpack.c.bf16 %v413, %v412
      %v433 = vpack.c.bf16 %v415, %v414
      %v434 = vpack.c.bf16 %v417, %v416
      %v435 = vpack.c.bf16 %v419, %v418
      %v436 = vpack.c.bf16 %v281, %v280
      %v437 = vpack.c.bf16 %v283, %v282
      %v438 = vpack.c.bf16 %v285, %v284
      %v439 = vpack.c.bf16 %v287, %v286
      %v440 = vpack.c.bf16 %v289, %v288
      %v441 = vpack.c.bf16 %v291, %v290
      %v442 = vpack.c.bf16 %v293, %v292
      %v443 = vpack.c.bf16 %v295, %v294
      %v444 = vpack.c.bf16 %v297, %v296
      %v445 = vpack.c.bf16 %v299, %v298
      %v446 = vpack.c.bf16 %v301, %v300
      %v447 = vpack.c.bf16 %v303, %v302
      %v448 = vpack.c.bf16 %v305, %v304
      %v449 = vpack.c.bf16 %v307, %v306
      %v450 = vpack.c.bf16 %v309, %v308
      %v451 = vpack.c.bf16 %v311, %v310
      %v452 = vrot.slane %v280, 1
      %v453 = vrot.slane %v281, 1
      %v454 = vrot.slane %v282, 1
      %v455 = vrot.slane %v283, 1
      %v456 = vrot.slane %v284, 1
      %v457 = vrot.slane %v285, 1
      %v458 = vrot.slane %v286, 1
      %v459 = vrot.slane %v287, 1
      %v460 = vrot.slane %v288, 1
      %v461 = vrot.slane %v289, 1
      %v462 = vrot.slane %v290, 1
      %v463 = vrot.slane %v291, 1
      %v464 = vrot.slane %v292, 1
      %v465 = vrot.slane %v293, 1
      %v466 = vrot.slane %v294, 1
      %v467 = vrot.slane %v295, 1
      %v468 = vrot.slane %v296, 1
      %v469 = vrot.slane %v297, 1
      %v470 = vrot.slane %v298, 1
      %v471 = vrot.slane %v299, 1
      %v472 = vrot.slane %v300, 1
      %v473 = vrot.slane %v301, 1
      %v474 = vrot.slane %v302, 1
      %v475 = vrot.slane %v303, 1
      %v476 = vrot.slane %v304, 1
      %v477 = vrot.slane %v305, 1
      %v478 = vrot.slane %v306, 1
      %v479 = vrot.slane %v307, 1
      %v480 = vrot.slane %v308, 1
      %v481 = vrot.slane %v309, 1
      %v482 = vrot.slane %v310, 1
      %v483 = vrot.slane %v311, 1
      %vm484 = vcmp.lt.s32.totalorder %v313, 7
      %v485 = vsel %vm484, %v482, %v483
      %v486 = vsel %vm484, %v481, %v482
      %v487 = vsel %vm484, %v480, %v481
      %v488 = vsel %vm484, %v479, %v480
      %v489 = vsel %vm484, %v478, %v479
      %v490 = vsel %vm484, %v477, %v478
      %v491 = vsel %vm484, %v476, %v477
      %v492 = vsel %vm484, %v475, %v476
      %v493 = vsel %vm484, %v474, %v475
      %v494 = vsel %vm484, %v473, %v474
      %v495 = vsel %vm484, %v472, %v473
      %v496 = vsel %vm484, %v471, %v472
      %v497 = vsel %vm484, %v470, %v471
      %v498 = vsel %vm484, %v469, %v470
      %v499 = vsel %vm484, %v468, %v469
      %v500 = vsel %vm484, %v467, %v468
      %v501 = vsel %vm484, %v466, %v467
      %v502 = vsel %vm484, %v465, %v466
      %v503 = vsel %vm484, %v464, %v465
      %v504 = vsel %vm484, %v463, %v464
      %v505 = vsel %vm484, %v462, %v463
      %v506 = vsel %vm484, %v461, %v462
      %v507 = vsel %vm484, %v460, %v461
      %v508 = vsel %vm484, %v459, %v460
      %v509 = vsel %vm484, %v458, %v459
      %v510 = vsel %vm484, %v457, %v458
      %v511 = vsel %vm484, %v456, %v457
      %v512 = vsel %vm484, %v455, %v456
      %v513 = vsel %vm484, %v454, %v455
      %v514 = vsel %vm484, %v453, %v454
      %v515 = vsel %vm484, %v452, %v453
      %v516 = vsel %vm484, %v483, %v452
      %v517 = vsel %vm317, 1, 0
      %v518 = vsel %vm318, 1, 0
      %vm519 = vcmp.eq.s32.totalorder %v517, 1
      %vm520 = vcmp.eq.s32.totalorder %v518, 1
      %v521 = vsel %vm519, %v515, 0.0
      %v522 = vsel %vm520, %v514, 0.0
      %v523 = vsel %vm519, %v513, 0.0
      %v524 = vsel %vm520, %v512, 0.0
      %v525 = vsel %vm519, %v511, 0.0
      %v526 = vsel %vm520, %v510, 0.0
      %v527 = vsel %vm519, %v509, 0.0
      %v528 = vsel %vm520, %v508, 0.0
      %v529 = vsel %vm519, %v507, 0.0
      %v530 = vsel %vm520, %v506, 0.0
      %v531 = vsel %vm519, %v505, 0.0
      %v532 = vsel %vm520, %v504, 0.0
      %v533 = vsel %vm519, %v503, 0.0
      %v534 = vsel %vm520, %v502, 0.0
      %v535 = vsel %vm519, %v501, 0.0
      %v536 = vsel %vm520, %v500, 0.0
      %v537 = vsel %vm519, %v499, 0.0
      %v538 = vsel %vm520, %v498, 0.0
      %v539 = vsel %vm519, %v497, 0.0
      %v540 = vsel %vm520, %v496, 0.0
      %v541 = vsel %vm519, %v495, 0.0
      %v542 = vsel %vm520, %v494, 0.0
      %v543 = vsel %vm519, %v493, 0.0
      %v544 = vsel %vm520, %v492, 0.0
      %v545 = vsel %vm519, %v491, 0.0
      %v546 = vsel %vm520, %v490, 0.0
      %v547 = vsel %vm519, %v489, 0.0
      %v548 = vsel %vm520, %v488, 0.0
      %v549 = vsel %vm519, %v487, 0.0
      %v550 = vsel %vm520, %v486, 0.0
      %v551 = vsel %vm519, %v485, 0.0
      %v552 = vsel %vm520, %v516, 0.0
      %v553 = vpack.c.bf16 %v522, %v521
      %v554 = vpack.c.bf16 %v524, %v523
      %v555 = vpack.c.bf16 %v526, %v525
      %v556 = vpack.c.bf16 %v528, %v527
      %v557 = vpack.c.bf16 %v530, %v529
      %v558 = vpack.c.bf16 %v532, %v531
      %v559 = vpack.c.bf16 %v534, %v533
      %v560 = vpack.c.bf16 %v536, %v535
      %v561 = vpack.c.bf16 %v538, %v537
      %v562 = vpack.c.bf16 %v540, %v539
      %v563 = vpack.c.bf16 %v542, %v541
      %v564 = vpack.c.bf16 %v544, %v543
      %v565 = vpack.c.bf16 %v546, %v545
      %v566 = vpack.c.bf16 %v548, %v547
      %v567 = vpack.c.bf16 %v550, %v549
      %v568 = vpack.c.bf16 %v552, %v551
      %585 = vrot.lane.b32.xlu0 %v436, 4
      %v586 = vpop.permute.xlu0 %585
      %587 = vrot.lane.b32.xlu0 %v437, 4
      %v588 = vpop.permute.xlu0 %587
      %589 = vrot.lane.b32.xlu0 %v438, 4
      %v590 = vpop.permute.xlu0 %589
      %591 = vrot.lane.b32.xlu0 %v439, 4
      %v592 = vpop.permute.xlu0 %591
      %593 = vrot.lane.b32.xlu0 %v440, 4
      %v594 = vpop.permute.xlu0 %593
      %595 = vrot.lane.b32.xlu0 %v441, 4
      %v596 = vpop.permute.xlu0 %595
      %597 = vrot.lane.b32.xlu0 %v442, 4
      %v598 = vpop.permute.xlu0 %597
      %599 = vrot.lane.b32.xlu0 %v443, 4
      %v600 = vpop.permute.xlu0 %599
      %601 = vrot.lane.b32.xlu0 %v444, 4
      %v602 = vpop.permute.xlu0 %601
      %603 = vrot.lane.b32.xlu0 %v445, 4
      %v604 = vpop.permute.xlu0 %603
      %605 = vrot.lane.b32.xlu0 %v446, 4
      %v606 = vpop.permute.xlu0 %605
      %607 = vrot.lane.b32.xlu0 %v447, 4
      %v608 = vpop.permute.xlu0 %607
      %609 = vrot.lane.b32.xlu0 %v448, 4
      %v610 = vpop.permute.xlu0 %609
      %611 = vrot.lane.b32.xlu0 %v449, 4
      %v612 = vpop.permute.xlu0 %611
      %613 = vrot.lane.b32.xlu0 %v450, 4
      %v614 = vpop.permute.xlu0 %613
      %615 = vrot.lane.b32.xlu0 %v451, 4
      %v616 = vpop.permute.xlu0 %615
      %633 = vrot.lane.b32.xlu0 %v553, 8
      %v634 = vpop.permute.xlu0 %633
      %635 = vrot.lane.b32.xlu0 %v554, 8
      %v636 = vpop.permute.xlu0 %635
      %637 = vrot.lane.b32.xlu0 %v555, 8
      %v638 = vpop.permute.xlu0 %637
      %639 = vrot.lane.b32.xlu0 %v556, 8
      %v640 = vpop.permute.xlu0 %639
      %641 = vrot.lane.b32.xlu0 %v557, 8
      %v642 = vpop.permute.xlu0 %641
      %643 = vrot.lane.b32.xlu0 %v558, 8
      %v644 = vpop.permute.xlu0 %643
      %645 = vrot.lane.b32.xlu0 %v559, 8
      %v646 = vpop.permute.xlu0 %645
      %647 = vrot.lane.b32.xlu0 %v560, 8
      %v648 = vpop.permute.xlu0 %647
      %649 = vrot.lane.b32.xlu0 %v561, 8
      %v650 = vpop.permute.xlu0 %649
      %651 = vrot.lane.b32.xlu0 %v562, 8
      %v652 = vpop.permute.xlu0 %651
      %653 = vrot.lane.b32.xlu0 %v563, 8
      %v654 = vpop.permute.xlu0 %653
      %655 = vrot.lane.b32.xlu0 %v564, 8
      %v656 = vpop.permute.xlu0 %655
      %657 = vrot.lane.b32.xlu0 %v565, 8
      %v658 = vpop.permute.xlu0 %657
      %659 = vrot.lane.b32.xlu0 %v566, 8
      %v660 = vpop.permute.xlu0 %659
      %661 = vrot.lane.b32.xlu0 %v567, 8
      %v662 = vpop.permute.xlu0 %661
      %663 = vrot.lane.b32.xlu0 %v568, 8
      %v664 = vpop.permute.xlu0 %663
      %vm665 = vcmask 31744
      %v668 = vsel %vm665, %v420, %v586
      %v671 = vsel %vm665, %v421, %v588
      %v674 = vsel %vm665, %v422, %v590
      %v677 = vsel %vm665, %v423, %v592
      %v680 = vsel %vm665, %v424, %v594
      %v683 = vsel %vm665, %v425, %v596
      %v686 = vsel %vm665, %v426, %v598
      %v689 = vsel %vm665, %v427, %v600
      %v692 = vsel %vm665, %v428, %v602
      %v695 = vsel %vm665, %v429, %v604
      %v698 = vsel %vm665, %v430, %v606
      %v701 = vsel %vm665, %v431, %v608
      %v704 = vsel %vm665, %v432, %v610
      %v707 = vsel %vm665, %v433, %v612
      %v710 = vsel %vm665, %v434, %v614
      %v713 = vsel %vm665, %v435, %v616
      %vm714 = vcmask 64512
      %v716 = vsel %vm714, %v668, %v634
      %v718 = vsel %vm714, %v671, %v636
      %v720 = vsel %vm714, %v674, %v638
      %v722 = vsel %vm714, %v677, %v640
      %v724 = vsel %vm714, %v680, %v642
      %v726 = vsel %vm714, %v683, %v644
      %v728 = vsel %vm714, %v686, %v646
      %v730 = vsel %vm714, %v689, %v648
      %v732 = vsel %vm714, %v692, %v650
      %v734 = vsel %vm714, %v695, %v652
      %v736 = vsel %vm714, %v698, %v654
      %v738 = vsel %vm714, %v701, %v656
      %v740 = vsel %vm714, %v704, %v658
      %v742 = vsel %vm714, %v707, %v660
      %v744 = vsel %vm714, %v710, %v662
      %v746 = vsel %vm714, %v713, %v664
      %s747 = scalar_lea.vmem %s1, 8
      %v748 = vld [vmem:[%s747] sm:$0xf]
      %v749 = vld [vmem:[%s747 + $0x4] sm:$0x3]
      %v750 = vld [vmem:[%s1] sm:$0xf]
      %v751 = vld [vmem:[%s1 + $0x4] sm:$0x3]
      %v754 = vunpack.c.l.b16 %v750
      %v755 = vunpack.c.l.b16 %v751
      %v756 = vpack.c.b16 %v755, %v754
      %vm757 = vcmask 97280
      %v758 = vsel %vm757, %v716, 0
      %v760 = vsel %vm757, %v718, 0
      %v762 = vsel %vm757, %v720, 0
      %v764 = vsel %vm757, %v722, 0
      %v766 = vsel %vm757, %v724, 0
      %v768 = vsel %vm757, %v726, 0
      %v770 = vsel %vm757, %v728, 0
      %v772 = vsel %vm757, %v730, 0
      %v774 = vsel %vm757, %v732, 0
      %v776 = vsel %vm757, %v734, 0
      %v778 = vsel %vm757, %v736, 0
      %v780 = vsel %vm757, %v738, 0
      %v782 = vsel %vm757, %v740, 0
      %v784 = vsel %vm757, %v742, 0
      %v786 = vsel %vm757, %v744, 0
      %vm788 = vcmask 1045504
      %v790 = vsel %vm788, %v756, 0
      %792 = vmatprep.subr.bf16.mxu0 0
      %793 = vmatpush1.bf16.msra.mxu0 0
      %794 = vmatprep.subr.bf16.mxu0 0
      %795 = vmatpush1.bf16.msra.mxu0 0
      %796 = vmatprep.subr.bf16.mxu0 0
      %797 = vmatpush1.bf16.msra.mxu0 0
      %798 = vmatprep.subr.bf16.mxu0 0
      %799 = vmatpush1.bf16.msra.mxu0 0
      %800 = vmatprep.subr.bf16.mxu0 0
      %801 = vmatpush1.bf16.msra.mxu0 0
      %802 = vmatprep.subr.bf16.mxu0 0
      %803 = vmatpush1.bf16.msra.mxu0 0
      %804 = vmatprep.subr.bf16.mxu0 0
      %805 = vmatpush1.bf16.msra.mxu0 0
      %806 = vmatprep.subr.bf16.mxu0 0
      %807 = vmatpush1.bf16.msra.mxu0 %v790
      %808 = vmatprep.subr.bf16.mxu0 0
      %809 = vmatpush2.bf16.msra.mxu0 0
      %810 = vmatprep.subr.bf16.mxu0 0
      %811 = vmatpush2.bf16.msra.mxu0 0
      %812 = vmatprep.subr.bf16.mxu0 0
      %813 = vmatpush2.bf16.msra.mxu0 0
      %814 = vmatprep.subr.bf16.mxu0 0
      %815 = vmatpush2.bf16.msra.mxu0 0
      %816 = vmatprep.subr.bf16.mxu0 0
      %817 = vmatpush2.bf16.msra.mxu0 0
      %818 = vmatprep.subr.bf16.mxu0 0
      %819 = vmatpush2.bf16.msra.mxu0 0
      %820 = vmatprep.subr.bf16.mxu0 0
      %821 = vmatpush2.bf16.msra.mxu0 0
      %822 = vmatprep.subr.bf16.mxu0 0
      %823 = vmatpush2.bf16.msra.mxu0 0
      %824 = vmatprep.mubr.bf16.mxu0 0
      %825 = vmatmul.mubr.bf16.gmra.mxu0 %v758
      %v826 = vpop.f32.mrf.mxu0
      %v827 = vadd.f32 0.0, %v826
      %v828 = vpop.f32.mrf.mxu0
      %v829 = vpop.f32.mrf.mxu0
      %v830 = vadd.f32 0.0, %v829
      %v831 = vpop.f32.mrf.mxu0
      %832 = vmatprep.mubr.bf16.mxu0 0
      %833 = vmatmul.mubr.bf16.gmra.mxu0 %v760
      %v834 = vpop.f32.mrf.mxu0
      %v835 = vadd.f32 0.0, %v834
      %v836 = vpop.f32.mrf.mxu0
      %v837 = vpop.f32.mrf.mxu0
      %v838 = vadd.f32 0.0, %v837
      %v839 = vpop.f32.mrf.mxu0
      %840 = vmatprep.mubr.bf16.mxu0 0
      %841 = vmatmul.mubr.bf16.gmra.mxu0 %v762
      %v842 = vpop.f32.mrf.mxu0
      %v843 = vadd.f32 0.0, %v842
      %v844 = vpop.f32.mrf.mxu0
      %v845 = vpop.f32.mrf.mxu0
      %v846 = vadd.f32 0.0, %v845
      %v847 = vpop.f32.mrf.mxu0
      %848 = vmatprep.mubr.bf16.mxu0 0
      %849 = vmatmul.mubr.bf16.gmra.mxu0 %v764
      %v850 = vpop.f32.mrf.mxu0
      %v851 = vadd.f32 0.0, %v850
      %v852 = vpop.f32.mrf.mxu0
      %v853 = vpop.f32.mrf.mxu0
      %v854 = vadd.f32 0.0, %v853
      %v855 = vpop.f32.mrf.mxu0
      %856 = vmatprep.mubr.bf16.mxu0 0
      %857 = vmatmul.mubr.bf16.gmra.mxu0 %v766
      %v858 = vpop.f32.mrf.mxu0
      %v859 = vadd.f32 0.0, %v858
      %v860 = vpop.f32.mrf.mxu0
      %v861 = vpop.f32.mrf.mxu0
      %v862 = vadd.f32 0.0, %v861
      %v863 = vpop.f32.mrf.mxu0
      %864 = vmatprep.mubr.bf16.mxu0 0
      %865 = vmatmul.mubr.bf16.gmra.mxu0 %v768
      %v866 = vpop.f32.mrf.mxu0
      %v867 = vadd.f32 0.0, %v866
      %v868 = vpop.f32.mrf.mxu0
      %v869 = vpop.f32.mrf.mxu0
      %v870 = vadd.f32 0.0, %v869
      %v871 = vpop.f32.mrf.mxu0
      %872 = vmatprep.mubr.bf16.mxu0 0
      %873 = vmatmul.mubr.bf16.gmra.mxu0 %v770
      %v874 = vpop.f32.mrf.mxu0
      %v875 = vadd.f32 0.0, %v874
      %v876 = vpop.f32.mrf.mxu0
      %v877 = vpop.f32.mrf.mxu0
      %v878 = vadd.f32 0.0, %v877
      %v879 = vpop.f32.mrf.mxu0
      %880 = vmatprep.mubr.bf16.mxu0 0
      %881 = vmatmul.mubr.bf16.gmra.mxu0 %v772
      %v882 = vpop.f32.mrf.mxu0
      %v883 = vadd.f32 0.0, %v882
      %v884 = vpop.f32.mrf.mxu0
      %v885 = vpop.f32.mrf.mxu0
      %v886 = vadd.f32 0.0, %v885
      %v887 = vpop.f32.mrf.mxu0
      %888 = vmatprep.mubr.bf16.mxu0 0
      %889 = vmatmul.mubr.bf16.gmra.mxu0 %v774
      %v890 = vpop.f32.mrf.mxu0
      %v891 = vadd.f32 0.0, %v890
      %v892 = vpop.f32.mrf.mxu0
      %v893 = vpop.f32.mrf.mxu0
      %v894 = vadd.f32 0.0, %v893
      %v895 = vpop.f32.mrf.mxu0
      %896 = vmatprep.mubr.bf16.mxu0 0
      %897 = vmatmul.mubr.bf16.gmra.mxu0 %v776
      %v898 = vpop.f32.mrf.mxu0
      %v899 = vadd.f32 0.0, %v898
      %v900 = vpop.f32.mrf.mxu0
      %v901 = vpop.f32.mrf.mxu0
      %v902 = vadd.f32 0.0, %v901
      %v903 = vpop.f32.mrf.mxu0
      %904 = vmatprep.mubr.bf16.mxu0 0
      %905 = vmatmul.mubr.bf16.gmra.mxu0 %v778
      %v906 = vpop.f32.mrf.mxu0
      %v907 = vadd.f32 0.0, %v906
      %v908 = vpop.f32.mrf.mxu0
      %v909 = vpop.f32.mrf.mxu0
      %v910 = vadd.f32 0.0, %v909
      %v911 = vpop.f32.mrf.mxu0
      %912 = vmatprep.mubr.bf16.mxu0 0
      %913 = vmatmul.mubr.bf16.gmra.mxu0 %v780
      %v914 = vpop.f32.mrf.mxu0
      %v915 = vadd.f32 0.0, %v914
      %v916 = vpop.f32.mrf.mxu0
      %v917 = vpop.f32.mrf.mxu0
      %v918 = vadd.f32 0.0, %v917
      %v919 = vpop.f32.mrf.mxu0
      %920 = vmatprep.mubr.bf16.mxu0 0
      %921 = vmatmul.mubr.bf16.gmra.mxu0 %v782
      %v922 = vpop.f32.mrf.mxu0
      %v923 = vadd.f32 0.0, %v922
      %v924 = vpop.f32.mrf.mxu0
      %v925 = vpop.f32.mrf.mxu0
      %v926 = vadd.f32 0.0, %v925
      %v927 = vpop.f32.mrf.mxu0
      %928 = vmatprep.mubr.bf16.mxu0 0
      %929 = vmatmul.mubr.bf16.gmra.mxu0 %v784
      %v930 = vpop.f32.mrf.mxu0
      %v931 = vadd.f32 0.0, %v930
      %v932 = vpop.f32.mrf.mxu0
      %v933 = vpop.f32.mrf.mxu0
      %v934 = vadd.f32 0.0, %v933
      %v935 = vpop.f32.mrf.mxu0
      %936 = vmatprep.mubr.bf16.mxu0 0
      %937 = vmatmul.mubr.bf16.gmra.mxu0 %v786
      %v938 = vpop.f32.mrf.mxu0
      %v939 = vadd.f32 0.0, %v938
      %v940 = vpop.f32.mrf.mxu0
      %v941 = vpop.f32.mrf.mxu0
      %v942 = vadd.f32 0.0, %v941
      %v943 = vpop.f32.mrf.mxu0
      %944 = vdwg.mxu0
      %s945 = scalar_lea.vmem %s1, 16
      %v946 = vld [vmem:[%s945] sm:$0xf]
      %v947 = vld [vmem:[%s945 + $0x4] sm:$0x3]
      %v950 = vunpack.c.l.b16 %v946
      %v951 = vunpack.c.l.b16 %v947
      %v952 = vpack.c.b16 %v951, %v950
      %v953 = vsel %vm757, %v746, 0
      %v956 = vsel %vm788, %v952, 0
      %958 = vmatprep.subr.bf16.mxu0 0
      %959 = vmatpush1.bf16.msra.mxu0 0
      %960 = vmatprep.subr.bf16.mxu0 0
      %961 = vmatpush1.bf16.msra.mxu0 0
      %962 = vmatprep.subr.bf16.mxu0 0
      %963 = vmatpush1.bf16.msra.mxu0 0
      %964 = vmatprep.subr.bf16.mxu0 0
      %965 = vmatpush1.bf16.msra.mxu0 0
      %966 = vmatprep.subr.bf16.mxu0 0
      %967 = vmatpush1.bf16.msra.mxu0 0
      %968 = vmatprep.subr.bf16.mxu0 0
      %969 = vmatpush1.bf16.msra.mxu0 0
      %970 = vmatprep.subr.bf16.mxu0 0
      %971 = vmatpush1.bf16.msra.mxu0 0
      %972 = vmatprep.subr.bf16.mxu0 0
      %973 = vmatpush1.bf16.msra.mxu0 %v956
      %974 = vmatprep.subr.bf16.mxu0 0
      %975 = vmatpush2.bf16.msra.mxu0 0
      %976 = vmatprep.subr.bf16.mxu0 0
      %977 = vmatpush2.bf16.msra.mxu0 0
      %978 = vmatprep.subr.bf16.mxu0 0
      %979 = vmatpush2.bf16.msra.mxu0 0
      %980 = vmatprep.subr.bf16.mxu0 0
      %981 = vmatpush2.bf16.msra.mxu0 0
      %982 = vmatprep.subr.bf16.mxu0 0
      %983 = vmatpush2.bf16.msra.mxu0 0
      %984 = vmatprep.subr.bf16.mxu0 0
      %985 = vmatpush2.bf16.msra.mxu0 0
      %986 = vmatprep.subr.bf16.mxu0 0
      %987 = vmatpush2.bf16.msra.mxu0 0
      %988 = vmatprep.subr.bf16.mxu0 0
      %989 = vmatpush2.bf16.msra.mxu0 0
      %990 = vmatprep.mubr.bf16.mxu0 0
      %991 = vmatmul.mubr.bf16.gmra.mxu0 %v760
      %v992 = vpop.f32.mrf.mxu0
      %v993 = vadd.f32 0.0, %v992
      %v994 = vpop.f32.mrf.mxu0
      %v995 = vpop.f32.mrf.mxu0
      %v996 = vadd.f32 0.0, %v995
      %v997 = vpop.f32.mrf.mxu0
      %998 = vmatprep.mubr.bf16.mxu0 0
      %999 = vmatmul.mubr.bf16.gmra.mxu0 %v762
      %v1000 = vpop.f32.mrf.mxu0
      %v1001 = vadd.f32 0.0, %v1000
      %v1002 = vpop.f32.mrf.mxu0
      %v1003 = vpop.f32.mrf.mxu0
      %v1004 = vadd.f32 0.0, %v1003
      %v1005 = vpop.f32.mrf.mxu0
      %1006 = vmatprep.mubr.bf16.mxu0 0
      %1007 = vmatmul.mubr.bf16.gmra.mxu0 %v764
      %v1008 = vpop.f32.mrf.mxu0
      %v1009 = vadd.f32 0.0, %v1008
      %v1010 = vpop.f32.mrf.mxu0
      %v1011 = vpop.f32.mrf.mxu0
      %v1012 = vadd.f32 0.0, %v1011
      %v1013 = vpop.f32.mrf.mxu0
      %1014 = vmatprep.mubr.bf16.mxu0 0
      %1015 = vmatmul.mubr.bf16.gmra.mxu0 %v766
      %v1016 = vpop.f32.mrf.mxu0
      %v1017 = vadd.f32 0.0, %v1016
      %v1018 = vpop.f32.mrf.mxu0
      %v1019 = vpop.f32.mrf.mxu0
      %v1020 = vadd.f32 0.0, %v1019
      %v1021 = vpop.f32.mrf.mxu0
      %1022 = vmatprep.mubr.bf16.mxu0 0
      %1023 = vmatmul.mubr.bf16.gmra.mxu0 %v768
      %v1024 = vpop.f32.mrf.mxu0
      %v1025 = vadd.f32 0.0, %v1024
      %v1026 = vpop.f32.mrf.mxu0
      %v1027 = vpop.f32.mrf.mxu0
      %v1028 = vadd.f32 0.0, %v1027
      %v1029 = vpop.f32.mrf.mxu0
      %1030 = vmatprep.mubr.bf16.mxu0 0
      %1031 = vmatmul.mubr.bf16.gmra.mxu0 %v770
      %v1032 = vpop.f32.mrf.mxu0
      %v1033 = vadd.f32 0.0, %v1032
      %v1034 = vpop.f32.mrf.mxu0
      %v1035 = vpop.f32.mrf.mxu0
      %v1036 = vadd.f32 0.0, %v1035
      %v1037 = vpop.f32.mrf.mxu0
      %1038 = vmatprep.mubr.bf16.mxu0 0
      %1039 = vmatmul.mubr.bf16.gmra.mxu0 %v772
      %v1040 = vpop.f32.mrf.mxu0
      %v1041 = vadd.f32 0.0, %v1040
      %v1042 = vpop.f32.mrf.mxu0
      %v1043 = vpop.f32.mrf.mxu0
      %v1044 = vadd.f32 0.0, %v1043
      %v1045 = vpop.f32.mrf.mxu0
      %1046 = vmatprep.mubr.bf16.mxu0 0
      %1047 = vmatmul.mubr.bf16.gmra.mxu0 %v774
      %v1048 = vpop.f32.mrf.mxu0
      %v1049 = vadd.f32 0.0, %v1048
      %v1050 = vpop.f32.mrf.mxu0
      %v1051 = vpop.f32.mrf.mxu0
      %v1052 = vadd.f32 0.0, %v1051
      %v1053 = vpop.f32.mrf.mxu0
      %1054 = vmatprep.mubr.bf16.mxu0 0
      %1055 = vmatmul.mubr.bf16.gmra.mxu0 %v776
      %v1056 = vpop.f32.mrf.mxu0
      %v1057 = vadd.f32 0.0, %v1056
      %v1058 = vpop.f32.mrf.mxu0
      %v1059 = vpop.f32.mrf.mxu0
      %v1060 = vadd.f32 0.0, %v1059
      %v1061 = vpop.f32.mrf.mxu0
      %1062 = vmatprep.mubr.bf16.mxu0 0
      %1063 = vmatmul.mubr.bf16.gmra.mxu0 %v778
      %v1064 = vpop.f32.mrf.mxu0
      %v1065 = vadd.f32 0.0, %v1064
      %v1066 = vpop.f32.mrf.mxu0
      %v1067 = vpop.f32.mrf.mxu0
      %v1068 = vadd.f32 0.0, %v1067
      %v1069 = vpop.f32.mrf.mxu0
      %1070 = vmatprep.mubr.bf16.mxu0 0
      %1071 = vmatmul.mubr.bf16.gmra.mxu0 %v780
      %v1072 = vpop.f32.mrf.mxu0
      %v1073 = vadd.f32 0.0, %v1072
      %v1074 = vpop.f32.mrf.mxu0
      %v1075 = vpop.f32.mrf.mxu0
      %v1076 = vadd.f32 0.0, %v1075
      %v1077 = vpop.f32.mrf.mxu0
      %1078 = vmatprep.mubr.bf16.mxu0 0
      %1079 = vmatmul.mubr.bf16.gmra.mxu0 %v782
      %v1080 = vpop.f32.mrf.mxu0
      %v1081 = vadd.f32 0.0, %v1080
      %v1082 = vpop.f32.mrf.mxu0
      %v1083 = vpop.f32.mrf.mxu0
      %v1084 = vadd.f32 0.0, %v1083
      %v1085 = vpop.f32.mrf.mxu0
      %1086 = vmatprep.mubr.bf16.mxu0 0
      %1087 = vmatmul.mubr.bf16.gmra.mxu0 %v784
      %v1088 = vpop.f32.mrf.mxu0
      %v1089 = vadd.f32 0.0, %v1088
      %v1090 = vpop.f32.mrf.mxu0
      %v1091 = vpop.f32.mrf.mxu0
      %v1092 = vadd.f32 0.0, %v1091
      %v1093 = vpop.f32.mrf.mxu0
      %1094 = vmatprep.mubr.bf16.mxu0 0
      %1095 = vmatmul.mubr.bf16.gmra.mxu0 %v786
      %v1096 = vpop.f32.mrf.mxu0
      %v1097 = vadd.f32 0.0, %v1096
      %v1098 = vpop.f32.mrf.mxu0
      %v1099 = vpop.f32.mrf.mxu0
      %v1100 = vadd.f32 0.0, %v1099
      %v1101 = vpop.f32.mrf.mxu0
      %1102 = vmatprep.mubr.bf16.mxu0 0
      %1103 = vmatmul.mubr.bf16.gmra.mxu0 %v953
      %v1104 = vpop.f32.mrf.mxu0
      %v1105 = vadd.f32 0.0, %v1104
      %v1106 = vpop.f32.mrf.mxu0
      %v1107 = vpop.f32.mrf.mxu0
      %v1108 = vadd.f32 0.0, %v1107
      %v1109 = vpop.f32.mrf.mxu0
      %1110 = vdwg.mxu0
      %v1113 = vunpack.c.l.b16 %v748
      %v1114 = vunpack.c.l.b16 %v749
      %v1115 = vpack.c.b16 %v1114, %v1113
      %v1117 = vsel %vm788, %v1115, 0
      %1119 = vmatprep.subr.bf16.mxu0 0
      %1120 = vmatpush1.bf16.msra.mxu0 0
      %1121 = vmatprep.subr.bf16.mxu0 0
      %1122 = vmatpush1.bf16.msra.mxu0 0
      %1123 = vmatprep.subr.bf16.mxu0 0
      %1124 = vmatpush1.bf16.msra.mxu0 0
      %1125 = vmatprep.subr.bf16.mxu0 0
      %1126 = vmatpush1.bf16.msra.mxu0 0
      %1127 = vmatprep.subr.bf16.mxu0 0
      %1128 = vmatpush1.bf16.msra.mxu0 0
      %1129 = vmatprep.subr.bf16.mxu0 0
      %1130 = vmatpush1.bf16.msra.mxu0 0
      %1131 = vmatprep.subr.bf16.mxu0 0
      %1132 = vmatpush1.bf16.msra.mxu0 0
      %1133 = vmatprep.subr.bf16.mxu0 0
      %1134 = vmatpush1.bf16.msra.mxu0 %v1117
      %1135 = vmatprep.subr.bf16.mxu0 0
      %1136 = vmatpush2.bf16.msra.mxu0 0
      %1137 = vmatprep.subr.bf16.mxu0 0
      %1138 = vmatpush2.bf16.msra.mxu0 0
      %1139 = vmatprep.subr.bf16.mxu0 0
      %1140 = vmatpush2.bf16.msra.mxu0 0
      %1141 = vmatprep.subr.bf16.mxu0 0
      %1142 = vmatpush2.bf16.msra.mxu0 0
      %1143 = vmatprep.subr.bf16.mxu0 0
      %1144 = vmatpush2.bf16.msra.mxu0 0
      %1145 = vmatprep.subr.bf16.mxu0 0
      %1146 = vmatpush2.bf16.msra.mxu0 0
      %1147 = vmatprep.subr.bf16.mxu0 0
      %1148 = vmatpush2.bf16.msra.mxu0 0
      %1149 = vmatprep.subr.bf16.mxu0 0
      %1150 = vmatpush2.bf16.msra.mxu0 0
      %1151 = vmatprep.mubr.bf16.mxu0 0
      %1152 = vmatmul.mubr.bf16.gmra.mxu0 %v758
      %v1153 = vpop.f32.mrf.mxu0
      %v1154 = vadd.f32 0.0, %v1153
      %v1155 = vpop.f32.mrf.mxu0
      %v1156 = vpop.f32.mrf.mxu0
      %v1157 = vadd.f32 0.0, %v1156
      %v1158 = vpop.f32.mrf.mxu0
      %1159 = vmatprep.mubr.bf16.mxu0 0
      %1160 = vmatmul.mubr.bf16.gmra.mxu0 %v760
      %v1161 = vpop.f32.mrf.mxu0
      %v1162 = vadd.f32 %v827, %v1161
      %v1163 = vpop.f32.mrf.mxu0
      %v1164 = vpop.f32.mrf.mxu0
      %v1165 = vadd.f32 %v830, %v1164
      %v1166 = vpop.f32.mrf.mxu0
      %1167 = vmatprep.mubr.bf16.mxu0 0
      %1168 = vmatmul.mubr.bf16.gmra.mxu0 %v762
      %v1169 = vpop.f32.mrf.mxu0
      %v1170 = vadd.f32 %v835, %v1169
      %v1171 = vpop.f32.mrf.mxu0
      %v1172 = vpop.f32.mrf.mxu0
      %v1173 = vadd.f32 %v838, %v1172
      %v1174 = vpop.f32.mrf.mxu0
      %1175 = vmatprep.mubr.bf16.mxu0 0
      %1176 = vmatmul.mubr.bf16.gmra.mxu0 %v764
      %v1177 = vpop.f32.mrf.mxu0
      %v1178 = vadd.f32 %v843, %v1177
      %v1179 = vpop.f32.mrf.mxu0
      %v1180 = vpop.f32.mrf.mxu0
      %v1181 = vadd.f32 %v846, %v1180
      %v1182 = vpop.f32.mrf.mxu0
      %1183 = vmatprep.mubr.bf16.mxu0 0
      %1184 = vmatmul.mubr.bf16.gmra.mxu0 %v766
      %v1185 = vpop.f32.mrf.mxu0
      %v1186 = vadd.f32 %v851, %v1185
      %v1187 = vpop.f32.mrf.mxu0
      %v1188 = vpop.f32.mrf.mxu0
      %v1189 = vadd.f32 %v854, %v1188
      %v1190 = vpop.f32.mrf.mxu0
      %1191 = vmatprep.mubr.bf16.mxu0 0
      %1192 = vmatmul.mubr.bf16.gmra.mxu0 %v768
      %v1193 = vpop.f32.mrf.mxu0
      %v1194 = vadd.f32 %v859, %v1193
      %v1195 = vpop.f32.mrf.mxu0
      %v1196 = vpop.f32.mrf.mxu0
      %v1197 = vadd.f32 %v862, %v1196
      %v1198 = vpop.f32.mrf.mxu0
      %1199 = vmatprep.mubr.bf16.mxu0 0
      %1200 = vmatmul.mubr.bf16.gmra.mxu0 %v770
      %v1201 = vpop.f32.mrf.mxu0
      %v1202 = vadd.f32 %v867, %v1201
      %v1203 = vpop.f32.mrf.mxu0
      %v1204 = vpop.f32.mrf.mxu0
      %v1205 = vadd.f32 %v870, %v1204
      %v1206 = vpop.f32.mrf.mxu0
      %1207 = vmatprep.mubr.bf16.mxu0 0
      %1208 = vmatmul.mubr.bf16.gmra.mxu0 %v772
      %v1209 = vpop.f32.mrf.mxu0
      %v1210 = vadd.f32 %v875, %v1209
      %v1211 = vpop.f32.mrf.mxu0
      %v1212 = vpop.f32.mrf.mxu0
      %v1213 = vadd.f32 %v878, %v1212
      %v1214 = vpop.f32.mrf.mxu0
      %1215 = vmatprep.mubr.bf16.mxu0 0
      %1216 = vmatmul.mubr.bf16.gmra.mxu0 %v774
      %v1217 = vpop.f32.mrf.mxu0
      %v1218 = vadd.f32 %v883, %v1217
      %v1219 = vpop.f32.mrf.mxu0
      %v1220 = vpop.f32.mrf.mxu0
      %v1221 = vadd.f32 %v886, %v1220
      %v1222 = vpop.f32.mrf.mxu0
      %1223 = vmatprep.mubr.bf16.mxu0 0
      %1224 = vmatmul.mubr.bf16.gmra.mxu0 %v776
      %v1225 = vpop.f32.mrf.mxu0
      %v1226 = vadd.f32 %v891, %v1225
      %v1227 = vpop.f32.mrf.mxu0
      %v1228 = vpop.f32.mrf.mxu0
      %v1229 = vadd.f32 %v894, %v1228
      %v1230 = vpop.f32.mrf.mxu0
      %1231 = vmatprep.mubr.bf16.mxu0 0
      %1232 = vmatmul.mubr.bf16.gmra.mxu0 %v778
      %v1233 = vpop.f32.mrf.mxu0
      %v1234 = vadd.f32 %v899, %v1233
      %v1235 = vpop.f32.mrf.mxu0
      %v1236 = vpop.f32.mrf.mxu0
      %v1237 = vadd.f32 %v902, %v1236
      %v1238 = vpop.f32.mrf.mxu0
      %1239 = vmatprep.mubr.bf16.mxu0 0
      %1240 = vmatmul.mubr.bf16.gmra.mxu0 %v780
      %v1241 = vpop.f32.mrf.mxu0
      %v1242 = vadd.f32 %v907, %v1241
      %v1243 = vpop.f32.mrf.mxu0
      %v1244 = vpop.f32.mrf.mxu0
      %v1245 = vadd.f32 %v910, %v1244
      %v1246 = vpop.f32.mrf.mxu0
      %1247 = vmatprep.mubr.bf16.mxu0 0
      %1248 = vmatmul.mubr.bf16.gmra.mxu0 %v782
      %v1249 = vpop.f32.mrf.mxu0
      %v1250 = vadd.f32 %v915, %v1249
      %v1251 = vpop.f32.mrf.mxu0
      %v1252 = vpop.f32.mrf.mxu0
      %v1253 = vadd.f32 %v918, %v1252
      %v1254 = vpop.f32.mrf.mxu0
      %1255 = vmatprep.mubr.bf16.mxu0 0
      %1256 = vmatmul.mubr.bf16.gmra.mxu0 %v784
      %v1257 = vpop.f32.mrf.mxu0
      %v1258 = vadd.f32 %v923, %v1257
      %v1259 = vpop.f32.mrf.mxu0
      %v1260 = vpop.f32.mrf.mxu0
      %v1261 = vadd.f32 %v926, %v1260
      %v1262 = vpop.f32.mrf.mxu0
      %1263 = vmatprep.mubr.bf16.mxu0 0
      %1264 = vmatmul.mubr.bf16.gmra.mxu0 %v786
      %v1265 = vpop.f32.mrf.mxu0
      %v1266 = vadd.f32 %v931, %v1265
      %v1267 = vpop.f32.mrf.mxu0
      %v1268 = vpop.f32.mrf.mxu0
      %v1269 = vadd.f32 %v934, %v1268
      %v1270 = vpop.f32.mrf.mxu0
      %1271 = vmatprep.mubr.bf16.mxu0 0
      %1272 = vmatmul.mubr.bf16.gmra.mxu0 %v953
      %v1273 = vpop.f32.mrf.mxu0
      %v1274 = vadd.f32 %v939, %v1273
      %v1275 = vpop.f32.mrf.mxu0
      %v1276 = vpop.f32.mrf.mxu0
      %v1277 = vadd.f32 %v942, %v1276
      %v1278 = vpop.f32.mrf.mxu0
      %1279 = vdwg.mxu0
      %v1280 = vadd.f32 %v1154, %v993
      %v1281 = vadd.f32 %v1157, %v996
      %v1282 = vadd.f32 %v1162, %v1001
      %v1283 = vadd.f32 %v1165, %v1004
      %v1284 = vadd.f32 %v1170, %v1009
      %v1285 = vadd.f32 %v1173, %v1012
      %v1286 = vadd.f32 %v1178, %v1017
      %v1287 = vadd.f32 %v1181, %v1020
      %v1288 = vadd.f32 %v1186, %v1025
      %v1289 = vadd.f32 %v1189, %v1028
      %v1290 = vadd.f32 %v1194, %v1033
      %v1291 = vadd.f32 %v1197, %v1036
      %v1292 = vadd.f32 %v1202, %v1041
      %v1293 = vadd.f32 %v1205, %v1044
      %v1294 = vadd.f32 %v1210, %v1049
      %v1295 = vadd.f32 %v1213, %v1052
      %v1296 = vadd.f32 %v1218, %v1057
      %v1297 = vadd.f32 %v1221, %v1060
      %v1298 = vadd.f32 %v1226, %v1065
      %v1299 = vadd.f32 %v1229, %v1068
      %v1300 = vadd.f32 %v1234, %v1073
      %v1301 = vadd.f32 %v1237, %v1076
      %v1302 = vadd.f32 %v1242, %v1081
      %v1303 = vadd.f32 %v1245, %v1084
      %v1304 = vadd.f32 %v1250, %v1089
      %v1305 = vadd.f32 %v1253, %v1092
      %v1306 = vadd.f32 %v1258, %v1097
      %v1307 = vadd.f32 %v1261, %v1100
      %v1308 = vadd.f32 %v1266, %v1105
      %v1309 = vadd.f32 %v1269, %v1108
      %v1310 = vadd.f32 %v1274, 0.0
      %v1311 = vadd.f32 %v1277, 0.0
      %v1312 = vld [vmem:[%s2] sm:$0x1]
      %v1314 = vlaneseq
      %v1315 = vshrl.u32 %v1314, 7
      %v1316 = vsub.s32 0, %v1315
      %v1317 = vrot.slane %v1312, %v1316
      %v1319 = vadd.f32 %v1280, %v1317
      %v1320 = vadd.f32 %v1281, %v1317
      %v1321 = vadd.f32 %v1282, %v1317
      %v1322 = vadd.f32 %v1283, %v1317
      %v1323 = vadd.f32 %v1284, %v1317
      %v1324 = vadd.f32 %v1285, %v1317
      %v1325 = vadd.f32 %v1286, %v1317
      %v1326 = vadd.f32 %v1287, %v1317
      %v1327 = vadd.f32 %v1288, %v1317
      %v1328 = vadd.f32 %v1289, %v1317
      %v1329 = vadd.f32 %v1290, %v1317
      %v1330 = vadd.f32 %v1291, %v1317
      %v1331 = vadd.f32 %v1292, %v1317
      %v1332 = vadd.f32 %v1293, %v1317
      %v1333 = vadd.f32 %v1294, %v1317
      %v1334 = vadd.f32 %v1295, %v1317
      %v1335 = vadd.f32 %v1296, %v1317
      %v1336 = vadd.f32 %v1297, %v1317
      %v1337 = vadd.f32 %v1298, %v1317
      %v1338 = vadd.f32 %v1299, %v1317
      %v1339 = vadd.f32 %v1300, %v1317
      %v1340 = vadd.f32 %v1301, %v1317
      %v1341 = vadd.f32 %v1302, %v1317
      %v1342 = vadd.f32 %v1303, %v1317
      %v1343 = vadd.f32 %v1304, %v1317
      %v1344 = vadd.f32 %v1305, %v1317
      %v1345 = vadd.f32 %v1306, %v1317
      %v1346 = vadd.f32 %v1307, %v1317
      %v1347 = vadd.f32 %v1308, %v1317
      %v1348 = vadd.f32 %v1309, %v1317
      %v1349 = vadd.f32 %v1310, %v1317
      %v1350 = vadd.f32 %v1311, %v1317
      %v1351 = vsel %vm714, %v1319, 0.0
      %v1352 = vsel %vm714, %v1320, 0.0
      %v1353 = vadd.f32 %v1351, %v1352
      %v1354 = vsel %vm714, %v1321, 0.0
      %v1355 = vadd.f32 %v1353, %v1354
      %v1356 = vsel %vm714, %v1322, 0.0
      %v1357 = vadd.f32 %v1355, %v1356
      %v1358 = vsel %vm714, %v1323, 0.0
      %v1359 = vadd.f32 %v1357, %v1358
      %v1360 = vsel %vm714, %v1324, 0.0
      %v1361 = vadd.f32 %v1359, %v1360
      %v1362 = vsel %vm714, %v1325, 0.0
      %v1363 = vadd.f32 %v1361, %v1362
      %v1364 = vsel %vm714, %v1326, 0.0
      %v1365 = vadd.f32 %v1363, %v1364
      %v1366 = vsel %vm714, %v1327, 0.0
      %v1367 = vadd.f32 %v1365, %v1366
      %v1368 = vsel %vm714, %v1328, 0.0
      %v1369 = vadd.f32 %v1367, %v1368
      %v1370 = vsel %vm714, %v1329, 0.0
      %v1371 = vadd.f32 %v1369, %v1370
      %v1372 = vsel %vm714, %v1330, 0.0
      %v1373 = vadd.f32 %v1371, %v1372
      %v1374 = vsel %vm714, %v1331, 0.0
      %v1375 = vadd.f32 %v1373, %v1374
      %v1376 = vsel %vm714, %v1332, 0.0
      %v1377 = vadd.f32 %v1375, %v1376
      %v1378 = vsel %vm714, %v1333, 0.0
      %v1379 = vadd.f32 %v1377, %v1378
      %v1380 = vsel %vm714, %v1334, 0.0
      %v1381 = vadd.f32 %v1379, %v1380
      %v1382 = vsel %vm714, %v1335, 0.0
      %v1383 = vadd.f32 %v1381, %v1382
      %v1384 = vsel %vm714, %v1336, 0.0
      %v1385 = vadd.f32 %v1383, %v1384
      %v1386 = vsel %vm714, %v1337, 0.0
      %v1387 = vadd.f32 %v1385, %v1386
      %v1388 = vsel %vm714, %v1338, 0.0
      %v1389 = vadd.f32 %v1387, %v1388
      %v1390 = vsel %vm714, %v1339, 0.0
      %v1391 = vadd.f32 %v1389, %v1390
      %v1392 = vsel %vm714, %v1340, 0.0
      %v1393 = vadd.f32 %v1391, %v1392
      %v1394 = vsel %vm714, %v1341, 0.0
      %v1395 = vadd.f32 %v1393, %v1394
      %v1396 = vsel %vm714, %v1342, 0.0
      %v1397 = vadd.f32 %v1395, %v1396
      %v1398 = vsel %vm714, %v1343, 0.0
      %v1399 = vadd.f32 %v1397, %v1398
      %v1400 = vsel %vm714, %v1344, 0.0
      %v1401 = vadd.f32 %v1399, %v1400
      %v1402 = vsel %vm714, %v1345, 0.0
      %v1403 = vadd.f32 %v1401, %v1402
      %v1404 = vsel %vm714, %v1346, 0.0
      %v1405 = vadd.f32 %v1403, %v1404
      %v1406 = vsel %vm714, %v1347, 0.0
      %v1407 = vadd.f32 %v1405, %v1406
      %v1408 = vsel %vm714, %v1348, 0.0
      %v1409 = vadd.f32 %v1407, %v1408
      %v1410 = vsel %vm714, %v1349, 0.0
      %v1411 = vadd.f32 %v1409, %v1410
      %v1412 = vsel %vm714, %v1350, 0.0
      %v1413 = vadd.f32 %v1411, %v1412
      %v1414 = vrot.slane %v1413, 4
      %v1415 = vadd.f32 %v1413, %v1414
      %v1416 = vrot.slane %v1415, 2
      %v1417 = vadd.f32 %v1415, %v1416
      %v1418 = vrot.slane %v1417, 1
      %v1419 = vadd.f32 %v1417, %v1418
      %v1420 = vmul.f32 %v1319, %v1319
      %v1421 = vmul.f32 %v1320, %v1320
      %v1422 = vmul.f32 %v1321, %v1321
      %v1423 = vmul.f32 %v1322, %v1322
      %v1424 = vmul.f32 %v1323, %v1323
      %v1425 = vmul.f32 %v1324, %v1324
      %v1426 = vmul.f32 %v1325, %v1325
      %v1427 = vmul.f32 %v1326, %v1326
      %v1428 = vmul.f32 %v1327, %v1327
      %v1429 = vmul.f32 %v1328, %v1328
      %v1430 = vmul.f32 %v1329, %v1329
      %v1431 = vmul.f32 %v1330, %v1330
      %v1432 = vmul.f32 %v1331, %v1331
      %v1433 = vmul.f32 %v1332, %v1332
      %v1434 = vmul.f32 %v1333, %v1333
      %v1435 = vmul.f32 %v1334, %v1334
      %v1436 = vmul.f32 %v1335, %v1335
      %v1437 = vmul.f32 %v1336, %v1336
      %v1438 = vmul.f32 %v1337, %v1337
      %v1439 = vmul.f32 %v1338, %v1338
      %v1440 = vmul.f32 %v1339, %v1339
      %v1441 = vmul.f32 %v1340, %v1340
      %v1442 = vmul.f32 %v1341, %v1341
      %v1443 = vmul.f32 %v1342, %v1342
      %v1444 = vmul.f32 %v1343, %v1343
      %v1445 = vmul.f32 %v1344, %v1344
      %v1446 = vmul.f32 %v1345, %v1345
      %v1447 = vmul.f32 %v1346, %v1346
      %v1448 = vmul.f32 %v1347, %v1347
      %v1449 = vmul.f32 %v1348, %v1348
      %v1450 = vmul.f32 %v1349, %v1349
      %v1451 = vmul.f32 %v1350, %v1350
      %v1452 = vsel %vm714, %v1420, 0.0
      %v1453 = vsel %vm714, %v1421, 0.0
      %v1454 = vadd.f32 %v1452, %v1453
      %v1455 = vsel %vm714, %v1422, 0.0
      %v1456 = vadd.f32 %v1454, %v1455
      %v1457 = vsel %vm714, %v1423, 0.0
      %v1458 = vadd.f32 %v1456, %v1457
      %v1459 = vsel %vm714, %v1424, 0.0
      %v1460 = vadd.f32 %v1458, %v1459
      %v1461 = vsel %vm714, %v1425, 0.0
      %v1462 = vadd.f32 %v1460, %v1461
      %v1463 = vsel %vm714, %v1426, 0.0
      %v1464 = vadd.f32 %v1462, %v1463
      %v1465 = vsel %vm714, %v1427, 0.0
      %v1466 = vadd.f32 %v1464, %v1465
      %v1467 = vsel %vm714, %v1428, 0.0
      %v1468 = vadd.f32 %v1466, %v1467
      %v1469 = vsel %vm714, %v1429, 0.0
      %v1470 = vadd.f32 %v1468, %v1469
      %v1471 = vsel %vm714, %v1430, 0.0
      %v1472 = vadd.f32 %v1470, %v1471
      %v1473 = vsel %vm714, %v1431, 0.0
      %v1474 = vadd.f32 %v1472, %v1473
      %v1475 = vsel %vm714, %v1432, 0.0
      %v1476 = vadd.f32 %v1474, %v1475
      %v1477 = vsel %vm714, %v1433, 0.0
      %v1478 = vadd.f32 %v1476, %v1477
      %v1479 = vsel %vm714, %v1434, 0.0
      %v1480 = vadd.f32 %v1478, %v1479
      %v1481 = vsel %vm714, %v1435, 0.0
      %v1482 = vadd.f32 %v1480, %v1481
      %v1483 = vsel %vm714, %v1436, 0.0
      %v1484 = vadd.f32 %v1482, %v1483
      %v1485 = vsel %vm714, %v1437, 0.0
      %v1486 = vadd.f32 %v1484, %v1485
      %v1487 = vsel %vm714, %v1438, 0.0
      %v1488 = vadd.f32 %v1486, %v1487
      %v1489 = vsel %vm714, %v1439, 0.0
      %v1490 = vadd.f32 %v1488, %v1489
      %v1491 = vsel %vm714, %v1440, 0.0
      %v1492 = vadd.f32 %v1490, %v1491
      %v1493 = vsel %vm714, %v1441, 0.0
      %v1494 = vadd.f32 %v1492, %v1493
      %v1495 = vsel %vm714, %v1442, 0.0
      %v1496 = vadd.f32 %v1494, %v1495
      %v1497 = vsel %vm714, %v1443, 0.0
      %v1498 = vadd.f32 %v1496, %v1497
      %v1499 = vsel %vm714, %v1444, 0.0
      %v1500 = vadd.f32 %v1498, %v1499
      %v1501 = vsel %vm714, %v1445, 0.0
      %v1502 = vadd.f32 %v1500, %v1501
      %v1503 = vsel %vm714, %v1446, 0.0
      %v1504 = vadd.f32 %v1502, %v1503
      %v1505 = vsel %vm714, %v1447, 0.0
      %v1506 = vadd.f32 %v1504, %v1505
      %v1507 = vsel %vm714, %v1448, 0.0
      %v1508 = vadd.f32 %v1506, %v1507
      %v1509 = vsel %vm714, %v1449, 0.0
      %v1510 = vadd.f32 %v1508, %v1509
      %v1511 = vsel %vm714, %v1450, 0.0
      %v1512 = vadd.f32 %v1510, %v1511
      %v1513 = vsel %vm714, %v1451, 0.0
      %v1514 = vadd.f32 %v1512, %v1513
      %v1515 = vrot.slane %v1514, 4
      %v1516 = vadd.f32 %v1514, %v1515
      %v1517 = vrot.slane %v1516, 2
      %v1518 = vadd.f32 %v1516, %v1517
      %v1519 = vrot.slane %v1518, 1
      %v1520 = vadd.f32 %v1518, %v1519
      %v1521 = vmul.f32 %v1419, 0.00390625
      %v1522 = vmul.f32 %v1520, 0.00390625
      %v1523 = vmul.f32 %v1521, %v1521
      %v1524 = vsub.f32 %v1522, %v1523
      %v1525 = vsub.f32 %v1319, %v1521
      %v1526 = vsub.f32 %v1320, %v1521
      %v1527 = vsub.f32 %v1321, %v1521
      %v1528 = vsub.f32 %v1322, %v1521
      %v1529 = vsub.f32 %v1323, %v1521
      %v1530 = vsub.f32 %v1324, %v1521
      %v1531 = vsub.f32 %v1325, %v1521
      %v1532 = vsub.f32 %v1326, %v1521
      %v1533 = vsub.f32 %v1327, %v1521
      %v1534 = vsub.f32 %v1328, %v1521
      %v1535 = vsub.f32 %v1329, %v1521
      %v1536 = vsub.f32 %v1330, %v1521
      %v1537 = vsub.f32 %v1331, %v1521
      %v1538 = vsub.f32 %v1332, %v1521
      %v1539 = vsub.f32 %v1333, %v1521
      %v1540 = vsub.f32 %v1334, %v1521
      %v1541 = vsub.f32 %v1335, %v1521
      %v1542 = vsub.f32 %v1336, %v1521
      %v1543 = vsub.f32 %v1337, %v1521
      %v1544 = vsub.f32 %v1338, %v1521
      %v1545 = vsub.f32 %v1339, %v1521
      %v1546 = vsub.f32 %v1340, %v1521
      %v1547 = vsub.f32 %v1341, %v1521
      %v1548 = vsub.f32 %v1342, %v1521
      %v1549 = vsub.f32 %v1343, %v1521
      %v1550 = vsub.f32 %v1344, %v1521
      %v1551 = vsub.f32 %v1345, %v1521
      %v1552 = vsub.f32 %v1346, %v1521
      %v1553 = vsub.f32 %v1347, %v1521
      %v1554 = vsub.f32 %v1348, %v1521
      %v1555 = vsub.f32 %v1349, %v1521
      %v1556 = vsub.f32 %v1350, %v1521
      %v1557 = vadd.f32 %v1524, 1e-05
      %v1558 = vrsqrt.pop %v1557
      %v1559 = vmul.f32 %v1525, %v1558
      %v1560 = vmul.f32 %v1526, %v1558
      %v1561 = vmul.f32 %v1527, %v1558
      %v1562 = vmul.f32 %v1528, %v1558
      %v1563 = vmul.f32 %v1529, %v1558
      %v1564 = vmul.f32 %v1530, %v1558
      %v1565 = vmul.f32 %v1531, %v1558
      %v1566 = vmul.f32 %v1532, %v1558
      %v1567 = vmul.f32 %v1533, %v1558
      %v1568 = vmul.f32 %v1534, %v1558
      %v1569 = vmul.f32 %v1535, %v1558
      %v1570 = vmul.f32 %v1536, %v1558
      %v1571 = vmul.f32 %v1537, %v1558
      %v1572 = vmul.f32 %v1538, %v1558
      %v1573 = vmul.f32 %v1539, %v1558
      %v1574 = vmul.f32 %v1540, %v1558
      %v1575 = vmul.f32 %v1541, %v1558
      %v1576 = vmul.f32 %v1542, %v1558
      %v1577 = vmul.f32 %v1543, %v1558
      %v1578 = vmul.f32 %v1544, %v1558
      %v1579 = vmul.f32 %v1545, %v1558
      %v1580 = vmul.f32 %v1546, %v1558
      %v1581 = vmul.f32 %v1547, %v1558
      %v1582 = vmul.f32 %v1548, %v1558
      %v1583 = vmul.f32 %v1549, %v1558
      %v1584 = vmul.f32 %v1550, %v1558
      %v1585 = vmul.f32 %v1551, %v1558
      %v1586 = vmul.f32 %v1552, %v1558
      %v1587 = vmul.f32 %v1553, %v1558
      %v1588 = vmul.f32 %v1554, %v1558
      %v1589 = vmul.f32 %v1555, %v1558
      %v1590 = vmul.f32 %v1556, %v1558
      %v1591 = vmax.f32 %v1559, 0.0
      %v1592 = vmax.f32 %v1560, 0.0
      %v1593 = vmax.f32 %v1561, 0.0
      %v1594 = vmax.f32 %v1562, 0.0
      %v1595 = vmax.f32 %v1563, 0.0
      %v1596 = vmax.f32 %v1564, 0.0
      %v1597 = vmax.f32 %v1565, 0.0
      %v1598 = vmax.f32 %v1566, 0.0
      %v1599 = vmax.f32 %v1567, 0.0
      %v1600 = vmax.f32 %v1568, 0.0
      %v1601 = vmax.f32 %v1569, 0.0
      %v1602 = vmax.f32 %v1570, 0.0
      %v1603 = vmax.f32 %v1571, 0.0
      %v1604 = vmax.f32 %v1572, 0.0
      %v1605 = vmax.f32 %v1573, 0.0
      %v1606 = vmax.f32 %v1574, 0.0
      %v1607 = vmax.f32 %v1575, 0.0
      %v1608 = vmax.f32 %v1576, 0.0
      %v1609 = vmax.f32 %v1577, 0.0
      %v1610 = vmax.f32 %v1578, 0.0
      %v1611 = vmax.f32 %v1579, 0.0
      %v1612 = vmax.f32 %v1580, 0.0
      %v1613 = vmax.f32 %v1581, 0.0
      %v1614 = vmax.f32 %v1582, 0.0
      %v1615 = vmax.f32 %v1583, 0.0
      %v1616 = vmax.f32 %v1584, 0.0
      %v1617 = vmax.f32 %v1585, 0.0
      %v1618 = vmax.f32 %v1586, 0.0
      %v1619 = vmax.f32 %v1587, 0.0
      %v1620 = vmax.f32 %v1588, 0.0
      %v1621 = vmax.f32 %v1589, 0.0
      %v1622 = vmax.f32 %v1590, 0.0
      %v1623 = vrot.slane %v1591, 7
      %v1624 = vrot.slane %v1592, 7
      %v1625 = vrot.slane %v1593, 7
      %v1626 = vrot.slane %v1594, 7
      %v1627 = vrot.slane %v1595, 7
      %v1628 = vrot.slane %v1596, 7
      %v1629 = vrot.slane %v1597, 7
      %v1630 = vrot.slane %v1598, 7
      %v1631 = vrot.slane %v1599, 7
      %v1632 = vrot.slane %v1600, 7
      %v1633 = vrot.slane %v1601, 7
      %v1634 = vrot.slane %v1602, 7
      %v1635 = vrot.slane %v1603, 7
      %v1636 = vrot.slane %v1604, 7
      %v1637 = vrot.slane %v1605, 7
      %v1638 = vrot.slane %v1606, 7
      %v1639 = vrot.slane %v1607, 7
      %v1640 = vrot.slane %v1608, 7
      %v1641 = vrot.slane %v1609, 7
      %v1642 = vrot.slane %v1610, 7
      %v1643 = vrot.slane %v1611, 7
      %v1644 = vrot.slane %v1612, 7
      %v1645 = vrot.slane %v1613, 7
      %v1646 = vrot.slane %v1614, 7
      %v1647 = vrot.slane %v1615, 7
      %v1648 = vrot.slane %v1616, 7
      %v1649 = vrot.slane %v1617, 7
      %v1650 = vrot.slane %v1618, 7
      %v1651 = vrot.slane %v1619, 7
      %v1652 = vrot.slane %v1620, 7
      %v1653 = vrot.slane %v1621, 7
      %v1654 = vrot.slane %v1622, 7
      %v1655 = vsel %vm351, %v1653, %v1654
      %v1656 = vsel %vm351, %v1652, %v1653
      %v1657 = vsel %vm351, %v1651, %v1652
      %v1658 = vsel %vm351, %v1650, %v1651
      %v1659 = vsel %vm351, %v1649, %v1650
      %v1660 = vsel %vm351, %v1648, %v1649
      %v1661 = vsel %vm351, %v1647, %v1648
      %v1662 = vsel %vm351, %v1646, %v1647
      %v1663 = vsel %vm351, %v1645, %v1646
      %v1664 = vsel %vm351, %v1644, %v1645
      %v1665 = vsel %vm351, %v1643, %v1644
      %v1666 = vsel %vm351, %v1642, %v1643
      %v1667 = vsel %vm351, %v1641, %v1642
      %v1668 = vsel %vm351, %v1640, %v1641
      %v1669 = vsel %vm351, %v1639, %v1640
      %v1670 = vsel %vm351, %v1638, %v1639
      %v1671 = vsel %vm351, %v1637, %v1638
      %v1672 = vsel %vm351, %v1636, %v1637
      %v1673 = vsel %vm351, %v1635, %v1636
      %v1674 = vsel %vm351, %v1634, %v1635
      %v1675 = vsel %vm351, %v1633, %v1634
      %v1676 = vsel %vm351, %v1632, %v1633
      %v1677 = vsel %vm351, %v1631, %v1632
      %v1678 = vsel %vm351, %v1630, %v1631
      %v1679 = vsel %vm351, %v1629, %v1630
      %v1680 = vsel %vm351, %v1628, %v1629
      %v1681 = vsel %vm351, %v1627, %v1628
      %v1682 = vsel %vm351, %v1626, %v1627
      %v1683 = vsel %vm351, %v1625, %v1626
      %v1684 = vsel %vm351, %v1624, %v1625
      %v1685 = vsel %vm351, %v1623, %v1624
      %v1686 = vsel %vm351, %v1654, %v1623
      %v1687 = vsel %vm386, %v1686, 0.0
      %v1688 = vsel %vm387, %v1685, 0.0
      %v1689 = vsel %vm386, %v1684, 0.0
      %v1690 = vsel %vm387, %v1683, 0.0
      %v1691 = vsel %vm386, %v1682, 0.0
      %v1692 = vsel %vm387, %v1681, 0.0
      %v1693 = vsel %vm386, %v1680, 0.0
      %v1694 = vsel %vm387, %v1679, 0.0
      %v1695 = vsel %vm386, %v1678, 0.0
      %v1696 = vsel %vm387, %v1677, 0.0
      %v1697 = vsel %vm386, %v1676, 0.0
      %v1698 = vsel %vm387, %v1675, 0.0
      %v1699 = vsel %vm386, %v1674, 0.0
      %v1700 = vsel %vm387, %v1673, 0.0
      %v1701 = vsel %vm386, %v1672, 0.0
      %v1702 = vsel %vm387, %v1671, 0.0
      %v1703 = vsel %vm386, %v1670, 0.0
      %v1704 = vsel %vm387, %v1669, 0.0
      %v1705 = vsel %vm386, %v1668, 0.0
      %v1706 = vsel %vm387, %v1667, 0.0
      %v1707 = vsel %vm386, %v1666, 0.0
      %v1708 = vsel %vm387, %v1665, 0.0
      %v1709 = vsel %vm386, %v1664, 0.0
      %v1710 = vsel %vm387, %v1663, 0.0
      %v1711 = vsel %vm386, %v1662, 0.0
      %v1712 = vsel %vm387, %v1661, 0.0
      %v1713 = vsel %vm386, %v1660, 0.0
      %v1714 = vsel %vm387, %v1659, 0.0
      %v1715 = vsel %vm386, %v1658, 0.0
      %v1716 = vsel %vm387, %v1657, 0.0
      %v1717 = vsel %vm386, %v1656, 0.0
      %v1718 = vsel %vm387, %v1655, 0.0
      %v1719 = vpack.c.bf16 %v1688, %v1687
      %v1720 = vpack.c.bf16 %v1690, %v1689
      %v1721 = vpack.c.bf16 %v1692, %v1691
      %v1722 = vpack.c.bf16 %v1694, %v1693
      %v1723 = vpack.c.bf16 %v1696, %v1695
      %v1724 = vpack.c.bf16 %v1698, %v1697
      %v1725 = vpack.c.bf16 %v1700, %v1699
      %v1726 = vpack.c.bf16 %v1702, %v1701
      %v1727 = vpack.c.bf16 %v1704, %v1703
      %v1728 = vpack.c.bf16 %v1706, %v1705
      %v1729 = vpack.c.bf16 %v1708, %v1707
      %v1730 = vpack.c.bf16 %v1710, %v1709
      %v1731 = vpack.c.bf16 %v1712, %v1711
      %v1732 = vpack.c.bf16 %v1714, %v1713
      %v1733 = vpack.c.bf16 %v1716, %v1715
      %v1734 = vpack.c.bf16 %v1718, %v1717
      %v1735 = vpack.c.bf16 %v1592, %v1591
      %v1736 = vpack.c.bf16 %v1594, %v1593
      %v1737 = vpack.c.bf16 %v1596, %v1595
      %v1738 = vpack.c.bf16 %v1598, %v1597
      %v1739 = vpack.c.bf16 %v1600, %v1599
      %v1740 = vpack.c.bf16 %v1602, %v1601
      %v1741 = vpack.c.bf16 %v1604, %v1603
      %v1742 = vpack.c.bf16 %v1606, %v1605
      %v1743 = vpack.c.bf16 %v1608, %v1607
      %v1744 = vpack.c.bf16 %v1610, %v1609
      %v1745 = vpack.c.bf16 %v1612, %v1611
      %v1746 = vpack.c.bf16 %v1614, %v1613
      %v1747 = vpack.c.bf16 %v1616, %v1615
      %v1748 = vpack.c.bf16 %v1618, %v1617
      %v1749 = vpack.c.bf16 %v1620, %v1619
      %v1750 = vpack.c.bf16 %v1622, %v1621
      %v1751 = vrot.slane %v1591, 1
      %v1752 = vrot.slane %v1592, 1
      %v1753 = vrot.slane %v1593, 1
      %v1754 = vrot.slane %v1594, 1
      %v1755 = vrot.slane %v1595, 1
      %v1756 = vrot.slane %v1596, 1
      %v1757 = vrot.slane %v1597, 1
      %v1758 = vrot.slane %v1598, 1
      %v1759 = vrot.slane %v1599, 1
      %v1760 = vrot.slane %v1600, 1
      %v1761 = vrot.slane %v1601, 1
      %v1762 = vrot.slane %v1602, 1
      %v1763 = vrot.slane %v1603, 1
      %v1764 = vrot.slane %v1604, 1
      %v1765 = vrot.slane %v1605, 1
      %v1766 = vrot.slane %v1606, 1
      %v1767 = vrot.slane %v1607, 1
      %v1768 = vrot.slane %v1608, 1
      %v1769 = vrot.slane %v1609, 1
      %v1770 = vrot.slane %v1610, 1
      %v1771 = vrot.slane %v1611, 1
      %v1772 = vrot.slane %v1612, 1
      %v1773 = vrot.slane %v1613, 1
      %v1774 = vrot.slane %v1614, 1
      %v1775 = vrot.slane %v1615, 1
      %v1776 = vrot.slane %v1616, 1
      %v1777 = vrot.slane %v1617, 1
      %v1778 = vrot.slane %v1618, 1
      %v1779 = vrot.slane %v1619, 1
      %v1780 = vrot.slane %v1620, 1
      %v1781 = vrot.slane %v1621, 1
      %v1782 = vrot.slane %v1622, 1
      %v1783 = vsel %vm484, %v1781, %v1782
      %v1784 = vsel %vm484, %v1780, %v1781
      %v1785 = vsel %vm484, %v1779, %v1780
      %v1786 = vsel %vm484, %v1778, %v1779
      %v1787 = vsel %vm484, %v1777, %v1778
      %v1788 = vsel %vm484, %v1776, %v1777
      %v1789 = vsel %vm484, %v1775, %v1776
      %v1790 = vsel %vm484, %v1774, %v1775
      %v1791 = vsel %vm484, %v1773, %v1774
      %v1792 = vsel %vm484, %v1772, %v1773
      %v1793 = vsel %vm484, %v1771, %v1772
      %v1794 = vsel %vm484, %v1770, %v1771
      %v1795 = vsel %vm484, %v1769, %v1770
      %v1796 = vsel %vm484, %v1768, %v1769
      %v1797 = vsel %vm484, %v1767, %v1768
      %v1798 = vsel %vm484, %v1766, %v1767
      %v1799 = vsel %vm484, %v1765, %v1766
      %v1800 = vsel %vm484, %v1764, %v1765
      %v1801 = vsel %vm484, %v1763, %v1764
      %v1802 = vsel %vm484, %v1762, %v1763
      %v1803 = vsel %vm484, %v1761, %v1762
      %v1804 = vsel %vm484, %v1760, %v1761
      %v1805 = vsel %vm484, %v1759, %v1760
      %v1806 = vsel %vm484, %v1758, %v1759
      %v1807 = vsel %vm484, %v1757, %v1758
      %v1808 = vsel %vm484, %v1756, %v1757
      %v1809 = vsel %vm484, %v1755, %v1756
      %v1810 = vsel %vm484, %v1754, %v1755
      %v1811 = vsel %vm484, %v1753, %v1754
      %v1812 = vsel %vm484, %v1752, %v1753
      %v1813 = vsel %vm484, %v1751, %v1752
      %v1814 = vsel %vm484, %v1782, %v1751
      %v1815 = vsel %vm519, %v1813, 0.0
      %v1816 = vsel %vm520, %v1812, 0.0
      %v1817 = vsel %vm519, %v1811, 0.0
      %v1818 = vsel %vm520, %v1810, 0.0
      %v1819 = vsel %vm519, %v1809, 0.0
      %v1820 = vsel %vm520, %v1808, 0.0
      %v1821 = vsel %vm519, %v1807, 0.0
      %v1822 = vsel %vm520, %v1806, 0.0
      %v1823 = vsel %vm519, %v1805, 0.0
      %v1824 = vsel %vm520, %v1804, 0.0
      %v1825 = vsel %vm519, %v1803, 0.0
      %v1826 = vsel %vm520, %v1802, 0.0
      %v1827 = vsel %vm519, %v1801, 0.0
      %v1828 = vsel %vm520, %v1800, 0.0
      %v1829 = vsel %vm519, %v1799, 0.0
      %v1830 = vsel %vm520, %v1798, 0.0
      %v1831 = vsel %vm519, %v1797, 0.0
      %v1832 = vsel %vm520, %v1796, 0.0
      %v1833 = vsel %vm519, %v1795, 0.0
      %v1834 = vsel %vm520, %v1794, 0.0
      %v1835 = vsel %vm519, %v1793, 0.0
      %v1836 = vsel %vm520, %v1792, 0.0
      %v1837 = vsel %vm519, %v1791, 0.0
      %v1838 = vsel %vm520, %v1790, 0.0
      %v1839 = vsel %vm519, %v1789, 0.0
      %v1840 = vsel %vm520, %v1788, 0.0
      %v1841 = vsel %vm519, %v1787, 0.0
      %v1842 = vsel %vm520, %v1786, 0.0
      %v1843 = vsel %vm519, %v1785, 0.0
      %v1844 = vsel %vm520, %v1784, 0.0
      %v1845 = vsel %vm519, %v1783, 0.0
      %v1846 = vsel %vm520, %v1814, 0.0
      %v1847 = vpack.c.bf16 %v1816, %v1815
      %v1848 = vpack.c.bf16 %v1818, %v1817
      %v1849 = vpack.c.bf16 %v1820, %v1819
      %v1850 = vpack.c.bf16 %v1822, %v1821
      %v1851 = vpack.c.bf16 %v1824, %v1823
      %v1852 = vpack.c.bf16 %v1826, %v1825
      %v1853 = vpack.c.bf16 %v1828, %v1827
      %v1854 = vpack.c.bf16 %v1830, %v1829
      %v1855 = vpack.c.bf16 %v1832, %v1831
      %v1856 = vpack.c.bf16 %v1834, %v1833
      %v1857 = vpack.c.bf16 %v1836, %v1835
      %v1858 = vpack.c.bf16 %v1838, %v1837
      %v1859 = vpack.c.bf16 %v1840, %v1839
      %v1860 = vpack.c.bf16 %v1842, %v1841
      %v1861 = vpack.c.bf16 %v1844, %v1843
      %v1862 = vpack.c.bf16 %v1846, %v1845
      %1879 = vrot.lane.b32.xlu0 %v1735, 8
      %v1880 = vpop.permute.xlu0 %1879
      %1881 = vrot.lane.b32.xlu0 %v1736, 8
      %v1882 = vpop.permute.xlu0 %1881
      %1883 = vrot.lane.b32.xlu0 %v1737, 8
      %v1884 = vpop.permute.xlu0 %1883
      %1885 = vrot.lane.b32.xlu0 %v1738, 8
      %v1886 = vpop.permute.xlu0 %1885
      %1887 = vrot.lane.b32.xlu0 %v1739, 8
      %v1888 = vpop.permute.xlu0 %1887
      %1889 = vrot.lane.b32.xlu0 %v1740, 8
      %v1890 = vpop.permute.xlu0 %1889
      %1891 = vrot.lane.b32.xlu0 %v1741, 8
      %v1892 = vpop.permute.xlu0 %1891
      %1893 = vrot.lane.b32.xlu0 %v1742, 8
      %v1894 = vpop.permute.xlu0 %1893
      %1895 = vrot.lane.b32.xlu0 %v1743, 8
      %v1896 = vpop.permute.xlu0 %1895
      %1897 = vrot.lane.b32.xlu0 %v1744, 8
      %v1898 = vpop.permute.xlu0 %1897
      %1899 = vrot.lane.b32.xlu0 %v1745, 8
      %v1900 = vpop.permute.xlu0 %1899
      %1901 = vrot.lane.b32.xlu0 %v1746, 8
      %v1902 = vpop.permute.xlu0 %1901
      %1903 = vrot.lane.b32.xlu0 %v1747, 8
      %v1904 = vpop.permute.xlu0 %1903
      %1905 = vrot.lane.b32.xlu0 %v1748, 8
      %v1906 = vpop.permute.xlu0 %1905
      %1907 = vrot.lane.b32.xlu0 %v1749, 8
      %v1908 = vpop.permute.xlu0 %1907
      %1909 = vrot.lane.b32.xlu0 %v1750, 8
      %v1910 = vpop.permute.xlu0 %1909
      %1927 = vrot.lane.b32.xlu0 %v1847, 16
      %v1928 = vpop.permute.xlu0 %1927
      %1929 = vrot.lane.b32.xlu0 %v1848, 16
      %v1930 = vpop.permute.xlu0 %1929
      %1931 = vrot.lane.b32.xlu0 %v1849, 16
      %v1932 = vpop.permute.xlu0 %1931
      %1933 = vrot.lane.b32.xlu0 %v1850, 16
      %v1934 = vpop.permute.xlu0 %1933
      %1935 = vrot.lane.b32.xlu0 %v1851, 16
      %v1936 = vpop.permute.xlu0 %1935
      %1937 = vrot.lane.b32.xlu0 %v1852, 16
      %v1938 = vpop.permute.xlu0 %1937
      %1939 = vrot.lane.b32.xlu0 %v1853, 16
      %v1940 = vpop.permute.xlu0 %1939
      %1941 = vrot.lane.b32.xlu0 %v1854, 16
      %v1942 = vpop.permute.xlu0 %1941
      %1943 = vrot.lane.b32.xlu0 %v1855, 16
      %v1944 = vpop.permute.xlu0 %1943
      %1945 = vrot.lane.b32.xlu0 %v1856, 16
      %v1946 = vpop.permute.xlu0 %1945
      %1947 = vrot.lane.b32.xlu0 %v1857, 16
      %v1948 = vpop.permute.xlu0 %1947
      %1949 = vrot.lane.b32.xlu0 %v1858, 16
      %v1950 = vpop.permute.xlu0 %1949
      %1951 = vrot.lane.b32.xlu0 %v1859, 16
      %v1952 = vpop.permute.xlu0 %1951
      %1953 = vrot.lane.b32.xlu0 %v1860, 16
      %v1954 = vpop.permute.xlu0 %1953
      %1955 = vrot.lane.b32.xlu0 %v1861, 16
      %v1956 = vpop.permute.xlu0 %1955
      %1957 = vrot.lane.b32.xlu0 %v1862, 16
      %v1958 = vpop.permute.xlu0 %1957
      %v1961 = vsel %vm714, %v1719, %v1880
      %v1964 = vsel %vm714, %v1720, %v1882
      %v1967 = vsel %vm714, %v1721, %v1884
      %v1970 = vsel %vm714, %v1722, %v1886
      %v1973 = vsel %vm714, %v1723, %v1888
      %v1976 = vsel %vm714, %v1724, %v1890
      %v1979 = vsel %vm714, %v1725, %v1892
      %v1982 = vsel %vm714, %v1726, %v1894
      %v1985 = vsel %vm714, %v1727, %v1896
      %v1988 = vsel %vm714, %v1728, %v1898
      %v1991 = vsel %vm714, %v1729, %v1900
      %v1994 = vsel %vm714, %v1730, %v1902
      %v1997 = vsel %vm714, %v1731, %v1904
      %v2000 = vsel %vm714, %v1732, %v1906
      %v2003 = vsel %vm714, %v1733, %v1908
      %v2006 = vsel %vm714, %v1734, %v1910
      %vm2007 = vcmask 130048
      %v2009 = vsel %vm2007, %v1961, %v1928
      %v2011 = vsel %vm2007, %v1964, %v1930
      %v2013 = vsel %vm2007, %v1967, %v1932
      %v2015 = vsel %vm2007, %v1970, %v1934
      %v2017 = vsel %vm2007, %v1973, %v1936
      %v2019 = vsel %vm2007, %v1976, %v1938
      %v2021 = vsel %vm2007, %v1979, %v1940
      %v2023 = vsel %vm2007, %v1982, %v1942
      %v2025 = vsel %vm2007, %v1985, %v1944
      %v2027 = vsel %vm2007, %v1988, %v1946
      %v2029 = vsel %vm2007, %v1991, %v1948
      %v2031 = vsel %vm2007, %v1994, %v1950
      %v2033 = vsel %vm2007, %v1997, %v1952
      %v2035 = vsel %vm2007, %v2000, %v1954
      %v2037 = vsel %vm2007, %v2003, %v1956
      %v2039 = vsel %vm2007, %v2006, %v1958
      %s2040 = scalar_lea.vmem %s3, 12
      %v2041 = vld [vmem:[%s2040] sm:$0xf]
      %v2042 = vld [vmem:[%s2040 + $0x4] sm:$0xf]
      %v2043 = vld [vmem:[%s2040 + $0x8] sm:$0xf]
      %v2044 = vld [vmem:[%s3] sm:$0xf]
      %v2045 = vld [vmem:[%s3 + $0x4] sm:$0xf]
      %v2046 = vld [vmem:[%s3 + $0x8] sm:$0xf]
      %v2050 = vunpack.c.l.b16 %v2044
      %v2051 = vunpack.c.l.b16 %v2045
      %v2052 = vunpack.c.l.b16 %v2046
      %v2053 = vpack.c.b16 %v2051, %v2050
      %v2054 = vpack.c.b16 %v2052, %v2052
      %vm2056 = vcmask 195584
      %v2057 = vsel %vm2056, %v2009, 0
      %v2059 = vsel %vm2056, %v2011, 0
      %v2061 = vsel %vm2056, %v2013, 0
      %v2063 = vsel %vm2056, %v2015, 0
      %v2065 = vsel %vm2056, %v2017, 0
      %v2067 = vsel %vm2056, %v2019, 0
      %v2069 = vsel %vm2056, %v2021, 0
      %v2071 = vsel %vm2056, %v2023, 0
      %v2073 = vsel %vm2056, %v2025, 0
      %v2075 = vsel %vm2056, %v2027, 0
      %v2077 = vsel %vm2056, %v2029, 0
      %v2079 = vsel %vm2056, %v2031, 0
      %v2081 = vsel %vm2056, %v2033, 0
      %v2083 = vsel %vm2056, %v2035, 0
      %v2085 = vsel %vm2056, %v2037, 0
      %vm2087 = vcmask 1043456
      %v2089 = vsel %vm2087, %v2054, 0
      %2091 = vmatprep.subr.bf16.mxu0 0
      %2092 = vmatpush1.bf16.msra.mxu0 0
      %2093 = vmatprep.subr.bf16.mxu0 0
      %2094 = vmatpush1.bf16.msra.mxu0 0
      %2095 = vmatprep.subr.bf16.mxu0 0
      %2096 = vmatpush1.bf16.msra.mxu0 0
      %2097 = vmatprep.subr.bf16.mxu0 0
      %2098 = vmatpush1.bf16.msra.mxu0 0
      %2099 = vmatprep.subr.bf16.mxu0 0
      %2100 = vmatpush1.bf16.msra.mxu0 0
      %2101 = vmatprep.subr.bf16.mxu0 0
      %2102 = vmatpush1.bf16.msra.mxu0 0
      %2103 = vmatprep.subr.bf16.mxu0 0
      %2104 = vmatpush1.bf16.msra.mxu0 %v2089
      %2105 = vmatprep.subr.bf16.mxu0 0
      %2106 = vmatpush1.bf16.msra.mxu0 %v2053
      %2107 = vmatprep.subr.bf16.mxu0 0
      %2108 = vmatpush2.bf16.msra.mxu0 0
      %2109 = vmatprep.subr.bf16.mxu0 0
      %2110 = vmatpush2.bf16.msra.mxu0 0
      %2111 = vmatprep.subr.bf16.mxu0 0
      %2112 = vmatpush2.bf16.msra.mxu0 0
      %2113 = vmatprep.subr.bf16.mxu0 0
      %2114 = vmatpush2.bf16.msra.mxu0 0
      %2115 = vmatprep.subr.bf16.mxu0 0
      %2116 = vmatpush2.bf16.msra.mxu0 0
      %2117 = vmatprep.subr.bf16.mxu0 0
      %2118 = vmatpush2.bf16.msra.mxu0 0
      %2119 = vmatprep.subr.bf16.mxu0 0
      %2120 = vmatpush2.bf16.msra.mxu0 0
      %2121 = vmatprep.subr.bf16.mxu0 0
      %2122 = vmatpush2.bf16.msra.mxu0 0
      %2123 = vmatprep.mubr.bf16.mxu0 0
      %2124 = vmatmul.mubr.bf16.gmra.mxu0 %v2057
      %v2125 = vpop.f32.mrf.mxu0
      %v2126 = vadd.f32 0.0, %v2125
      %v2127 = vpop.f32.mrf.mxu0
      %v2128 = vpop.f32.mrf.mxu0
      %v2129 = vadd.f32 0.0, %v2128
      %v2130 = vpop.f32.mrf.mxu0
      %2131 = vmatprep.mubr.bf16.mxu0 0
      %2132 = vmatmul.mubr.bf16.gmra.mxu0 %v2059
      %v2133 = vpop.f32.mrf.mxu0
      %v2134 = vadd.f32 0.0, %v2133
      %v2135 = vpop.f32.mrf.mxu0
      %v2136 = vpop.f32.mrf.mxu0
      %v2137 = vadd.f32 0.0, %v2136
      %v2138 = vpop.f32.mrf.mxu0
      %2139 = vmatprep.mubr.bf16.mxu0 0
      %2140 = vmatmul.mubr.bf16.gmra.mxu0 %v2061
      %v2141 = vpop.f32.mrf.mxu0
      %v2142 = vadd.f32 0.0, %v2141
      %v2143 = vpop.f32.mrf.mxu0
      %v2144 = vpop.f32.mrf.mxu0
      %v2145 = vadd.f32 0.0, %v2144
      %v2146 = vpop.f32.mrf.mxu0
      %2147 = vmatprep.mubr.bf16.mxu0 0
      %2148 = vmatmul.mubr.bf16.gmra.mxu0 %v2063
      %v2149 = vpop.f32.mrf.mxu0
      %v2150 = vadd.f32 0.0, %v2149
      %v2151 = vpop.f32.mrf.mxu0
      %v2152 = vpop.f32.mrf.mxu0
      %v2153 = vadd.f32 0.0, %v2152
      %v2154 = vpop.f32.mrf.mxu0
      %2155 = vmatprep.mubr.bf16.mxu0 0
      %2156 = vmatmul.mubr.bf16.gmra.mxu0 %v2065
      %v2157 = vpop.f32.mrf.mxu0
      %v2158 = vadd.f32 0.0, %v2157
      %v2159 = vpop.f32.mrf.mxu0
      %v2160 = vpop.f32.mrf.mxu0
      %v2161 = vadd.f32 0.0, %v2160
      %v2162 = vpop.f32.mrf.mxu0
      %2163 = vmatprep.mubr.bf16.mxu0 0
      %2164 = vmatmul.mubr.bf16.gmra.mxu0 %v2067
      %v2165 = vpop.f32.mrf.mxu0
      %v2166 = vadd.f32 0.0, %v2165
      %v2167 = vpop.f32.mrf.mxu0
      %v2168 = vpop.f32.mrf.mxu0
      %v2169 = vadd.f32 0.0, %v2168
      %v2170 = vpop.f32.mrf.mxu0
      %2171 = vmatprep.mubr.bf16.mxu0 0
      %2172 = vmatmul.mubr.bf16.gmra.mxu0 %v2069
      %v2173 = vpop.f32.mrf.mxu0
      %v2174 = vadd.f32 0.0, %v2173
      %v2175 = vpop.f32.mrf.mxu0
      %v2176 = vpop.f32.mrf.mxu0
      %v2177 = vadd.f32 0.0, %v2176
      %v2178 = vpop.f32.mrf.mxu0
      %2179 = vmatprep.mubr.bf16.mxu0 0
      %2180 = vmatmul.mubr.bf16.gmra.mxu0 %v2071
      %v2181 = vpop.f32.mrf.mxu0
      %v2182 = vadd.f32 0.0, %v2181
      %v2183 = vpop.f32.mrf.mxu0
      %v2184 = vpop.f32.mrf.mxu0
      %v2185 = vadd.f32 0.0, %v2184
      %v2186 = vpop.f32.mrf.mxu0
      %2187 = vmatprep.mubr.bf16.mxu0 0
      %2188 = vmatmul.mubr.bf16.gmra.mxu0 %v2073
      %v2189 = vpop.f32.mrf.mxu0
      %v2190 = vadd.f32 0.0, %v2189
      %v2191 = vpop.f32.mrf.mxu0
      %v2192 = vpop.f32.mrf.mxu0
      %v2193 = vadd.f32 0.0, %v2192
      %v2194 = vpop.f32.mrf.mxu0
      %2195 = vmatprep.mubr.bf16.mxu0 0
      %2196 = vmatmul.mubr.bf16.gmra.mxu0 %v2075
      %v2197 = vpop.f32.mrf.mxu0
      %v2198 = vadd.f32 0.0, %v2197
      %v2199 = vpop.f32.mrf.mxu0
      %v2200 = vpop.f32.mrf.mxu0
      %v2201 = vadd.f32 0.0, %v2200
      %v2202 = vpop.f32.mrf.mxu0
      %2203 = vmatprep.mubr.bf16.mxu0 0
      %2204 = vmatmul.mubr.bf16.gmra.mxu0 %v2077
      %v2205 = vpop.f32.mrf.mxu0
      %v2206 = vadd.f32 0.0, %v2205
      %v2207 = vpop.f32.mrf.mxu0
      %v2208 = vpop.f32.mrf.mxu0
      %v2209 = vadd.f32 0.0, %v2208
      %v2210 = vpop.f32.mrf.mxu0
      %2211 = vmatprep.mubr.bf16.mxu0 0
      %2212 = vmatmul.mubr.bf16.gmra.mxu0 %v2079
      %v2213 = vpop.f32.mrf.mxu0
      %v2214 = vadd.f32 0.0, %v2213
      %v2215 = vpop.f32.mrf.mxu0
      %v2216 = vpop.f32.mrf.mxu0
      %v2217 = vadd.f32 0.0, %v2216
      %v2218 = vpop.f32.mrf.mxu0
      %2219 = vmatprep.mubr.bf16.mxu0 0
      %2220 = vmatmul.mubr.bf16.gmra.mxu0 %v2081
      %v2221 = vpop.f32.mrf.mxu0
      %v2222 = vadd.f32 0.0, %v2221
      %v2223 = vpop.f32.mrf.mxu0
      %v2224 = vpop.f32.mrf.mxu0
      %v2225 = vadd.f32 0.0, %v2224
      %v2226 = vpop.f32.mrf.mxu0
      %2227 = vmatprep.mubr.bf16.mxu0 0
      %2228 = vmatmul.mubr.bf16.gmra.mxu0 %v2083
      %v2229 = vpop.f32.mrf.mxu0
      %v2230 = vadd.f32 0.0, %v2229
      %v2231 = vpop.f32.mrf.mxu0
      %v2232 = vpop.f32.mrf.mxu0
      %v2233 = vadd.f32 0.0, %v2232
      %v2234 = vpop.f32.mrf.mxu0
      %2235 = vmatprep.mubr.bf16.mxu0 0
      %2236 = vmatmul.mubr.bf16.gmra.mxu0 %v2085
      %v2237 = vpop.f32.mrf.mxu0
      %v2238 = vadd.f32 0.0, %v2237
      %v2239 = vpop.f32.mrf.mxu0
      %v2240 = vpop.f32.mrf.mxu0
      %v2241 = vadd.f32 0.0, %v2240
      %v2242 = vpop.f32.mrf.mxu0
      %2243 = vdwg.mxu0
      %s2244 = scalar_lea.vmem %s3, 24
      %v2245 = vld [vmem:[%s2244] sm:$0xf]
      %v2246 = vld [vmem:[%s2244 + $0x4] sm:$0xf]
      %v2247 = vld [vmem:[%s2244 + $0x8] sm:$0xf]
      %v2251 = vunpack.c.l.b16 %v2245
      %v2252 = vunpack.c.l.b16 %v2246
      %v2253 = vunpack.c.l.b16 %v2247
      %v2254 = vpack.c.b16 %v2252, %v2251
      %v2255 = vpack.c.b16 %v2253, %v2253
      %v2257 = vsel %vm2056, %v2039, 0
      %v2260 = vsel %vm2087, %v2255, 0
      %2262 = vmatprep.subr.bf16.mxu0 0
      %2263 = vmatpush1.bf16.msra.mxu0 0
      %2264 = vmatprep.subr.bf16.mxu0 0
      %2265 = vmatpush1.bf16.msra.mxu0 0
      %2266 = vmatprep.subr.bf16.mxu0 0
      %2267 = vmatpush1.bf16.msra.mxu0 0
      %2268 = vmatprep.subr.bf16.mxu0 0
      %2269 = vmatpush1.bf16.msra.mxu0 0
      %2270 = vmatprep.subr.bf16.mxu0 0
      %2271 = vmatpush1.bf16.msra.mxu0 0
      %2272 = vmatprep.subr.bf16.mxu0 0
      %2273 = vmatpush1.bf16.msra.mxu0 0
      %2274 = vmatprep.subr.bf16.mxu0 0
      %2275 = vmatpush1.bf16.msra.mxu0 %v2260
      %2276 = vmatprep.subr.bf16.mxu0 0
      %2277 = vmatpush1.bf16.msra.mxu0 %v2254
      %2278 = vmatprep.subr.bf16.mxu0 0
      %2279 = vmatpush2.bf16.msra.mxu0 0
      %2280 = vmatprep.subr.bf16.mxu0 0
      %2281 = vmatpush2.bf16.msra.mxu0 0
      %2282 = vmatprep.subr.bf16.mxu0 0
      %2283 = vmatpush2.bf16.msra.mxu0 0
      %2284 = vmatprep.subr.bf16.mxu0 0
      %2285 = vmatpush2.bf16.msra.mxu0 0
      %2286 = vmatprep.subr.bf16.mxu0 0
      %2287 = vmatpush2.bf16.msra.mxu0 0
      %2288 = vmatprep.subr.bf16.mxu0 0
      %2289 = vmatpush2.bf16.msra.mxu0 0
      %2290 = vmatprep.subr.bf16.mxu0 0
      %2291 = vmatpush2.bf16.msra.mxu0 0
      %2292 = vmatprep.subr.bf16.mxu0 0
      %2293 = vmatpush2.bf16.msra.mxu0 0
      %2294 = vmatprep.mubr.bf16.mxu0 0
      %2295 = vmatmul.mubr.bf16.gmra.mxu0 %v2059
      %v2296 = vpop.f32.mrf.mxu0
      %v2297 = vadd.f32 0.0, %v2296
      %v2298 = vpop.f32.mrf.mxu0
      %v2299 = vpop.f32.mrf.mxu0
      %v2300 = vadd.f32 0.0, %v2299
      %v2301 = vpop.f32.mrf.mxu0
      %2302 = vmatprep.mubr.bf16.mxu0 0
      %2303 = vmatmul.mubr.bf16.gmra.mxu0 %v2061
      %v2304 = vpop.f32.mrf.mxu0
      %v2305 = vadd.f32 0.0, %v2304
      %v2306 = vpop.f32.mrf.mxu0
      %v2307 = vpop.f32.mrf.mxu0
      %v2308 = vadd.f32 0.0, %v2307
      %v2309 = vpop.f32.mrf.mxu0
      %2310 = vmatprep.mubr.bf16.mxu0 0
      %2311 = vmatmul.mubr.bf16.gmra.mxu0 %v2063
      %v2312 = vpop.f32.mrf.mxu0
      %v2313 = vadd.f32 0.0, %v2312
      %v2314 = vpop.f32.mrf.mxu0
      %v2315 = vpop.f32.mrf.mxu0
      %v2316 = vadd.f32 0.0, %v2315
      %v2317 = vpop.f32.mrf.mxu0
      %2318 = vmatprep.mubr.bf16.mxu0 0
      %2319 = vmatmul.mubr.bf16.gmra.mxu0 %v2065
      %v2320 = vpop.f32.mrf.mxu0
      %v2321 = vadd.f32 0.0, %v2320
      %v2322 = vpop.f32.mrf.mxu0
      %v2323 = vpop.f32.mrf.mxu0
      %v2324 = vadd.f32 0.0, %v2323
      %v2325 = vpop.f32.mrf.mxu0
      %2326 = vmatprep.mubr.bf16.mxu0 0
      %2327 = vmatmul.mubr.bf16.gmra.mxu0 %v2067
      %v2328 = vpop.f32.mrf.mxu0
      %v2329 = vadd.f32 0.0, %v2328
      %v2330 = vpop.f32.mrf.mxu0
      %v2331 = vpop.f32.mrf.mxu0
      %v2332 = vadd.f32 0.0, %v2331
      %v2333 = vpop.f32.mrf.mxu0
      %2334 = vmatprep.mubr.bf16.mxu0 0
      %2335 = vmatmul.mubr.bf16.gmra.mxu0 %v2069
      %v2336 = vpop.f32.mrf.mxu0
      %v2337 = vadd.f32 0.0, %v2336
      %v2338 = vpop.f32.mrf.mxu0
      %v2339 = vpop.f32.mrf.mxu0
      %v2340 = vadd.f32 0.0, %v2339
      %v2341 = vpop.f32.mrf.mxu0
      %2342 = vmatprep.mubr.bf16.mxu0 0
      %2343 = vmatmul.mubr.bf16.gmra.mxu0 %v2071
      %v2344 = vpop.f32.mrf.mxu0
      %v2345 = vadd.f32 0.0, %v2344
      %v2346 = vpop.f32.mrf.mxu0
      %v2347 = vpop.f32.mrf.mxu0
      %v2348 = vadd.f32 0.0, %v2347
      %v2349 = vpop.f32.mrf.mxu0
      %2350 = vmatprep.mubr.bf16.mxu0 0
      %2351 = vmatmul.mubr.bf16.gmra.mxu0 %v2073
      %v2352 = vpop.f32.mrf.mxu0
      %v2353 = vadd.f32 0.0, %v2352
      %v2354 = vpop.f32.mrf.mxu0
      %v2355 = vpop.f32.mrf.mxu0
      %v2356 = vadd.f32 0.0, %v2355
      %v2357 = vpop.f32.mrf.mxu0
      %2358 = vmatprep.mubr.bf16.mxu0 0
      %2359 = vmatmul.mubr.bf16.gmra.mxu0 %v2075
      %v2360 = vpop.f32.mrf.mxu0
      %v2361 = vadd.f32 0.0, %v2360
      %v2362 = vpop.f32.mrf.mxu0
      %v2363 = vpop.f32.mrf.mxu0
      %v2364 = vadd.f32 0.0, %v2363
      %v2365 = vpop.f32.mrf.mxu0
      %2366 = vmatprep.mubr.bf16.mxu0 0
      %2367 = vmatmul.mubr.bf16.gmra.mxu0 %v2077
      %v2368 = vpop.f32.mrf.mxu0
      %v2369 = vadd.f32 0.0, %v2368
      %v2370 = vpop.f32.mrf.mxu0
      %v2371 = vpop.f32.mrf.mxu0
      %v2372 = vadd.f32 0.0, %v2371
      %v2373 = vpop.f32.mrf.mxu0
      %2374 = vmatprep.mubr.bf16.mxu0 0
      %2375 = vmatmul.mubr.bf16.gmra.mxu0 %v2079
      %v2376 = vpop.f32.mrf.mxu0
      %v2377 = vadd.f32 0.0, %v2376
      %v2378 = vpop.f32.mrf.mxu0
      %v2379 = vpop.f32.mrf.mxu0
      %v2380 = vadd.f32 0.0, %v2379
      %v2381 = vpop.f32.mrf.mxu0
      %2382 = vmatprep.mubr.bf16.mxu0 0
      %2383 = vmatmul.mubr.bf16.gmra.mxu0 %v2081
      %v2384 = vpop.f32.mrf.mxu0
      %v2385 = vadd.f32 0.0, %v2384
      %v2386 = vpop.f32.mrf.mxu0
      %v2387 = vpop.f32.mrf.mxu0
      %v2388 = vadd.f32 0.0, %v2387
      %v2389 = vpop.f32.mrf.mxu0
      %2390 = vmatprep.mubr.bf16.mxu0 0
      %2391 = vmatmul.mubr.bf16.gmra.mxu0 %v2083
      %v2392 = vpop.f32.mrf.mxu0
      %v2393 = vadd.f32 0.0, %v2392
      %v2394 = vpop.f32.mrf.mxu0
      %v2395 = vpop.f32.mrf.mxu0
      %v2396 = vadd.f32 0.0, %v2395
      %v2397 = vpop.f32.mrf.mxu0
      %2398 = vmatprep.mubr.bf16.mxu0 0
      %2399 = vmatmul.mubr.bf16.gmra.mxu0 %v2085
      %v2400 = vpop.f32.mrf.mxu0
      %v2401 = vadd.f32 0.0, %v2400
      %v2402 = vpop.f32.mrf.mxu0
      %v2403 = vpop.f32.mrf.mxu0
      %v2404 = vadd.f32 0.0, %v2403
      %v2405 = vpop.f32.mrf.mxu0
      %2406 = vmatprep.mubr.bf16.mxu0 0
      %2407 = vmatmul.mubr.bf16.gmra.mxu0 %v2257
      %v2408 = vpop.f32.mrf.mxu0
      %v2409 = vadd.f32 0.0, %v2408
      %v2410 = vpop.f32.mrf.mxu0
      %v2411 = vpop.f32.mrf.mxu0
      %v2412 = vadd.f32 0.0, %v2411
      %v2413 = vpop.f32.mrf.mxu0
      %2414 = vdwg.mxu0
      %v2418 = vunpack.c.l.b16 %v2041
      %v2419 = vunpack.c.l.b16 %v2042
      %v2420 = vunpack.c.l.b16 %v2043
      %v2421 = vpack.c.b16 %v2419, %v2418
      %v2422 = vpack.c.b16 %v2420, %v2420
      %v2425 = vsel %vm2087, %v2422, 0
      %2427 = vmatprep.subr.bf16.mxu0 0
      %2428 = vmatpush1.bf16.msra.mxu0 0
      %2429 = vmatprep.subr.bf16.mxu0 0
      %2430 = vmatpush1.bf16.msra.mxu0 0
      %2431 = vmatprep.subr.bf16.mxu0 0
      %2432 = vmatpush1.bf16.msra.mxu0 0
      %2433 = vmatprep.subr.bf16.mxu0 0
      %2434 = vmatpush1.bf16.msra.mxu0 0
      %2435 = vmatprep.subr.bf16.mxu0 0
      %2436 = vmatpush1.bf16.msra.mxu0 0
      %2437 = vmatprep.subr.bf16.mxu0 0
      %2438 = vmatpush1.bf16.msra.mxu0 0
      %2439 = vmatprep.subr.bf16.mxu0 0
      %2440 = vmatpush1.bf16.msra.mxu0 %v2425
      %2441 = vmatprep.subr.bf16.mxu0 0
      %2442 = vmatpush1.bf16.msra.mxu0 %v2421
      %2443 = vmatprep.subr.bf16.mxu0 0
      %2444 = vmatpush2.bf16.msra.mxu0 0
      %2445 = vmatprep.subr.bf16.mxu0 0
      %2446 = vmatpush2.bf16.msra.mxu0 0
      %2447 = vmatprep.subr.bf16.mxu0 0
      %2448 = vmatpush2.bf16.msra.mxu0 0
      %2449 = vmatprep.subr.bf16.mxu0 0
      %2450 = vmatpush2.bf16.msra.mxu0 0
      %2451 = vmatprep.subr.bf16.mxu0 0
      %2452 = vmatpush2.bf16.msra.mxu0 0
      %2453 = vmatprep.subr.bf16.mxu0 0
      %2454 = vmatpush2.bf16.msra.mxu0 0
      %2455 = vmatprep.subr.bf16.mxu0 0
      %2456 = vmatpush2.bf16.msra.mxu0 0
      %2457 = vmatprep.subr.bf16.mxu0 0
      %2458 = vmatpush2.bf16.msra.mxu0 0
      %2459 = vmatprep.mubr.bf16.mxu0 0
      %2460 = vmatmul.mubr.bf16.gmra.mxu0 %v2057
      %v2461 = vpop.f32.mrf.mxu0
      %v2462 = vadd.f32 0.0, %v2461
      %v2463 = vpop.f32.mrf.mxu0
      %v2464 = vpop.f32.mrf.mxu0
      %v2465 = vadd.f32 0.0, %v2464
      %v2466 = vpop.f32.mrf.mxu0
      %2467 = vmatprep.mubr.bf16.mxu0 0
      %2468 = vmatmul.mubr.bf16.gmra.mxu0 %v2059
      %v2469 = vpop.f32.mrf.mxu0
      %v2470 = vadd.f32 %v2126, %v2469
      %v2471 = vpop.f32.mrf.mxu0
      %v2472 = vpop.f32.mrf.mxu0
      %v2473 = vadd.f32 %v2129, %v2472
      %v2474 = vpop.f32.mrf.mxu0
      %2475 = vmatprep.mubr.bf16.mxu0 0
      %2476 = vmatmul.mubr.bf16.gmra.mxu0 %v2061
      %v2477 = vpop.f32.mrf.mxu0
      %v2478 = vadd.f32 %v2134, %v2477
      %v2479 = vpop.f32.mrf.mxu0
      %v2480 = vpop.f32.mrf.mxu0
      %v2481 = vadd.f32 %v2137, %v2480
      %v2482 = vpop.f32.mrf.mxu0
      %2483 = vmatprep.mubr.bf16.mxu0 0
      %2484 = vmatmul.mubr.bf16.gmra.mxu0 %v2063
      %v2485 = vpop.f32.mrf.mxu0
      %v2486 = vadd.f32 %v2142, %v2485
      %v2487 = vpop.f32.mrf.mxu0
      %v2488 = vpop.f32.mrf.mxu0
      %v2489 = vadd.f32 %v2145, %v2488
      %v2490 = vpop.f32.mrf.mxu0
      %2491 = vmatprep.mubr.bf16.mxu0 0
      %2492 = vmatmul.mubr.bf16.gmra.mxu0 %v2065
      %v2493 = vpop.f32.mrf.mxu0
      %v2494 = vadd.f32 %v2150, %v2493
      %v2495 = vpop.f32.mrf.mxu0
      %v2496 = vpop.f32.mrf.mxu0
      %v2497 = vadd.f32 %v2153, %v2496
      %v2498 = vpop.f32.mrf.mxu0
      %2499 = vmatprep.mubr.bf16.mxu0 0
      %2500 = vmatmul.mubr.bf16.gmra.mxu0 %v2067
      %v2501 = vpop.f32.mrf.mxu0
      %v2502 = vadd.f32 %v2158, %v2501
      %v2503 = vpop.f32.mrf.mxu0
      %v2504 = vpop.f32.mrf.mxu0
      %v2505 = vadd.f32 %v2161, %v2504
      %v2506 = vpop.f32.mrf.mxu0
      %2507 = vmatprep.mubr.bf16.mxu0 0
      %2508 = vmatmul.mubr.bf16.gmra.mxu0 %v2069
      %v2509 = vpop.f32.mrf.mxu0
      %v2510 = vadd.f32 %v2166, %v2509
      %v2511 = vpop.f32.mrf.mxu0
      %v2512 = vpop.f32.mrf.mxu0
      %v2513 = vadd.f32 %v2169, %v2512
      %v2514 = vpop.f32.mrf.mxu0
      %2515 = vmatprep.mubr.bf16.mxu0 0
      %2516 = vmatmul.mubr.bf16.gmra.mxu0 %v2071
      %v2517 = vpop.f32.mrf.mxu0
      %v2518 = vadd.f32 %v2174, %v2517
      %v2519 = vpop.f32.mrf.mxu0
      %v2520 = vpop.f32.mrf.mxu0
      %v2521 = vadd.f32 %v2177, %v2520
      %v2522 = vpop.f32.mrf.mxu0
      %2523 = vmatprep.mubr.bf16.mxu0 0
      %2524 = vmatmul.mubr.bf16.gmra.mxu0 %v2073
      %v2525 = vpop.f32.mrf.mxu0
      %v2526 = vadd.f32 %v2182, %v2525
      %v2527 = vpop.f32.mrf.mxu0
      %v2528 = vpop.f32.mrf.mxu0
      %v2529 = vadd.f32 %v2185, %v2528
      %v2530 = vpop.f32.mrf.mxu0
      %2531 = vmatprep.mubr.bf16.mxu0 0
      %2532 = vmatmul.mubr.bf16.gmra.mxu0 %v2075
      %v2533 = vpop.f32.mrf.mxu0
      %v2534 = vadd.f32 %v2190, %v2533
      %v2535 = vpop.f32.mrf.mxu0
      %v2536 = vpop.f32.mrf.mxu0
      %v2537 = vadd.f32 %v2193, %v2536
      %v2538 = vpop.f32.mrf.mxu0
      %2539 = vmatprep.mubr.bf16.mxu0 0
      %2540 = vmatmul.mubr.bf16.gmra.mxu0 %v2077
      %v2541 = vpop.f32.mrf.mxu0
      %v2542 = vadd.f32 %v2198, %v2541
      %v2543 = vpop.f32.mrf.mxu0
      %v2544 = vpop.f32.mrf.mxu0
      %v2545 = vadd.f32 %v2201, %v2544
      %v2546 = vpop.f32.mrf.mxu0
      %2547 = vmatprep.mubr.bf16.mxu0 0
      %2548 = vmatmul.mubr.bf16.gmra.mxu0 %v2079
      %v2549 = vpop.f32.mrf.mxu0
      %v2550 = vadd.f32 %v2206, %v2549
      %v2551 = vpop.f32.mrf.mxu0
      %v2552 = vpop.f32.mrf.mxu0
      %v2553 = vadd.f32 %v2209, %v2552
      %v2554 = vpop.f32.mrf.mxu0
      %2555 = vmatprep.mubr.bf16.mxu0 0
      %2556 = vmatmul.mubr.bf16.gmra.mxu0 %v2081
      %v2557 = vpop.f32.mrf.mxu0
      %v2558 = vadd.f32 %v2214, %v2557
      %v2559 = vpop.f32.mrf.mxu0
      %v2560 = vpop.f32.mrf.mxu0
      %v2561 = vadd.f32 %v2217, %v2560
      %v2562 = vpop.f32.mrf.mxu0
      %2563 = vmatprep.mubr.bf16.mxu0 0
      %2564 = vmatmul.mubr.bf16.gmra.mxu0 %v2083
      %v2565 = vpop.f32.mrf.mxu0
      %v2566 = vadd.f32 %v2222, %v2565
      %v2567 = vpop.f32.mrf.mxu0
      %v2568 = vpop.f32.mrf.mxu0
      %v2569 = vadd.f32 %v2225, %v2568
      %v2570 = vpop.f32.mrf.mxu0
      %2571 = vmatprep.mubr.bf16.mxu0 0
      %2572 = vmatmul.mubr.bf16.gmra.mxu0 %v2085
      %v2573 = vpop.f32.mrf.mxu0
      %v2574 = vadd.f32 %v2230, %v2573
      %v2575 = vpop.f32.mrf.mxu0
      %v2576 = vpop.f32.mrf.mxu0
      %v2577 = vadd.f32 %v2233, %v2576
      %v2578 = vpop.f32.mrf.mxu0
      %2579 = vmatprep.mubr.bf16.mxu0 0
      %2580 = vmatmul.mubr.bf16.gmra.mxu0 %v2257
      %v2581 = vpop.f32.mrf.mxu0
      %v2582 = vadd.f32 %v2238, %v2581
      %v2583 = vpop.f32.mrf.mxu0
      %v2584 = vpop.f32.mrf.mxu0
      %v2585 = vadd.f32 %v2241, %v2584
      %v2586 = vpop.f32.mrf.mxu0
      %2587 = vdwg.mxu0
      %v2588 = vadd.f32 %v2462, %v2297
      %v2589 = vadd.f32 %v2465, %v2300
      %v2590 = vadd.f32 %v2470, %v2305
      %v2591 = vadd.f32 %v2473, %v2308
      %v2592 = vadd.f32 %v2478, %v2313
      %v2593 = vadd.f32 %v2481, %v2316
      %v2594 = vadd.f32 %v2486, %v2321
      %v2595 = vadd.f32 %v2489, %v2324
      %v2596 = vadd.f32 %v2494, %v2329
      %v2597 = vadd.f32 %v2497, %v2332
      %v2598 = vadd.f32 %v2502, %v2337
      %v2599 = vadd.f32 %v2505, %v2340
      %v2600 = vadd.f32 %v2510, %v2345
      %v2601 = vadd.f32 %v2513, %v2348
      %v2602 = vadd.f32 %v2518, %v2353
      %v2603 = vadd.f32 %v2521, %v2356
      %v2604 = vadd.f32 %v2526, %v2361
      %v2605 = vadd.f32 %v2529, %v2364
      %v2606 = vadd.f32 %v2534, %v2369
      %v2607 = vadd.f32 %v2537, %v2372
      %v2608 = vadd.f32 %v2542, %v2377
      %v2609 = vadd.f32 %v2545, %v2380
      %v2610 = vadd.f32 %v2550, %v2385
      %v2611 = vadd.f32 %v2553, %v2388
      %v2612 = vadd.f32 %v2558, %v2393
      %v2613 = vadd.f32 %v2561, %v2396
      %v2614 = vadd.f32 %v2566, %v2401
      %v2615 = vadd.f32 %v2569, %v2404
      %v2616 = vadd.f32 %v2574, %v2409
      %v2617 = vadd.f32 %v2577, %v2412
      %v2618 = vadd.f32 %v2582, 0.0
      %v2619 = vadd.f32 %v2585, 0.0
      %v2620 = vld [vmem:[%s4] sm:$0x1]
      %v2622 = vlaneseq
      %v2623 = vshrl.u32 %v2622, 7
      %v2624 = vsub.s32 0, %v2623
      %v2625 = vrot.slane %v2620, %v2624
      %v2627 = vadd.f32 %v2588, %v2625
      %v2628 = vadd.f32 %v2589, %v2625
      %v2629 = vadd.f32 %v2590, %v2625
      %v2630 = vadd.f32 %v2591, %v2625
      %v2631 = vadd.f32 %v2592, %v2625
      %v2632 = vadd.f32 %v2593, %v2625
      %v2633 = vadd.f32 %v2594, %v2625
      %v2634 = vadd.f32 %v2595, %v2625
      %v2635 = vadd.f32 %v2596, %v2625
      %v2636 = vadd.f32 %v2597, %v2625
      %v2637 = vadd.f32 %v2598, %v2625
      %v2638 = vadd.f32 %v2599, %v2625
      %v2639 = vadd.f32 %v2600, %v2625
      %v2640 = vadd.f32 %v2601, %v2625
      %v2641 = vadd.f32 %v2602, %v2625
      %v2642 = vadd.f32 %v2603, %v2625
      %v2643 = vadd.f32 %v2604, %v2625
      %v2644 = vadd.f32 %v2605, %v2625
      %v2645 = vadd.f32 %v2606, %v2625
      %v2646 = vadd.f32 %v2607, %v2625
      %v2647 = vadd.f32 %v2608, %v2625
      %v2648 = vadd.f32 %v2609, %v2625
      %v2649 = vadd.f32 %v2610, %v2625
      %v2650 = vadd.f32 %v2611, %v2625
      %v2651 = vadd.f32 %v2612, %v2625
      %v2652 = vadd.f32 %v2613, %v2625
      %v2653 = vadd.f32 %v2614, %v2625
      %v2654 = vadd.f32 %v2615, %v2625
      %v2655 = vadd.f32 %v2616, %v2625
      %v2656 = vadd.f32 %v2617, %v2625
      %v2657 = vadd.f32 %v2618, %v2625
      %v2658 = vadd.f32 %v2619, %v2625
      %v2659 = vld [vmem:[%s5] sm:$0x3]
      %v2660 = vld [vmem:[%s6] sm:$0x1]
      %v2662 = vlaneseq
      %v2663 = vshrl.u32 %v2662, 7
      %v2664 = vsub.s32 0, %v2663
      %v2665 = vrot.slane %v2660, %v2664
      %v2668 = vsel %vm665, %v436, 0
      %v2671 = vsel %vm665, %v437, 0
      %v2674 = vsel %vm665, %v438, 0
      %v2677 = vsel %vm665, %v439, 0
      %v2680 = vsel %vm665, %v440, 0
      %v2683 = vsel %vm665, %v441, 0
      %v2686 = vsel %vm665, %v442, 0
      %v2689 = vsel %vm665, %v443, 0
      %v2692 = vsel %vm665, %v444, 0
      %v2695 = vsel %vm665, %v445, 0
      %v2698 = vsel %vm665, %v446, 0
      %v2701 = vsel %vm665, %v447, 0
      %v2704 = vsel %vm665, %v448, 0
      %v2707 = vsel %vm665, %v449, 0
      %v2710 = vsel %vm665, %v450, 0
      %v2713 = vsel %vm665, %v451, 0
      %vm2715 = vcmask 1041408
      %v2717 = vsel %vm2715, %v2659, 0
      %2719 = vmatprep.subr.bf16.mxu0 0
      %2720 = vmatpush1.bf16.msra.mxu0 0
      %2721 = vmatprep.subr.bf16.mxu0 0
      %2722 = vmatpush1.bf16.msra.mxu0 0
      %2723 = vmatprep.subr.bf16.mxu0 0
      %2724 = vmatpush1.bf16.msra.mxu0 0
      %2725 = vmatprep.subr.bf16.mxu0 0
      %2726 = vmatpush1.bf16.msra.mxu0 0
      %2727 = vmatprep.subr.bf16.mxu0 0
      %2728 = vmatpush1.bf16.msra.mxu0 0
      %2729 = vmatprep.subr.bf16.mxu0 0
      %2730 = vmatpush1.bf16.msra.mxu0 0
      %2731 = vmatprep.subr.bf16.mxu0 0
      %2732 = vmatpush1.bf16.msra.mxu0 0
      %2733 = vmatprep.subr.bf16.mxu0 0
      %2734 = vmatpush1.bf16.msra.mxu0 %v2717
      %2735 = vmatprep.subr.bf16.mxu0 0
      %2736 = vmatpush2.bf16.msra.mxu0 0
      %2737 = vmatprep.subr.bf16.mxu0 0
      %2738 = vmatpush2.bf16.msra.mxu0 0
      %2739 = vmatprep.subr.bf16.mxu0 0
      %2740 = vmatpush2.bf16.msra.mxu0 0
      %2741 = vmatprep.subr.bf16.mxu0 0
      %2742 = vmatpush2.bf16.msra.mxu0 0
      %2743 = vmatprep.subr.bf16.mxu0 0
      %2744 = vmatpush2.bf16.msra.mxu0 0
      %2745 = vmatprep.subr.bf16.mxu0 0
      %2746 = vmatpush2.bf16.msra.mxu0 0
      %2747 = vmatprep.subr.bf16.mxu0 0
      %2748 = vmatpush2.bf16.msra.mxu0 0
      %2749 = vmatprep.subr.bf16.mxu0 0
      %2750 = vmatpush2.bf16.msra.mxu0 0
      %2751 = vmatprep.mubr.bf16.mxu0 0
      %2752 = vmatmul.mubr.bf16.gmra.mxu0 %v2668
      %v2753 = vpop.f32.mrf.mxu0
      %v2754 = vadd.f32 %v2665, %v2753
      %v2755 = vpop.f32.mrf.mxu0
      %v2756 = vpop.f32.mrf.mxu0
      %v2757 = vadd.f32 %v2665, %v2756
      %v2758 = vpop.f32.mrf.mxu0
      %2759 = vmatprep.mubr.bf16.mxu0 0
      %2760 = vmatmul.mubr.bf16.gmra.mxu0 %v2671
      %v2761 = vpop.f32.mrf.mxu0
      %v2762 = vadd.f32 %v2665, %v2761
      %v2763 = vpop.f32.mrf.mxu0
      %v2764 = vpop.f32.mrf.mxu0
      %v2765 = vadd.f32 %v2665, %v2764
      %v2766 = vpop.f32.mrf.mxu0
      %2767 = vmatprep.mubr.bf16.mxu0 0
      %2768 = vmatmul.mubr.bf16.gmra.mxu0 %v2674
      %v2769 = vpop.f32.mrf.mxu0
      %v2770 = vadd.f32 %v2665, %v2769
      %v2771 = vpop.f32.mrf.mxu0
      %v2772 = vpop.f32.mrf.mxu0
      %v2773 = vadd.f32 %v2665, %v2772
      %v2774 = vpop.f32.mrf.mxu0
      %2775 = vmatprep.mubr.bf16.mxu0 0
      %2776 = vmatmul.mubr.bf16.gmra.mxu0 %v2677
      %v2777 = vpop.f32.mrf.mxu0
      %v2778 = vadd.f32 %v2665, %v2777
      %v2779 = vpop.f32.mrf.mxu0
      %v2780 = vpop.f32.mrf.mxu0
      %v2781 = vadd.f32 %v2665, %v2780
      %v2782 = vpop.f32.mrf.mxu0
      %2783 = vmatprep.mubr.bf16.mxu0 0
      %2784 = vmatmul.mubr.bf16.gmra.mxu0 %v2680
      %v2785 = vpop.f32.mrf.mxu0
      %v2786 = vadd.f32 %v2665, %v2785
      %v2787 = vpop.f32.mrf.mxu0
      %v2788 = vpop.f32.mrf.mxu0
      %v2789 = vadd.f32 %v2665, %v2788
      %v2790 = vpop.f32.mrf.mxu0
      %2791 = vmatprep.mubr.bf16.mxu0 0
      %2792 = vmatmul.mubr.bf16.gmra.mxu0 %v2683
      %v2793 = vpop.f32.mrf.mxu0
      %v2794 = vadd.f32 %v2665, %v2793
      %v2795 = vpop.f32.mrf.mxu0
      %v2796 = vpop.f32.mrf.mxu0
      %v2797 = vadd.f32 %v2665, %v2796
      %v2798 = vpop.f32.mrf.mxu0
      %2799 = vmatprep.mubr.bf16.mxu0 0
      %2800 = vmatmul.mubr.bf16.gmra.mxu0 %v2686
      %v2801 = vpop.f32.mrf.mxu0
      %v2802 = vadd.f32 %v2665, %v2801
      %v2803 = vpop.f32.mrf.mxu0
      %v2804 = vpop.f32.mrf.mxu0
      %v2805 = vadd.f32 %v2665, %v2804
      %v2806 = vpop.f32.mrf.mxu0
      %2807 = vmatprep.mubr.bf16.mxu0 0
      %2808 = vmatmul.mubr.bf16.gmra.mxu0 %v2689
      %v2809 = vpop.f32.mrf.mxu0
      %v2810 = vadd.f32 %v2665, %v2809
      %v2811 = vpop.f32.mrf.mxu0
      %v2812 = vpop.f32.mrf.mxu0
      %v2813 = vadd.f32 %v2665, %v2812
      %v2814 = vpop.f32.mrf.mxu0
      %2815 = vmatprep.mubr.bf16.mxu0 0
      %2816 = vmatmul.mubr.bf16.gmra.mxu0 %v2692
      %v2817 = vpop.f32.mrf.mxu0
      %v2818 = vadd.f32 %v2665, %v2817
      %v2819 = vpop.f32.mrf.mxu0
      %v2820 = vpop.f32.mrf.mxu0
      %v2821 = vadd.f32 %v2665, %v2820
      %v2822 = vpop.f32.mrf.mxu0
      %2823 = vmatprep.mubr.bf16.mxu0 0
      %2824 = vmatmul.mubr.bf16.gmra.mxu0 %v2695
      %v2825 = vpop.f32.mrf.mxu0
      %v2826 = vadd.f32 %v2665, %v2825
      %v2827 = vpop.f32.mrf.mxu0
      %v2828 = vpop.f32.mrf.mxu0
      %v2829 = vadd.f32 %v2665, %v2828
      %v2830 = vpop.f32.mrf.mxu0
      %2831 = vmatprep.mubr.bf16.mxu0 0
      %2832 = vmatmul.mubr.bf16.gmra.mxu0 %v2698
      %v2833 = vpop.f32.mrf.mxu0
      %v2834 = vadd.f32 %v2665, %v2833
      %v2835 = vpop.f32.mrf.mxu0
      %v2836 = vpop.f32.mrf.mxu0
      %v2837 = vadd.f32 %v2665, %v2836
      %v2838 = vpop.f32.mrf.mxu0
      %2839 = vmatprep.mubr.bf16.mxu0 0
      %2840 = vmatmul.mubr.bf16.gmra.mxu0 %v2701
      %v2841 = vpop.f32.mrf.mxu0
      %v2842 = vadd.f32 %v2665, %v2841
      %v2843 = vpop.f32.mrf.mxu0
      %v2844 = vpop.f32.mrf.mxu0
      %v2845 = vadd.f32 %v2665, %v2844
      %v2846 = vpop.f32.mrf.mxu0
      %2847 = vmatprep.mubr.bf16.mxu0 0
      %2848 = vmatmul.mubr.bf16.gmra.mxu0 %v2704
      %v2849 = vpop.f32.mrf.mxu0
      %v2850 = vadd.f32 %v2665, %v2849
      %v2851 = vpop.f32.mrf.mxu0
      %v2852 = vpop.f32.mrf.mxu0
      %v2853 = vadd.f32 %v2665, %v2852
      %v2854 = vpop.f32.mrf.mxu0
      %2855 = vmatprep.mubr.bf16.mxu0 0
      %2856 = vmatmul.mubr.bf16.gmra.mxu0 %v2707
      %v2857 = vpop.f32.mrf.mxu0
      %v2858 = vadd.f32 %v2665, %v2857
      %v2859 = vpop.f32.mrf.mxu0
      %v2860 = vpop.f32.mrf.mxu0
      %v2861 = vadd.f32 %v2665, %v2860
      %v2862 = vpop.f32.mrf.mxu0
      %2863 = vmatprep.mubr.bf16.mxu0 0
      %2864 = vmatmul.mubr.bf16.gmra.mxu0 %v2710
      %v2865 = vpop.f32.mrf.mxu0
      %v2866 = vadd.f32 %v2665, %v2865
      %v2867 = vpop.f32.mrf.mxu0
      %v2868 = vpop.f32.mrf.mxu0
      %v2869 = vadd.f32 %v2665, %v2868
      %v2870 = vpop.f32.mrf.mxu0
      %2871 = vmatprep.mubr.bf16.mxu0 0
      %2872 = vmatmul.mubr.bf16.gmra.mxu0 %v2713
      %v2873 = vpop.f32.mrf.mxu0
      %v2874 = vadd.f32 %v2665, %v2873
      %v2875 = vpop.f32.mrf.mxu0
      %v2876 = vpop.f32.mrf.mxu0
      %v2877 = vadd.f32 %v2665, %v2876
      %v2878 = vpop.f32.mrf.mxu0
      %2879 = vdwg.mxu0
      %v2880 = vsel %vm714, %v2627, 0.0
      %v2881 = vsel %vm714, %v2628, 0.0
      %v2882 = vadd.f32 %v2880, %v2881
      %v2883 = vsel %vm714, %v2629, 0.0
      %v2884 = vadd.f32 %v2882, %v2883
      %v2885 = vsel %vm714, %v2630, 0.0
      %v2886 = vadd.f32 %v2884, %v2885
      %v2887 = vsel %vm714, %v2631, 0.0
      %v2888 = vadd.f32 %v2886, %v2887
      %v2889 = vsel %vm714, %v2632, 0.0
      %v2890 = vadd.f32 %v2888, %v2889
      %v2891 = vsel %vm714, %v2633, 0.0
      %v2892 = vadd.f32 %v2890, %v2891
      %v2893 = vsel %vm714, %v2634, 0.0
      %v2894 = vadd.f32 %v2892, %v2893
      %v2895 = vsel %vm714, %v2635, 0.0
      %v2896 = vadd.f32 %v2894, %v2895
      %v2897 = vsel %vm714, %v2636, 0.0
      %v2898 = vadd.f32 %v2896, %v2897
      %v2899 = vsel %vm714, %v2637, 0.0
      %v2900 = vadd.f32 %v2898, %v2899
      %v2901 = vsel %vm714, %v2638, 0.0
      %v2902 = vadd.f32 %v2900, %v2901
      %v2903 = vsel %vm714, %v2639, 0.0
      %v2904 = vadd.f32 %v2902, %v2903
      %v2905 = vsel %vm714, %v2640, 0.0
      %v2906 = vadd.f32 %v2904, %v2905
      %v2907 = vsel %vm714, %v2641, 0.0
      %v2908 = vadd.f32 %v2906, %v2907
      %v2909 = vsel %vm714, %v2642, 0.0
      %v2910 = vadd.f32 %v2908, %v2909
      %v2911 = vsel %vm714, %v2643, 0.0
      %v2912 = vadd.f32 %v2910, %v2911
      %v2913 = vsel %vm714, %v2644, 0.0
      %v2914 = vadd.f32 %v2912, %v2913
      %v2915 = vsel %vm714, %v2645, 0.0
      %v2916 = vadd.f32 %v2914, %v2915
      %v2917 = vsel %vm714, %v2646, 0.0
      %v2918 = vadd.f32 %v2916, %v2917
      %v2919 = vsel %vm714, %v2647, 0.0
      %v2920 = vadd.f32 %v2918, %v2919
      %v2921 = vsel %vm714, %v2648, 0.0
      %v2922 = vadd.f32 %v2920, %v2921
      %v2923 = vsel %vm714, %v2649, 0.0
      %v2924 = vadd.f32 %v2922, %v2923
      %v2925 = vsel %vm714, %v2650, 0.0
      %v2926 = vadd.f32 %v2924, %v2925
      %v2927 = vsel %vm714, %v2651, 0.0
      %v2928 = vadd.f32 %v2926, %v2927
      %v2929 = vsel %vm714, %v2652, 0.0
      %v2930 = vadd.f32 %v2928, %v2929
      %v2931 = vsel %vm714, %v2653, 0.0
      %v2932 = vadd.f32 %v2930, %v2931
      %v2933 = vsel %vm714, %v2654, 0.0
      %v2934 = vadd.f32 %v2932, %v2933
      %v2935 = vsel %vm714, %v2655, 0.0
      %v2936 = vadd.f32 %v2934, %v2935
      %v2937 = vsel %vm714, %v2656, 0.0
      %v2938 = vadd.f32 %v2936, %v2937
      %v2939 = vsel %vm714, %v2657, 0.0
      %v2940 = vadd.f32 %v2938, %v2939
      %v2941 = vsel %vm714, %v2658, 0.0
      %v2942 = vadd.f32 %v2940, %v2941
      %v2943 = vrot.slane %v2942, 4
      %v2944 = vadd.f32 %v2942, %v2943
      %v2945 = vrot.slane %v2944, 2
      %v2946 = vadd.f32 %v2944, %v2945
      %v2947 = vrot.slane %v2946, 1
      %v2948 = vadd.f32 %v2946, %v2947
      %v2949 = vmul.f32 %v2627, %v2627
      %v2950 = vmul.f32 %v2628, %v2628
      %v2951 = vmul.f32 %v2629, %v2629
      %v2952 = vmul.f32 %v2630, %v2630
      %v2953 = vmul.f32 %v2631, %v2631
      %v2954 = vmul.f32 %v2632, %v2632
      %v2955 = vmul.f32 %v2633, %v2633
      %v2956 = vmul.f32 %v2634, %v2634
      %v2957 = vmul.f32 %v2635, %v2635
      %v2958 = vmul.f32 %v2636, %v2636
      %v2959 = vmul.f32 %v2637, %v2637
      %v2960 = vmul.f32 %v2638, %v2638
      %v2961 = vmul.f32 %v2639, %v2639
      %v2962 = vmul.f32 %v2640, %v2640
      %v2963 = vmul.f32 %v2641, %v2641
      %v2964 = vmul.f32 %v2642, %v2642
      %v2965 = vmul.f32 %v2643, %v2643
      %v2966 = vmul.f32 %v2644, %v2644
      %v2967 = vmul.f32 %v2645, %v2645
      %v2968 = vmul.f32 %v2646, %v2646
      %v2969 = vmul.f32 %v2647, %v2647
      %v2970 = vmul.f32 %v2648, %v2648
      %v2971 = vmul.f32 %v2649, %v2649
      %v2972 = vmul.f32 %v2650, %v2650
      %v2973 = vmul.f32 %v2651, %v2651
      %v2974 = vmul.f32 %v2652, %v2652
      %v2975 = vmul.f32 %v2653, %v2653
      %v2976 = vmul.f32 %v2654, %v2654
      %v2977 = vmul.f32 %v2655, %v2655
      %v2978 = vmul.f32 %v2656, %v2656
      %v2979 = vmul.f32 %v2657, %v2657
      %v2980 = vmul.f32 %v2658, %v2658
      %v2981 = vsel %vm714, %v2949, 0.0
      %v2982 = vsel %vm714, %v2950, 0.0
      %v2983 = vadd.f32 %v2981, %v2982
      %v2984 = vsel %vm714, %v2951, 0.0
      %v2985 = vadd.f32 %v2983, %v2984
      %v2986 = vsel %vm714, %v2952, 0.0
      %v2987 = vadd.f32 %v2985, %v2986
      %v2988 = vsel %vm714, %v2953, 0.0
      %v2989 = vadd.f32 %v2987, %v2988
      %v2990 = vsel %vm714, %v2954, 0.0
      %v2991 = vadd.f32 %v2989, %v2990
      %v2992 = vsel %vm714, %v2955, 0.0
      %v2993 = vadd.f32 %v2991, %v2992
      %v2994 = vsel %vm714, %v2956, 0.0
      %v2995 = vadd.f32 %v2993, %v2994
      %v2996 = vsel %vm714, %v2957, 0.0
      %v2997 = vadd.f32 %v2995, %v2996
      %v2998 = vsel %vm714, %v2958, 0.0
      %v2999 = vadd.f32 %v2997, %v2998
      %v3000 = vsel %vm714, %v2959, 0.0
      %v3001 = vadd.f32 %v2999, %v3000
      %v3002 = vsel %vm714, %v2960, 0.0
      %v3003 = vadd.f32 %v3001, %v3002
      %v3004 = vsel %vm714, %v2961, 0.0
      %v3005 = vadd.f32 %v3003, %v3004
      %v3006 = vsel %vm714, %v2962, 0.0
      %v3007 = vadd.f32 %v3005, %v3006
      %v3008 = vsel %vm714, %v2963, 0.0
      %v3009 = vadd.f32 %v3007, %v3008
      %v3010 = vsel %vm714, %v2964, 0.0
      %v3011 = vadd.f32 %v3009, %v3010
      %v3012 = vsel %vm714, %v2965, 0.0
      %v3013 = vadd.f32 %v3011, %v3012
      %v3014 = vsel %vm714, %v2966, 0.0
      %v3015 = vadd.f32 %v3013, %v3014
      %v3016 = vsel %vm714, %v2967, 0.0
      %v3017 = vadd.f32 %v3015, %v3016
      %v3018 = vsel %vm714, %v2968, 0.0
      %v3019 = vadd.f32 %v3017, %v3018
      %v3020 = vsel %vm714, %v2969, 0.0
      %v3021 = vadd.f32 %v3019, %v3020
      %v3022 = vsel %vm714, %v2970, 0.0
      %v3023 = vadd.f32 %v3021, %v3022
      %v3024 = vsel %vm714, %v2971, 0.0
      %v3025 = vadd.f32 %v3023, %v3024
      %v3026 = vsel %vm714, %v2972, 0.0
      %v3027 = vadd.f32 %v3025, %v3026
      %v3028 = vsel %vm714, %v2973, 0.0
      %v3029 = vadd.f32 %v3027, %v3028
      %v3030 = vsel %vm714, %v2974, 0.0
      %v3031 = vadd.f32 %v3029, %v3030
      %v3032 = vsel %vm714, %v2975, 0.0
      %v3033 = vadd.f32 %v3031, %v3032
      %v3034 = vsel %vm714, %v2976, 0.0
      %v3035 = vadd.f32 %v3033, %v3034
      %v3036 = vsel %vm714, %v2977, 0.0
      %v3037 = vadd.f32 %v3035, %v3036
      %v3038 = vsel %vm714, %v2978, 0.0
      %v3039 = vadd.f32 %v3037, %v3038
      %v3040 = vsel %vm714, %v2979, 0.0
      %v3041 = vadd.f32 %v3039, %v3040
      %v3042 = vsel %vm714, %v2980, 0.0
      %v3043 = vadd.f32 %v3041, %v3042
      %v3044 = vrot.slane %v3043, 4
      %v3045 = vadd.f32 %v3043, %v3044
      %v3046 = vrot.slane %v3045, 2
      %v3047 = vadd.f32 %v3045, %v3046
      %v3048 = vrot.slane %v3047, 1
      %v3049 = vadd.f32 %v3047, %v3048
      %v3050 = vmul.f32 %v2948, 0.00390625
      %v3051 = vmul.f32 %v3049, 0.00390625
      %v3052 = vmul.f32 %v3050, %v3050
      %v3053 = vsub.f32 %v3051, %v3052
      %v3054 = vsub.f32 %v2627, %v3050
      %v3055 = vsub.f32 %v2628, %v3050
      %v3056 = vsub.f32 %v2629, %v3050
      %v3057 = vsub.f32 %v2630, %v3050
      %v3058 = vsub.f32 %v2631, %v3050
      %v3059 = vsub.f32 %v2632, %v3050
      %v3060 = vsub.f32 %v2633, %v3050
      %v3061 = vsub.f32 %v2634, %v3050
      %v3062 = vsub.f32 %v2635, %v3050
      %v3063 = vsub.f32 %v2636, %v3050
      %v3064 = vsub.f32 %v2637, %v3050
      %v3065 = vsub.f32 %v2638, %v3050
      %v3066 = vsub.f32 %v2639, %v3050
      %v3067 = vsub.f32 %v2640, %v3050
      %v3068 = vsub.f32 %v2641, %v3050
      %v3069 = vsub.f32 %v2642, %v3050
      %v3070 = vsub.f32 %v2643, %v3050
      %v3071 = vsub.f32 %v2644, %v3050
      %v3072 = vsub.f32 %v2645, %v3050
      %v3073 = vsub.f32 %v2646, %v3050
      %v3074 = vsub.f32 %v2647, %v3050
      %v3075 = vsub.f32 %v2648, %v3050
      %v3076 = vsub.f32 %v2649, %v3050
      %v3077 = vsub.f32 %v2650, %v3050
      %v3078 = vsub.f32 %v2651, %v3050
      %v3079 = vsub.f32 %v2652, %v3050
      %v3080 = vsub.f32 %v2653, %v3050
      %v3081 = vsub.f32 %v2654, %v3050
      %v3082 = vsub.f32 %v2655, %v3050
      %v3083 = vsub.f32 %v2656, %v3050
      %v3084 = vsub.f32 %v2657, %v3050
      %v3085 = vsub.f32 %v2658, %v3050
      %v3086 = vadd.f32 %v3053, 1e-05
      %v3087 = vrsqrt.pop %v3086
      %v3088 = vmul.f32 %v3054, %v3087
      %v3089 = vmul.f32 %v3055, %v3087
      %v3090 = vmul.f32 %v3056, %v3087
      %v3091 = vmul.f32 %v3057, %v3087
      %v3092 = vmul.f32 %v3058, %v3087
      %v3093 = vmul.f32 %v3059, %v3087
      %v3094 = vmul.f32 %v3060, %v3087
      %v3095 = vmul.f32 %v3061, %v3087
      %v3096 = vmul.f32 %v3062, %v3087
      %v3097 = vmul.f32 %v3063, %v3087
      %v3098 = vmul.f32 %v3064, %v3087
      %v3099 = vmul.f32 %v3065, %v3087
      %v3100 = vmul.f32 %v3066, %v3087
      %v3101 = vmul.f32 %v3067, %v3087
      %v3102 = vmul.f32 %v3068, %v3087
      %v3103 = vmul.f32 %v3069, %v3087
      %v3104 = vmul.f32 %v3070, %v3087
      %v3105 = vmul.f32 %v3071, %v3087
      %v3106 = vmul.f32 %v3072, %v3087
      %v3107 = vmul.f32 %v3073, %v3087
      %v3108 = vmul.f32 %v3074, %v3087
      %v3109 = vmul.f32 %v3075, %v3087
      %v3110 = vmul.f32 %v3076, %v3087
      %v3111 = vmul.f32 %v3077, %v3087
      %v3112 = vmul.f32 %v3078, %v3087
      %v3113 = vmul.f32 %v3079, %v3087
      %v3114 = vmul.f32 %v3080, %v3087
      %v3115 = vmul.f32 %v3081, %v3087
      %v3116 = vmul.f32 %v3082, %v3087
      %v3117 = vmul.f32 %v3083, %v3087
      %v3118 = vmul.f32 %v3084, %v3087
      %v3119 = vmul.f32 %v3085, %v3087
      %v3120 = vmax.f32 %v3088, 0.0
      %v3121 = vmax.f32 %v3089, 0.0
      %v3122 = vmax.f32 %v3090, 0.0
      %v3123 = vmax.f32 %v3091, 0.0
      %v3124 = vmax.f32 %v3092, 0.0
      %v3125 = vmax.f32 %v3093, 0.0
      %v3126 = vmax.f32 %v3094, 0.0
      %v3127 = vmax.f32 %v3095, 0.0
      %v3128 = vmax.f32 %v3096, 0.0
      %v3129 = vmax.f32 %v3097, 0.0
      %v3130 = vmax.f32 %v3098, 0.0
      %v3131 = vmax.f32 %v3099, 0.0
      %v3132 = vmax.f32 %v3100, 0.0
      %v3133 = vmax.f32 %v3101, 0.0
      %v3134 = vmax.f32 %v3102, 0.0
      %v3135 = vmax.f32 %v3103, 0.0
      %v3136 = vmax.f32 %v3104, 0.0
      %v3137 = vmax.f32 %v3105, 0.0
      %v3138 = vmax.f32 %v3106, 0.0
      %v3139 = vmax.f32 %v3107, 0.0
      %v3140 = vmax.f32 %v3108, 0.0
      %v3141 = vmax.f32 %v3109, 0.0
      %v3142 = vmax.f32 %v3110, 0.0
      %v3143 = vmax.f32 %v3111, 0.0
      %v3144 = vmax.f32 %v3112, 0.0
      %v3145 = vmax.f32 %v3113, 0.0
      %v3146 = vmax.f32 %v3114, 0.0
      %v3147 = vmax.f32 %v3115, 0.0
      %v3148 = vmax.f32 %v3116, 0.0
      %v3149 = vmax.f32 %v3117, 0.0
      %v3150 = vmax.f32 %v3118, 0.0
      %v3151 = vmax.f32 %v3119, 0.0
      %v3152 = vadd.f32 %v3120, %v2754
      %v3153 = vadd.f32 %v3121, %v2757
      %v3154 = vadd.f32 %v3122, %v2762
      %v3155 = vadd.f32 %v3123, %v2765
      %v3156 = vadd.f32 %v3124, %v2770
      %v3157 = vadd.f32 %v3125, %v2773
      %v3158 = vadd.f32 %v3126, %v2778
      %v3159 = vadd.f32 %v3127, %v2781
      %v3160 = vadd.f32 %v3128, %v2786
      %v3161 = vadd.f32 %v3129, %v2789
      %v3162 = vadd.f32 %v3130, %v2794
      %v3163 = vadd.f32 %v3131, %v2797
      %v3164 = vadd.f32 %v3132, %v2802
      %v3165 = vadd.f32 %v3133, %v2805
      %v3166 = vadd.f32 %v3134, %v2810
      %v3167 = vadd.f32 %v3135, %v2813
      %v3168 = vadd.f32 %v3136, %v2818
      %v3169 = vadd.f32 %v3137, %v2821
      %v3170 = vadd.f32 %v3138, %v2826
      %v3171 = vadd.f32 %v3139, %v2829
      %v3172 = vadd.f32 %v3140, %v2834
      %v3173 = vadd.f32 %v3141, %v2837
      %v3174 = vadd.f32 %v3142, %v2842
      %v3175 = vadd.f32 %v3143, %v2845
      %v3176 = vadd.f32 %v3144, %v2850
      %v3177 = vadd.f32 %v3145, %v2853
      %v3178 = vadd.f32 %v3146, %v2858
      %v3179 = vadd.f32 %v3147, %v2861
      %v3180 = vadd.f32 %v3148, %v2866
      %v3181 = vadd.f32 %v3149, %v2869
      %v3182 = vadd.f32 %v3150, %v2874
      %v3183 = vadd.f32 %v3151, %v2877
      %3184 = vst.msk [vmem:[%s278] sm:$0xff] %vm714, %v3152
      %3185 = vst.msk [vmem:[%s278 + $0x8] sm:$0xff] %vm714, %v3153
      %3186 = vst.msk [vmem:[%s278 + $0x10] sm:$0xff] %vm714, %v3154
      %3187 = vst.msk [vmem:[%s278 + $0x18] sm:$0xff] %vm714, %v3155
      %3188 = vst.msk [vmem:[%s278 + $0x20] sm:$0xff] %vm714, %v3156
      %3189 = vst.msk [vmem:[%s278 + $0x28] sm:$0xff] %vm714, %v3157
      %3190 = vst.msk [vmem:[%s278 + $0x30] sm:$0xff] %vm714, %v3158
      %3191 = vst.msk [vmem:[%s278 + $0x38] sm:$0xff] %vm714, %v3159
      %3192 = vst.msk [vmem:[%s278 + $0x40] sm:$0xff] %vm714, %v3160
      %3193 = vst.msk [vmem:[%s278 + $0x48] sm:$0xff] %vm714, %v3161
      %3194 = vst.msk [vmem:[%s278 + $0x50] sm:$0xff] %vm714, %v3162
      %3195 = vst.msk [vmem:[%s278 + $0x58] sm:$0xff] %vm714, %v3163
      %3196 = vst.msk [vmem:[%s278 + $0x60] sm:$0xff] %vm714, %v3164
      %3197 = vst.msk [vmem:[%s278 + $0x68] sm:$0xff] %vm714, %v3165
      %3198 = vst.msk [vmem:[%s278 + $0x70] sm:$0xff] %vm714, %v3166
      %3199 = vst.msk [vmem:[%s278 + $0x78] sm:$0xff] %vm714, %v3167
      %3200 = vst.msk [vmem:[%s278 + $0x80] sm:$0xff] %vm714, %v3168
      %3201 = vst.msk [vmem:[%s278 + $0x88] sm:$0xff] %vm714, %v3169
      %3202 = vst.msk [vmem:[%s278 + $0x90] sm:$0xff] %vm714, %v3170
      %3203 = vst.msk [vmem:[%s278 + $0x98] sm:$0xff] %vm714, %v3171
      %3204 = vst.msk [vmem:[%s278 + $0xa0] sm:$0xff] %vm714, %v3172
      %3205 = vst.msk [vmem:[%s278 + $0xa8] sm:$0xff] %vm714, %v3173
      %3206 = vst.msk [vmem:[%s278 + $0xb0] sm:$0xff] %vm714, %v3174
      %3207 = vst.msk [vmem:[%s278 + $0xb8] sm:$0xff] %vm714, %v3175
      %3208 = vst.msk [vmem:[%s278 + $0xc0] sm:$0xff] %vm714, %v3176
      %3209 = vst.msk [vmem:[%s278 + $0xc8] sm:$0xff] %vm714, %v3177
      %3210 = vst.msk [vmem:[%s278 + $0xd0] sm:$0xff] %vm714, %v3178
      %3211 = vst.msk [vmem:[%s278 + $0xd8] sm:$0xff] %vm714, %v3179
      %3212 = vst.msk [vmem:[%s278 + $0xe0] sm:$0xff] %vm714, %v3180
      %3213 = vst.msk [vmem:[%s278 + $0xe8] sm:$0xff] %vm714, %v3181
      %3214 = vst.msk [vmem:[%s278 + $0xf0] sm:$0xff] %vm714, %v3182
      %3215 = vst.msk [vmem:[%s278 + $0xf8] sm:$0xff] %vm714, %v3183
      %p3216 = scmp.lt.s32.totalorder %s18, 1
      %s3217 = scalar_select %p3216, %s18, 1
      %s3218 = smul.addr %s3217, 32
      %s3219 = smul.addr %s3218, 8
      %s3220 = scalar_lea.vmem %s7, %s3219
      // Predicated region
      $region49: #{tpu_custom_call.1} parent=47 // pred_check
        %p3221 = pneg %p188
      $region50: #{tpu_custom_call.1} parent=47 // pred_check_branch
        %3223 = sbr.rel (%p3221) target = $region52
      $region51: #{tpu_custom_call.1} parent=47 // pred_region
        _
      $region52: #{tpu_custom_call.1} parent=47 // pred_fallthru
        _
    $region48: #{tpu_custom_call.1} parent=5 // pred_fallthru
      _
    %p3224 = scmp.le.s32.totalorder 2, %s13
    // Predicated region
    $region53: #{tpu_custom_call.1} parent=5 // pred_check
      %p3225 = pneg %p3224
    $region54: #{tpu_custom_call.1} parent=5 // pred_check_branch
      %3227 = sbr.rel (%p3225) target = $region56
    $region55: #{tpu_custom_call.1} parent=5 // pred_region
      %s3228 = ssub.s32 %s13, 2
      // Predicated region
      $region57: #{tpu_custom_call.1} parent=55 // pred_check
        %p3229 = pneg %p194
      $region58: #{tpu_custom_call.1} parent=55 // pred_check_branch
        %3231 = sbr.rel (%p3229) target = $region60
      $region59: #{tpu_custom_call.1} parent=55 // pred_region
        %p3232 = scmp.lt.s32.totalorder %s19, 1
        %s3233 = scalar_select %p3232, %s19, 1
        %s3234 = smul.addr %s3233, 32
        %s3235 = smul.addr %s3234, 8
        %s3236 = scalar_lea.vmem %s7, %s3235
      $region60: #{tpu_custom_call.1} parent=55 // pred_fallthru
        _
    $region56: #{tpu_custom_call.1} parent=5 // pred_fallthru
      _
  $region6: #{tpu_custom_call.1} parent=0 // loop_footer
    %s17 = sadd.s32 1, %s13
  $region7: #{tpu_custom_call.1} parent=0 // loop_footer_branch
    %12 = sbr.rel target = $region3
  $region8: #{tpu_custom_call.1} parent=0 // loop_exit
    _

</llo_original>
